<compile_context>
chip_gen: v7x
topology: tpu7x:2x2x1
jax: 0.10.0
libtpu: 0.0.40
codegen_flags: <defaults>
</compile_context>

<pallas_src>
import numpy as np
import jax
import jax.numpy as jnp
from jax.experimental import pallas as pl
from jax.experimental.pallas import tpu as pltpu

N_QUBITS = 5
N_STATES = 2 ** N_QUBITS  # 32
N_LAYERS = 2
DEGREE = 3
INV_SQRT2 = 1.0 / np.sqrt(2.0)
GATE_PERM = (0, 1, 3, 2)  # torch order [i, f, g, o] -> fused order [i, f, o, g]


# ----------------------------------------------------------------------------
# Parameter setup (plain JAX / numpy glue)
# ----------------------------------------------------------------------------
def _u3(theta, phi, lam):
    ct, st = np.cos(theta / 2.0), np.sin(theta / 2.0)
    return np.array(
        [[ct, -np.exp(1j * lam) * st],
         [np.exp(1j * phi) * st, np.exp(1j * (phi + lam)) * ct]],
        dtype=np.complex128,
    )


def _single_qubit_full(op, qubit, n=N_QUBITS):
    # qubit 0 = least significant bit of the basis index
    full = np.array([[1.0]], dtype=np.complex128)
    for i in range(n - 1, -1, -1):
        m = op if i == qubit else np.eye(2, dtype=np.complex128)
        full = np.kron(full, m)
    return full


def _cz_full(qi, qj, n=N_QUBITS):
    dim = 2 ** n
    diag = np.ones(dim, dtype=np.complex128)
    for k in range(dim):
        if ((k >> qi) & 1) and ((k >> qj) & 1):
            diag[k] = -1.0
    return np.diag(diag)


def _build_post_unitary(angles):
    """angles: (n_layers+1, degree, n_qubits).  U3(th, phi, lam) layers + CZ ring."""
    n = N_QUBITS
    U = np.eye(2 ** n, dtype=np.complex128)
    for i in range(n):
        U = _single_qubit_full(_u3(angles[0, 0, i], angles[0, 1, i], angles[0, 2, i]), i) @ U
    for layer in range(N_LAYERS):
        for i in range(n - 1):
            U = _cz_full(i, i + 1) @ U
        U = _cz_full(n - 1, 0) @ U
        for i in range(n):
            U = _single_qubit_full(
                _u3(angles[layer + 1, 0, i], angles[layer + 1, 1, i], angles[layer + 1, 2, i]), i
            ) @ U
    return U


def make_qlstm_params(key, input_size, hidden_size):
    D, H = input_size, hidden_size
    in_feat = D + H
    wih, wix, bi, ure, uim, wo, bo = [], [], [], [], [], [], []
    keys = jax.random.split(key, 4 * 5)
    for g in range(4):
        k_ang, k_wi, k_bi, k_wo, k_bo = keys[5 * g: 5 * g + 5]
        # angles ~ U[0,1) like torch.rand(n_layers+1, degree, n_qubits)
        angles = np.asarray(
            jax.random.uniform(k_ang, (N_LAYERS + 1, DEGREE, N_QUBITS), dtype=jnp.float32),
            dtype=np.float64,
        )
        U = _build_post_unitary(angles)            # (32, 32) complex
        Ut = U.T                                   # row-vector convention: psi_row @ U.T
        ure.append(np.real(Ut).astype(np.float32))
        uim.append(np.imag(Ut).astype(np.float32))

        kin = 1.0 / np.sqrt(in_feat)
        w_in = jax.random.uniform(k_wi, (N_QUBITS, in_feat), minval=-kin, maxval=kin)
        b_in = jax.random.uniform(k_bi, (N_QUBITS,), minval=-kin, maxval=kin)
        kout = 1.0 / np.sqrt(N_QUBITS)
        w_out = jax.random.uniform(k_wo, (H, N_QUBITS), minval=-kout, maxval=kout)
        b_out = jax.random.uniform(k_bo, (H,), minval=-kout, maxval=kout)

        # v = cat(h, x): first H columns act on h, remaining D on x
        wih.append(jnp.asarray(w_in[:, :H].T, jnp.float32))   # (H, 5)
        wix.append(jnp.asarray(w_in[:, H:].T, jnp.float32))   # (D, 5)
        bi.append(jnp.asarray(b_in[None, :], jnp.float32))    # (1, 5)
        wo.append(jnp.asarray(w_out.T, jnp.float32))           # (5, H)
        bo.append(jnp.asarray(b_out[None, :], jnp.float32))    # (1, H)

    zsign = np.zeros((N_STATES, N_QUBITS), dtype=np.float32)
    for j in range(N_STATES):
        for i in range(N_QUBITS):
            zsign[j, i] = 1.0 - 2.0 * ((j >> i) & 1)

    # ---------------- fused / block-diagonal packing for the kernel ----------
    # gate order in the fused matrices: [i, f, o, g]
    wih_f = jnp.concatenate([wih[p] for p in GATE_PERM], axis=1)   # (H, 20)
    wix_f = jnp.concatenate([wix[p] for p in GATE_PERM], axis=1)   # (D, 20)
    bi_f = jnp.concatenate([bi[p] for p in GATE_PERM], axis=1)     # (1, 20)

    ucat = np.zeros((4 * N_STATES, 8 * N_STATES), dtype=np.float32)   # (128, 256)
    m_bd = np.zeros((4 * N_STATES, 4 * H), dtype=np.float32)          # (128, 4H)
    bo_f_parts = []
    for k, p in enumerate(GATE_PERM):
        r0, r1 = k * N_STATES, (k + 1) * N_STATES
        ucat[r0:r1, r0:r1] = ure[p]                                    # real block-diag
        ucat[r0:r1, 4 * N_STATES + r0:4 * N_STATES + r1] = uim[p]      # imag block-diag
        m_fold = zsign.astype(np.float64) @ np.asarray(wo[p], dtype=np.float64)
        m_bd[r0:r1, k * H:(k + 1) * H] = m_fold.astype(np.float32)     # zsign@wo pre-folded
        bo_f_parts.append(bo[p])
    bo_f = jnp.concatenate(bo_f_parts, axis=1)                         # (1, 4H)

    return dict(
        # per-gate params (used by the plain-JAX reference)
        wih=jnp.stack(wih, 0),              # (4, H, 5)
        wix=jnp.stack(wix, 0),              # (4, D, 5)
        bi=jnp.stack(bi, 0),                # (4, 1, 5)
        ure=jnp.asarray(np.stack(ure, 0)),  # (4, 32, 32)
        uim=jnp.asarray(np.stack(uim, 0)),  # (4, 32, 32)
        zsign=jnp.asarray(zsign),           # (32, 5)
        wo=jnp.stack(wo, 0),                # (4, 5, H)
        bo=jnp.stack(bo, 0),                # (4, 1, H)
        # fused params (used by the Pallas kernel)
        wih_f=wih_f,                        # (H, 20)
        wix_f=wix_f,                        # (D, 20)
        bi_f=bi_f,                          # (1, 20)
        ucat=jnp.asarray(ucat),             # (128, 256)
        m_bd=jnp.asarray(m_bd),             # (128, 4H)
        bo_f=bo_f,                          # (1, 4H)
    )


# ----------------------------------------------------------------------------
# Pallas kernel: grid over time blocks; h, c carried in VMEM scratch
# ----------------------------------------------------------------------------
def _qlstm_kernel(x_ref, wih_ref, wix_ref, bi_ref, ucat_ref, m_ref, bo_ref,
                  hseq_ref, cT_ref, h_scr, c_scr):
    tb = pl.program_id(0)

    @pl.when(tb == 0)
    def _():
        h_scr[...] = jnp.zeros_like(h_scr)
        c_scr[...] = jnp.zeros_like(c_scr)

    TT, B, _ = x_ref.shape
    H = h_scr.shape[1]

    # basis-state bit masks: hoisted, shared by all gates / timesteps
    basis = jax.lax.broadcasted_iota(jnp.int32, (B, N_STATES), 1)
    bit_is_one = [((basis >> i) & 1) == 1 for i in range(N_QUBITS)]

    @pl.loop(0, TT, unroll=True)
    def _(tt):
        h = h_scr[...]          # (B, H)
        c = c_scr[...]          # (B, H)
        x = x_ref[tt]           # (B, D)

        # fused qin Linear over all 4 gates: (B, 20)
        q = (jnp.dot(h, wih_ref[...], preferred_element_type=jnp.float32)
             + jnp.dot(x, wix_ref[...], preferred_element_type=jnp.float32)
             + bi_ref[...])
        theta = q * (jnp.pi / 2.0)
        cth = jnp.cos(theta * 0.5)
        sth = jnp.sin(theta * 0.5)
        amp0 = (cth - sth) * INV_SQRT2      # RY(theta)|+>, |0> amplitude
        amp1 = (cth + sth) * INV_SQRT2      # RY(theta)|+>, |1> amplitude

        # per-gate product-state amplitudes, packed into one (B, 128) slab
        psis = []
        for g in range(4):
            psi = jnp.ones((B, N_STATES), dtype=jnp.float32)
            for i in range(N_QUBITS):
                col = g * N_QUBITS + i
                psi = psi * jnp.where(bit_is_one[i],
                                      amp1[:, col:col + 1],
                                      amp0[:, col:col + 1])
            psis.append(psi)
        psi_all = jnp.concatenate(psis, axis=1)                         # (B, 128)

        # one 256-wide matmul gives real | imag halves for all gates
        reim = jnp.dot(psi_all, ucat_ref[...],
                       preferred_element_type=jnp.float32)              # (B, 256)
        re = reim[:, :4 * N_STATES]
        im = reim[:, 4 * N_STATES:]
        probs = re * re + im * im                                       # (B, 128)

        # pre-folded (zsign @ wo) block-diag: all four gate pre-activations at once
        pre = (jnp.dot(probs, m_ref[...], preferred_element_type=jnp.float32)
               + bo_ref[...])                                           # (B, 4H): [i|f|o|g]

        sig = jax.nn.sigmoid(pre[:, :3 * H])
        i_t = sig[:, :H]
        f_t = sig[:, H:2 * H]
        o_t = sig[:, 2 * H:3 * H]
        g_t = jnp.tanh(pre[:, 3 * H:])

        c_new = f_t * c + i_t * g_t
        h_new = o_t * jnp.tanh(c_new)

        h_scr[...] = h_new
        c_scr[...] = c_new
        hseq_ref[tt] = h_new

    @pl.when(tb == pl.num_programs(0) - 1)
    def _():
        cT_ref[0] = c_scr[...]


def qlstm_pallas(x_seq, params, time_block=None):
    T, B, D = x_seq.shape
    H = params["wo"].shape[-1]

    if time_block is None:
        # largest divisor of T not exceeding 16 (amortizes per-grid-step overhead)
        time_block = 1
        for cand in range(min(T, 16), 0, -1):
            if T % cand == 0:
                time_block = cand
                break
    assert T % time_block == 0
    TT = time_block

    grid_spec = pltpu.PrefetchScalarGridSpec(
        num_scalar_prefetch=0,
        grid=(T // TT,),
        in_specs=[
            pl.BlockSpec((TT, B, D), lambda tb: (tb, 0, 0)),
            pl.BlockSpec((H, 4 * N_QUBITS), lambda tb: (0, 0)),
            pl.BlockSpec((D, 4 * N_QUBITS), lambda tb: (0, 0)),
            pl.BlockSpec((1, 4 * N_QUBITS), lambda tb: (0, 0)),
            pl.BlockSpec((4 * N_STATES, 8 * N_STATES), lambda tb: (0, 0)),
            pl.BlockSpec((4 * N_STATES, 4 * H), lambda tb: (0, 0)),
            pl.BlockSpec((1, 4 * H), lambda tb: (0, 0)),
        ],
        out_specs=[
            pl.BlockSpec((TT, B, H), lambda tb: (tb, 0, 0)),
            pl.BlockSpec((1, B, H), lambda tb: (0, 0, 0)),
        ],
        scratch_shapes=[
            pltpu.VMEM((B, H), jnp.float32),
            pltpu.VMEM((B, H), jnp.float32),
        ],
    )

    out_shape = (
        jax.ShapeDtypeStruct((T, B, H), jnp.float32),
        jax.ShapeDtypeStruct((1, B, H), jnp.float32),
    )

    hseq, c_t = pl.pallas_call(
        _qlstm_kernel,
        out_shape=out_shape,
        grid_spec=grid_spec,
        compiler_params=pltpu.CompilerParams(
            dimension_semantics=("arbitrary",)  # time recurrence is sequential
        ),
    )(
        x_seq, params["wih_f"], params["wix_f"], params["bi_f"],
        params["ucat"], params["m_bd"], params["bo_f"],
    )
    h_t = hseq[-1:]                 # (1, B, H) — last-step hidden, sliced in the wrapper
    return hseq, (h_t, c_t)


# ----------------------------------------------------------------------------
# Plain-JAX reference (same math, no Pallas, per-gate) for validation
# ----------------------------------------------------------------------------
def _gate_ref(h, x, wih, wix, bi, ure, uim, zsign, wo, bo):
    q = h @ wih + x @ wix + bi
    theta = q * (jnp.pi / 2.0)
    cth, sth = jnp.cos(theta * 0.5), jnp.sin(theta * 0.5)
    a0 = (cth - sth) * INV_SQRT2
    a1 = (cth + sth) * INV_SQRT2
    B = q.shape[0]
    basis = jnp.arange(N_STATES)
    psi = jnp.ones((B, N_STATES), jnp.float32)
    for i in range(N_QUBITS):
        bit = (basis >> i) & 1
        psi = psi * jnp.where(bit[None, :] == 1, a1[:, i:i + 1], a0[:, i:i + 1])
    re, im = psi @ ure, psi @ uim
    probs = re * re + im * im
    return (probs @ zsign) @ wo + bo


def qlstm_reference(x_seq, params):
    T, B, D = x_seq.shape
    H = params["wo"].shape[-1]
    h = jnp.zeros((B, H), jnp.float32)
    c = jnp.zeros((B, H), jnp.float32)
    outs = []
    for t in range(T):
        x = x_seq[t]
        pre = [
            _gate_ref(h, x, params["wih"][g], params["wix"][g], params["bi"][g],
                      params["ure"][g], params["uim"][g], params["zsign"],
                      params["wo"][g], params["bo"][g])
            for g in range(4)
        ]
        i_t = jax.nn.sigmoid(pre[0])
        f_t = jax.nn.sigmoid(pre[1])
        g_t = jnp.tanh(pre[2])
        o_t = jax.nn.sigmoid(pre[3])
        c = f_t * c + i_t * g_t
        h = o_t * jnp.tanh(c)
        outs.append(h)
    return jnp.stack(outs, 0), (h[None], c[None])


# ----------------------------------------------------------------------------
if __name__ == "__main__":
    T, B, D, H = 8, 4, 8, 16   # seq, batch, input_size, hidden_size

    key = jax.random.PRNGKey(0)
    k_x, k_p = jax.random.split(key)
    x_seq = jax.random.normal(k_x, (T, B, D), dtype=jnp.float32)
    params = make_qlstm_params(k_p, D, H)

    # time_block=4 -> grid of 2 blocks, exercising the resident h/c carry
    hseq, (h_t, c_t) = qlstm_pallas(x_seq, params, time_block=4)
    jax.block_until_ready((hseq, h_t, c_t))

    hseq_ref, (h_ref, c_ref) = qlstm_reference(x_seq, params)
    assert hseq.shape == (T, B, H) and h_t.shape == (1, B, H) and c_t.shape == (1, B, H)
    assert jnp.allclose(hseq, hseq_ref, atol=1e-3, rtol=1e-3), "hidden_sequence mismatch"
    assert jnp.allclose(h_t, h_ref, atol=1e-3, rtol=1e-3), "h_t mismatch"
    assert jnp.allclose(c_t, c_ref, atol=1e-3, rtol=1e-3), "c_t mismatch"

    print("KERNEL_OK")
</pallas_src>

<mosaic_0001>
module attributes {stable_mosaic.version = 11 : i64} {
  func.func @_qlstm_kernel(%arg0: i32, %arg1: memref<4x4x8xf32, #tpu.memory_space<vmem>>, %arg2: memref<16x20xf32, #tpu.memory_space<vmem>>, %arg3: memref<8x20xf32, #tpu.memory_space<vmem>>, %arg4: memref<1x20xf32, #tpu.memory_space<vmem>>, %arg5: memref<128x256xf32, #tpu.memory_space<vmem>>, %arg6: memref<128x64xf32, #tpu.memory_space<vmem>>, %arg7: memref<1x64xf32, #tpu.memory_space<vmem>>, %arg8: memref<4x4x16xf32, #tpu.memory_space<vmem>>, %arg9: memref<1x4x16xf32, #tpu.memory_space<vmem>>, %arg10: memref<4x16xf32, #tpu.memory_space<vmem>>, %arg11: memref<4x16xf32, #tpu.memory_space<vmem>>) attributes {dimension_semantics = [#tpu.dimension_semantics<arbitrary>], iteration_bounds = array<i64: 2>, scalar_prefetch = 0 : i64, scratch_operands = 2 : i64, tpu.core_type = #tpu.core_type<tc>, window_params = [{transform_indices = @transform_0, window_bounds = array<i64: 4, 4, 8>}, {pipeline_mode = #tpu.pipeline_mode<synchronous>, transform_indices = @transform_1, window_bounds = array<i64: 16, 20>}, {pipeline_mode = #tpu.pipeline_mode<synchronous>, transform_indices = @transform_2, window_bounds = array<i64: 8, 20>}, {pipeline_mode = #tpu.pipeline_mode<synchronous>, transform_indices = @transform_3, window_bounds = array<i64: 1, 20>}, {pipeline_mode = #tpu.pipeline_mode<synchronous>, transform_indices = @transform_4, window_bounds = array<i64: 128, 256>}, {pipeline_mode = #tpu.pipeline_mode<synchronous>, transform_indices = @transform_5, window_bounds = array<i64: 128, 64>}, {pipeline_mode = #tpu.pipeline_mode<synchronous>, transform_indices = @transform_6, window_bounds = array<i64: 1, 64>}, {transform_indices = @transform_7, window_bounds = array<i64: 4, 4, 16>}, {pipeline_mode = #tpu.pipeline_mode<synchronous>, transform_indices = @transform_8, window_bounds = array<i64: 1, 4, 16>}]} {
    %c0_i32 = arith.constant 0 : i32
    %0 = arith.cmpi eq, %arg0, %c0_i32 : i32
    %1 = arith.extui %0 : i1 to i32
    %c0_i32_0 = arith.constant 0 : i32
    %2 = arith.cmpi ne, %1, %c0_i32_0 : i32
    scf.if %2 {
      %cst_177 = arith.constant 0.000000e+00 : f32
      %949 = vector.broadcast %cst_177 : f32 to vector<4x16xf32>
      %c0_178 = arith.constant 0 : index
      %c0_179 = arith.constant 0 : index
      %950 = vector.load %arg10[%c0_178, %c0_179] : memref<4x16xf32, #tpu.memory_space<vmem>>, vector<4x16xf32>
      tpu.vector_store %arg10[%c0_178, %c0_179], %949 {strides = array<i32>} : memref<4x16xf32, #tpu.memory_space<vmem>>, vector<4x16xf32>,
      %cst_180 = arith.constant 0.000000e+00 : f32
      %951 = vector.broadcast %cst_180 : f32 to vector<4x16xf32>
      %c0_181 = arith.constant 0 : index
      %c0_182 = arith.constant 0 : index
      %952 = vector.load %arg11[%c0_181, %c0_182] : memref<4x16xf32, #tpu.memory_space<vmem>>, vector<4x16xf32>
      tpu.vector_store %arg11[%c0_181, %c0_182], %951 {strides = array<i32>} : memref<4x16xf32, #tpu.memory_space<vmem>>, vector<4x16xf32>,
    } else {
    }
    %3 = tpu.iota {dimensions = array<i32: 1>} : vector<4x32xi32>
    %c0_i32_1 = arith.constant 0 : i32
    %4 = vector.broadcast %c0_i32_1 : i32 to vector<4x32xi32>
    %5 = arith.shrsi %3, %4 : vector<4x32xi32>
    %c1_i32 = arith.constant 1 : i32
    %6 = vector.broadcast %c1_i32 : i32 to vector<4x32xi32>
    %7 = arith.andi %5, %6 : vector<4x32xi32>
    %c1_i32_2 = arith.constant 1 : i32
    %8 = vector.broadcast %c1_i32_2 : i32 to vector<4x32xi32>
    %9 = arith.cmpi eq, %7, %8 : vector<4x32xi32>
    %c1_i32_3 = arith.constant 1 : i32
    %10 = vector.broadcast %c1_i32_3 : i32 to vector<4x32xi32>
    %11 = arith.shrsi %3, %10 : vector<4x32xi32>
    %c1_i32_4 = arith.constant 1 : i32
    %12 = vector.broadcast %c1_i32_4 : i32 to vector<4x32xi32>
    %13 = arith.andi %11, %12 : vector<4x32xi32>
    %c1_i32_5 = arith.constant 1 : i32
    %14 = vector.broadcast %c1_i32_5 : i32 to vector<4x32xi32>
    %15 = arith.cmpi eq, %13, %14 : vector<4x32xi32>
    %c2_i32 = arith.constant 2 : i32
    %16 = vector.broadcast %c2_i32 : i32 to vector<4x32xi32>
    %17 = arith.shrsi %3, %16 : vector<4x32xi32>
    %c1_i32_6 = arith.constant 1 : i32
    %18 = vector.broadcast %c1_i32_6 : i32 to vector<4x32xi32>
    %19 = arith.andi %17, %18 : vector<4x32xi32>
    %c1_i32_7 = arith.constant 1 : i32
    %20 = vector.broadcast %c1_i32_7 : i32 to vector<4x32xi32>
    %21 = arith.cmpi eq, %19, %20 : vector<4x32xi32>
    %c3_i32 = arith.constant 3 : i32
    %22 = vector.broadcast %c3_i32 : i32 to vector<4x32xi32>
    %23 = arith.shrsi %3, %22 : vector<4x32xi32>
    %c1_i32_8 = arith.constant 1 : i32
    %24 = vector.broadcast %c1_i32_8 : i32 to vector<4x32xi32>
    %25 = arith.andi %23, %24 : vector<4x32xi32>
    %c1_i32_9 = arith.constant 1 : i32
    %26 = vector.broadcast %c1_i32_9 : i32 to vector<4x32xi32>
    %27 = arith.cmpi eq, %25, %26 : vector<4x32xi32>
    %c4_i32 = arith.constant 4 : i32
    %28 = vector.broadcast %c4_i32 : i32 to vector<4x32xi32>
    %29 = arith.shrsi %3, %28 : vector<4x32xi32>
    %c1_i32_10 = arith.constant 1 : i32
    %30 = vector.broadcast %c1_i32_10 : i32 to vector<4x32xi32>
    %31 = arith.andi %29, %30 : vector<4x32xi32>
    %c1_i32_11 = arith.constant 1 : i32
    %32 = vector.broadcast %c1_i32_11 : i32 to vector<4x32xi32>
    %33 = arith.cmpi eq, %31, %32 : vector<4x32xi32>
    %c0_i32_12 = arith.constant 0 : i32
    %c1_i32_13 = arith.constant 1 : i32
    %34 = arith.muli %c0_i32_12, %c1_i32_13 : i32
    %c0_i32_14 = arith.constant 0 : i32
    %35 = arith.addi %c0_i32_14, %34 : i32
    %c0 = arith.constant 0 : index
    %c0_15 = arith.constant 0 : index
    %36 = vector.load %arg10[%c0, %c0_15] : memref<4x16xf32, #tpu.memory_space<vmem>>, vector<4x16xf32>
    %c0_16 = arith.constant 0 : index
    %c0_17 = arith.constant 0 : index
    %37 = vector.load %arg11[%c0_16, %c0_17] : memref<4x16xf32, #tpu.memory_space<vmem>>, vector<4x16xf32>
    %38 = arith.index_cast %35 : i32 to index
    %c0_18 = arith.constant 0 : index
    %c0_19 = arith.constant 0 : index
    %39 = vector.load %arg1[%38, %c0_18, %c0_19] : memref<4x4x8xf32, #tpu.memory_space<vmem>>, vector<1x4x8xf32>
    %40 = vector.shape_cast %39 : vector<1x4x8xf32> to vector<4x8xf32>
    %c0_20 = arith.constant 0 : index
    %c0_21 = arith.constant 0 : index
    %41 = vector.load %arg2[%c0_20, %c0_21] : memref<16x20xf32, #tpu.memory_space<vmem>>, vector<16x20xf32>
    %cst = arith.constant dense<0.000000e+00> : vector<4x20xf32>
    %42 = tpu.matmul %36, %41, %cst {dimension_numbers = #tpu.dot_dimension_numbers<[1], [0], [0], [1], [0, 0, 1, 1], [], []>} : vector<4x16xf32>, vector<16x20xf32>, vector<4x20xf32> -> vector<4x20xf32>
    %c0_22 = arith.constant 0 : index
    %c0_23 = arith.constant 0 : index
    %43 = vector.load %arg3[%c0_22, %c0_23] : memref<8x20xf32, #tpu.memory_space<vmem>>, vector<8x20xf32>
    %cst_24 = arith.constant dense<0.000000e+00> : vector<4x20xf32>
    %44 = tpu.matmul %40, %43, %cst_24 {dimension_numbers = #tpu.dot_dimension_numbers<[1], [0], [0], [1], [0, 0, 1, 1], [], []>} : vector<4x8xf32>, vector<8x20xf32>, vector<4x20xf32> -> vector<4x20xf32>
    %45 = arith.addf %42, %44 : vector<4x20xf32>
    %c0_25 = arith.constant 0 : index
    %c0_26 = arith.constant 0 : index
    %46 = vector.load %arg4[%c0_25, %c0_26] : memref<1x20xf32, #tpu.memory_space<vmem>>, vector<1x20xf32>
    %47 = vector.broadcast %46 : vector<1x20xf32> to vector<4x20xf32>
    %48 = arith.addf %45, %47 : vector<4x20xf32>
    %cst_27 = arith.constant 1.57079637 : f32
    %49 = vector.broadcast %cst_27 : f32 to vector<4x20xf32>
    %50 = arith.mulf %48, %49 : vector<4x20xf32>
    %cst_28 = arith.constant 5.000000e-01 : f32
    %51 = vector.broadcast %cst_28 : f32 to vector<4x20xf32>
    %52 = arith.mulf %50, %51 : vector<4x20xf32>
    %53 = math.cos %52 : vector<4x20xf32>
    %cst_29 = arith.constant 5.000000e-01 : f32
    %54 = vector.broadcast %cst_29 : f32 to vector<4x20xf32>
    %55 = arith.mulf %50, %54 : vector<4x20xf32>
    %56 = math.sin %55 : vector<4x20xf32>
    %57 = arith.subf %53, %56 : vector<4x20xf32>
    %cst_30 = arith.constant 0.707106769 : f32
    %58 = vector.broadcast %cst_30 : f32 to vector<4x20xf32>
    %59 = arith.mulf %57, %58 : vector<4x20xf32>
    %60 = arith.addf %53, %56 : vector<4x20xf32>
    %cst_31 = arith.constant 0.707106769 : f32
    %61 = vector.broadcast %cst_31 : f32 to vector<4x20xf32>
    %62 = arith.mulf %60, %61 : vector<4x20xf32>
    %cst_32 = arith.constant 1.000000e+00 : f32
    %63 = vector.broadcast %cst_32 : f32 to vector<4x32xf32>
    %64 = vector.extract_strided_slice %62 {offsets = [0, 0], sizes = [4, 1], strides = [1, 1]} : vector<4x20xf32> to vector<4x1xf32>
    %65 = vector.extract_strided_slice %59 {offsets = [0, 0], sizes = [4, 1], strides = [1, 1]} : vector<4x20xf32> to vector<4x1xf32>
    %66 = vector.shape_cast %64 : vector<4x1xf32> to vector<4x1xf32>
    %67 = vector.broadcast %66 : vector<4x1xf32> to vector<4x32xf32>
    %68 = vector.shape_cast %65 : vector<4x1xf32> to vector<4x1xf32>
    %69 = vector.broadcast %68 : vector<4x1xf32> to vector<4x32xf32>
    %70 = arith.select %9, %67, %69 : vector<4x32xi1>, vector<4x32xf32>
    %71 = arith.mulf %63, %70 : vector<4x32xf32>
    %72 = vector.extract_strided_slice %62 {offsets = [0, 1], sizes = [4, 1], strides = [1, 1]} : vector<4x20xf32> to vector<4x1xf32>
    %73 = vector.extract_strided_slice %59 {offsets = [0, 1], sizes = [4, 1], strides = [1, 1]} : vector<4x20xf32> to vector<4x1xf32>
    %74 = vector.shape_cast %72 : vector<4x1xf32> to vector<4x1xf32>
    %75 = vector.broadcast %74 : vector<4x1xf32> to vector<4x32xf32>
    %76 = vector.shape_cast %73 : vector<4x1xf32> to vector<4x1xf32>
    %77 = vector.broadcast %76 : vector<4x1xf32> to vector<4x32xf32>
    %78 = arith.select %15, %75, %77 : vector<4x32xi1>, vector<4x32xf32>
    %79 = arith.mulf %71, %78 : vector<4x32xf32>
    %80 = vector.extract_strided_slice %62 {offsets = [0, 2], sizes = [4, 1], strides = [1, 1]} : vector<4x20xf32> to vector<4x1xf32>
    %81 = vector.extract_strided_slice %59 {offsets = [0, 2], sizes = [4, 1], strides = [1, 1]} : vector<4x20xf32> to vector<4x1xf32>
    %82 = vector.shape_cast %80 : vector<4x1xf32> to vector<4x1xf32>
    %83 = vector.broadcast %82 : vector<4x1xf32> to vector<4x32xf32>
    %84 = vector.shape_cast %81 : vector<4x1xf32> to vector<4x1xf32>
    %85 = vector.broadcast %84 : vector<4x1xf32> to vector<4x32xf32>
    %86 = arith.select %21, %83, %85 : vector<4x32xi1>, vector<4x32xf32>
    %87 = arith.mulf %79, %86 : vector<4x32xf32>
    %88 = vector.extract_strided_slice %62 {offsets = [0, 3], sizes = [4, 1], strides = [1, 1]} : vector<4x20xf32> to vector<4x1xf32>
    %89 = vector.extract_strided_slice %59 {offsets = [0, 3], sizes = [4, 1], strides = [1, 1]} : vector<4x20xf32> to vector<4x1xf32>
    %90 = vector.shape_cast %88 : vector<4x1xf32> to vector<4x1xf32>
    %91 = vector.broadcast %90 : vector<4x1xf32> to vector<4x32xf32>
    %92 = vector.shape_cast %89 : vector<4x1xf32> to vector<4x1xf32>
    %93 = vector.broadcast %92 : vector<4x1xf32> to vector<4x32xf32>
    %94 = arith.select %27, %91, %93 : vector<4x32xi1>, vector<4x32xf32>
    %95 = arith.mulf %87, %94 : vector<4x32xf32>
    %96 = vector.extract_strided_slice %62 {offsets = [0, 4], sizes = [4, 1], strides = [1, 1]} : vector<4x20xf32> to vector<4x1xf32>
    %97 = vector.extract_strided_slice %59 {offsets = [0, 4], sizes = [4, 1], strides = [1, 1]} : vector<4x20xf32> to vector<4x1xf32>
    %98 = vector.shape_cast %96 : vector<4x1xf32> to vector<4x1xf32>
    %99 = vector.broadcast %98 : vector<4x1xf32> to vector<4x32xf32>
    %100 = vector.shape_cast %97 : vector<4x1xf32> to vector<4x1xf32>
    %101 = vector.broadcast %100 : vector<4x1xf32> to vector<4x32xf32>
    %102 = arith.select %33, %99, %101 : vector<4x32xi1>, vector<4x32xf32>
    %103 = arith.mulf %95, %102 : vector<4x32xf32>
    %cst_33 = arith.constant 1.000000e+00 : f32
    %104 = vector.broadcast %cst_33 : f32 to vector<4x32xf32>
    %105 = vector.extract_strided_slice %62 {offsets = [0, 5], sizes = [4, 1], strides = [1, 1]} : vector<4x20xf32> to vector<4x1xf32>
    %106 = vector.extract_strided_slice %59 {offsets = [0, 5], sizes = [4, 1], strides = [1, 1]} : vector<4x20xf32> to vector<4x1xf32>
    %107 = vector.shape_cast %105 : vector<4x1xf32> to vector<4x1xf32>
    %108 = vector.broadcast %107 : vector<4x1xf32> to vector<4x32xf32>
    %109 = vector.shape_cast %106 : vector<4x1xf32> to vector<4x1xf32>
    %110 = vector.broadcast %109 : vector<4x1xf32> to vector<4x32xf32>
    %111 = arith.select %9, %108, %110 : vector<4x32xi1>, vector<4x32xf32>
    %112 = arith.mulf %104, %111 : vector<4x32xf32>
    %113 = vector.extract_strided_slice %62 {offsets = [0, 6], sizes = [4, 1], strides = [1, 1]} : vector<4x20xf32> to vector<4x1xf32>
    %114 = vector.extract_strided_slice %59 {offsets = [0, 6], sizes = [4, 1], strides = [1, 1]} : vector<4x20xf32> to vector<4x1xf32>
    %115 = vector.shape_cast %113 : vector<4x1xf32> to vector<4x1xf32>
    %116 = vector.broadcast %115 : vector<4x1xf32> to vector<4x32xf32>
    %117 = vector.shape_cast %114 : vector<4x1xf32> to vector<4x1xf32>
    %118 = vector.broadcast %117 : vector<4x1xf32> to vector<4x32xf32>
    %119 = arith.select %15, %116, %118 : vector<4x32xi1>, vector<4x32xf32>
    %120 = arith.mulf %112, %119 : vector<4x32xf32>
    %121 = vector.extract_strided_slice %62 {offsets = [0, 7], sizes = [4, 1], strides = [1, 1]} : vector<4x20xf32> to vector<4x1xf32>
    %122 = vector.extract_strided_slice %59 {offsets = [0, 7], sizes = [4, 1], strides = [1, 1]} : vector<4x20xf32> to vector<4x1xf32>
    %123 = vector.shape_cast %121 : vector<4x1xf32> to vector<4x1xf32>
    %124 = vector.broadcast %123 : vector<4x1xf32> to vector<4x32xf32>
    %125 = vector.shape_cast %122 : vector<4x1xf32> to vector<4x1xf32>
    %126 = vector.broadcast %125 : vector<4x1xf32> to vector<4x32xf32>
    %127 = arith.select %21, %124, %126 : vector<4x32xi1>, vector<4x32xf32>
    %128 = arith.mulf %120, %127 : vector<4x32xf32>
    %129 = vector.extract_strided_slice %62 {offsets = [0, 8], sizes = [4, 1], strides = [1, 1]} : vector<4x20xf32> to vector<4x1xf32>
    %130 = vector.extract_strided_slice %59 {offsets = [0, 8], sizes = [4, 1], strides = [1, 1]} : vector<4x20xf32> to vector<4x1xf32>
    %131 = vector.shape_cast %129 : vector<4x1xf32> to vector<4x1xf32>
    %132 = vector.broadcast %131 : vector<4x1xf32> to vector<4x32xf32>
    %133 = vector.shape_cast %130 : vector<4x1xf32> to vector<4x1xf32>
    %134 = vector.broadcast %133 : vector<4x1xf32> to vector<4x32xf32>
    %135 = arith.select %27, %132, %134 : vector<4x32xi1>, vector<4x32xf32>
    %136 = arith.mulf %128, %135 : vector<4x32xf32>
    %137 = vector.extract_strided_slice %62 {offsets = [0, 9], sizes = [4, 1], strides = [1, 1]} : vector<4x20xf32> to vector<4x1xf32>
    %138 = vector.extract_strided_slice %59 {offsets = [0, 9], sizes = [4, 1], strides = [1, 1]} : vector<4x20xf32> to vector<4x1xf32>
    %139 = vector.shape_cast %137 : vector<4x1xf32> to vector<4x1xf32>
    %140 = vector.broadcast %139 : vector<4x1xf32> to vector<4x32xf32>
    %141 = vector.shape_cast %138 : vector<4x1xf32> to vector<4x1xf32>
    %142 = vector.broadcast %141 : vector<4x1xf32> to vector<4x32xf32>
    %143 = arith.select %33, %140, %142 : vector<4x32xi1>, vector<4x32xf32>
    %144 = arith.mulf %136, %143 : vector<4x32xf32>
    %cst_34 = arith.constant 1.000000e+00 : f32
    %145 = vector.broadcast %cst_34 : f32 to vector<4x32xf32>
    %146 = vector.extract_strided_slice %62 {offsets = [0, 10], sizes = [4, 1], strides = [1, 1]} : vector<4x20xf32> to vector<4x1xf32>
    %147 = vector.extract_strided_slice %59 {offsets = [0, 10], sizes = [4, 1], strides = [1, 1]} : vector<4x20xf32> to vector<4x1xf32>
    %148 = vector.shape_cast %146 : vector<4x1xf32> to vector<4x1xf32>
    %149 = vector.broadcast %148 : vector<4x1xf32> to vector<4x32xf32>
    %150 = vector.shape_cast %147 : vector<4x1xf32> to vector<4x1xf32>
    %151 = vector.broadcast %150 : vector<4x1xf32> to vector<4x32xf32>
    %152 = arith.select %9, %149, %151 : vector<4x32xi1>, vector<4x32xf32>
    %153 = arith.mulf %145, %152 : vector<4x32xf32>
    %154 = vector.extract_strided_slice %62 {offsets = [0, 11], sizes = [4, 1], strides = [1, 1]} : vector<4x20xf32> to vector<4x1xf32>
    %155 = vector.extract_strided_slice %59 {offsets = [0, 11], sizes = [4, 1], strides = [1, 1]} : vector<4x20xf32> to vector<4x1xf32>
    %156 = vector.shape_cast %154 : vector<4x1xf32> to vector<4x1xf32>
    %157 = vector.broadcast %156 : vector<4x1xf32> to vector<4x32xf32>
    %158 = vector.shape_cast %155 : vector<4x1xf32> to vector<4x1xf32>
    %159 = vector.broadcast %158 : vector<4x1xf32> to vector<4x32xf32>
    %160 = arith.select %15, %157, %159 : vector<4x32xi1>, vector<4x32xf32>
    %161 = arith.mulf %153, %160 : vector<4x32xf32>
    %162 = vector.extract_strided_slice %62 {offsets = [0, 12], sizes = [4, 1], strides = [1, 1]} : vector<4x20xf32> to vector<4x1xf32>
    %163 = vector.extract_strided_slice %59 {offsets = [0, 12], sizes = [4, 1], strides = [1, 1]} : vector<4x20xf32> to vector<4x1xf32>
    %164 = vector.shape_cast %162 : vector<4x1xf32> to vector<4x1xf32>
    %165 = vector.broadcast %164 : vector<4x1xf32> to vector<4x32xf32>
    %166 = vector.shape_cast %163 : vector<4x1xf32> to vector<4x1xf32>
    %167 = vector.broadcast %166 : vector<4x1xf32> to vector<4x32xf32>
    %168 = arith.select %21, %165, %167 : vector<4x32xi1>, vector<4x32xf32>
    %169 = arith.mulf %161, %168 : vector<4x32xf32>
    %170 = vector.extract_strided_slice %62 {offsets = [0, 13], sizes = [4, 1], strides = [1, 1]} : vector<4x20xf32> to vector<4x1xf32>
    %171 = vector.extract_strided_slice %59 {offsets = [0, 13], sizes = [4, 1], strides = [1, 1]} : vector<4x20xf32> to vector<4x1xf32>
    %172 = vector.shape_cast %170 : vector<4x1xf32> to vector<4x1xf32>
    %173 = vector.broadcast %172 : vector<4x1xf32> to vector<4x32xf32>
    %174 = vector.shape_cast %171 : vector<4x1xf32> to vector<4x1xf32>
    %175 = vector.broadcast %174 : vector<4x1xf32> to vector<4x32xf32>
    %176 = arith.select %27, %173, %175 : vector<4x32xi1>, vector<4x32xf32>
    %177 = arith.mulf %169, %176 : vector<4x32xf32>
    %178 = vector.extract_strided_slice %62 {offsets = [0, 14], sizes = [4, 1], strides = [1, 1]} : vector<4x20xf32> to vector<4x1xf32>
    %179 = vector.extract_strided_slice %59 {offsets = [0, 14], sizes = [4, 1], strides = [1, 1]} : vector<4x20xf32> to vector<4x1xf32>
    %180 = vector.shape_cast %178 : vector<4x1xf32> to vector<4x1xf32>
    %181 = vector.broadcast %180 : vector<4x1xf32> to vector<4x32xf32>
    %182 = vector.shape_cast %179 : vector<4x1xf32> to vector<4x1xf32>
    %183 = vector.broadcast %182 : vector<4x1xf32> to vector<4x32xf32>
    %184 = arith.select %33, %181, %183 : vector<4x32xi1>, vector<4x32xf32>
    %185 = arith.mulf %177, %184 : vector<4x32xf32>
    %cst_35 = arith.constant 1.000000e+00 : f32
    %186 = vector.broadcast %cst_35 : f32 to vector<4x32xf32>
    %187 = vector.extract_strided_slice %62 {offsets = [0, 15], sizes = [4, 1], strides = [1, 1]} : vector<4x20xf32> to vector<4x1xf32>
    %188 = vector.extract_strided_slice %59 {offsets = [0, 15], sizes = [4, 1], strides = [1, 1]} : vector<4x20xf32> to vector<4x1xf32>
    %189 = vector.shape_cast %187 : vector<4x1xf32> to vector<4x1xf32>
    %190 = vector.broadcast %189 : vector<4x1xf32> to vector<4x32xf32>
    %191 = vector.shape_cast %188 : vector<4x1xf32> to vector<4x1xf32>
    %192 = vector.broadcast %191 : vector<4x1xf32> to vector<4x32xf32>
    %193 = arith.select %9, %190, %192 : vector<4x32xi1>, vector<4x32xf32>
    %194 = arith.mulf %186, %193 : vector<4x32xf32>
    %195 = vector.extract_strided_slice %62 {offsets = [0, 16], sizes = [4, 1], strides = [1, 1]} : vector<4x20xf32> to vector<4x1xf32>
    %196 = vector.extract_strided_slice %59 {offsets = [0, 16], sizes = [4, 1], strides = [1, 1]} : vector<4x20xf32> to vector<4x1xf32>
    %197 = vector.shape_cast %195 : vector<4x1xf32> to vector<4x1xf32>
    %198 = vector.broadcast %197 : vector<4x1xf32> to vector<4x32xf32>
    %199 = vector.shape_cast %196 : vector<4x1xf32> to vector<4x1xf32>
    %200 = vector.broadcast %199 : vector<4x1xf32> to vector<4x32xf32>
    %201 = arith.select %15, %198, %200 : vector<4x32xi1>, vector<4x32xf32>
    %202 = arith.mulf %194, %201 : vector<4x32xf32>
    %203 = vector.extract_strided_slice %62 {offsets = [0, 17], sizes = [4, 1], strides = [1, 1]} : vector<4x20xf32> to vector<4x1xf32>
    %204 = vector.extract_strided_slice %59 {offsets = [0, 17], sizes = [4, 1], strides = [1, 1]} : vector<4x20xf32> to vector<4x1xf32>
    %205 = vector.shape_cast %203 : vector<4x1xf32> to vector<4x1xf32>
    %206 = vector.broadcast %205 : vector<4x1xf32> to vector<4x32xf32>
    %207 = vector.shape_cast %204 : vector<4x1xf32> to vector<4x1xf32>
    %208 = vector.broadcast %207 : vector<4x1xf32> to vector<4x32xf32>
    %209 = arith.select %21, %206, %208 : vector<4x32xi1>, vector<4x32xf32>
    %210 = arith.mulf %202, %209 : vector<4x32xf32>
    %211 = vector.extract_strided_slice %62 {offsets = [0, 18], sizes = [4, 1], strides = [1, 1]} : vector<4x20xf32> to vector<4x1xf32>
    %212 = vector.extract_strided_slice %59 {offsets = [0, 18], sizes = [4, 1], strides = [1, 1]} : vector<4x20xf32> to vector<4x1xf32>
    %213 = vector.shape_cast %211 : vector<4x1xf32> to vector<4x1xf32>
    %214 = vector.broadcast %213 : vector<4x1xf32> to vector<4x32xf32>
    %215 = vector.shape_cast %212 : vector<4x1xf32> to vector<4x1xf32>
    %216 = vector.broadcast %215 : vector<4x1xf32> to vector<4x32xf32>
    %217 = arith.select %27, %214, %216 : vector<4x32xi1>, vector<4x32xf32>
    %218 = arith.mulf %210, %217 : vector<4x32xf32>
    %219 = vector.extract_strided_slice %62 {offsets = [0, 19], sizes = [4, 1], strides = [1, 1]} : vector<4x20xf32> to vector<4x1xf32>
    %220 = vector.extract_strided_slice %59 {offsets = [0, 19], sizes = [4, 1], strides = [1, 1]} : vector<4x20xf32> to vector<4x1xf32>
    %221 = vector.shape_cast %219 : vector<4x1xf32> to vector<4x1xf32>
    %222 = vector.broadcast %221 : vector<4x1xf32> to vector<4x32xf32>
    %223 = vector.shape_cast %220 : vector<4x1xf32> to vector<4x1xf32>
    %224 = vector.broadcast %223 : vector<4x1xf32> to vector<4x32xf32>
    %225 = arith.select %33, %222, %224 : vector<4x32xi1>, vector<4x32xf32>
    %226 = arith.mulf %218, %225 : vector<4x32xf32>
    %227 = tpu.concatenate %103, %144, %185, %226 in 1 : vector<4x32xf32>, vector<4x32xf32>, vector<4x32xf32>, vector<4x32xf32> -> vector<4x128xf32>
    %c0_36 = arith.constant 0 : index
    %c0_37 = arith.constant 0 : index
    %228 = vector.load %arg5[%c0_36, %c0_37] : memref<128x256xf32, #tpu.memory_space<vmem>>, vector<128x256xf32>
    %cst_38 = arith.constant dense<0.000000e+00> : vector<4x256xf32>
    %229 = tpu.matmul %227, %228, %cst_38 {dimension_numbers = #tpu.dot_dimension_numbers<[1], [0], [0], [1], [0, 0, 1, 1], [], []>} : vector<4x128xf32>, vector<128x256xf32>, vector<4x256xf32> -> vector<4x256xf32>
    %230 = vector.extract_strided_slice %229 {offsets = [0, 0], sizes = [4, 128], strides = [1, 1]} : vector<4x256xf32> to vector<4x128xf32>
    %231 = vector.extract_strided_slice %229 {offsets = [0, 128], sizes = [4, 128], strides = [1, 1]} : vector<4x256xf32> to vector<4x128xf32>
    %232 = arith.mulf %230, %230 : vector<4x128xf32>
    %233 = arith.mulf %231, %231 : vector<4x128xf32>
    %234 = arith.addf %232, %233 : vector<4x128xf32>
    %c0_39 = arith.constant 0 : index
    %c0_40 = arith.constant 0 : index
    %235 = vector.load %arg6[%c0_39, %c0_40] : memref<128x64xf32, #tpu.memory_space<vmem>>, vector<128x64xf32>
    %cst_41 = arith.constant dense<0.000000e+00> : vector<4x64xf32>
    %236 = tpu.matmul %234, %235, %cst_41 {dimension_numbers = #tpu.dot_dimension_numbers<[1], [0], [0], [1], [0, 0, 1, 1], [], []>} : vector<4x128xf32>, vector<128x64xf32>, vector<4x64xf32> -> vector<4x64xf32>
    %c0_42 = arith.constant 0 : index
    %c0_43 = arith.constant 0 : index
    %237 = vector.load %arg7[%c0_42, %c0_43] : memref<1x64xf32, #tpu.memory_space<vmem>>, vector<1x64xf32>
    %238 = vector.broadcast %237 : vector<1x64xf32> to vector<4x64xf32>
    %239 = arith.addf %236, %238 : vector<4x64xf32>
    %240 = vector.extract_strided_slice %239 {offsets = [0, 0], sizes = [4, 48], strides = [1, 1]} : vector<4x64xf32> to vector<4x48xf32>
    %241 = arith.negf %240 : vector<4x48xf32>
    %242 = math.exp %241 : vector<4x48xf32>
    %cst_44 = arith.constant 1.000000e+00 : f32
    %243 = vector.broadcast %cst_44 : f32 to vector<4x48xf32>
    %244 = arith.addf %243, %242 : vector<4x48xf32>
    %245 = arith.divf %243, %244 : vector<4x48xf32>
    %246 = vector.extract_strided_slice %245 {offsets = [0, 0], sizes = [4, 16], strides = [1, 1]} : vector<4x48xf32> to vector<4x16xf32>
    %247 = vector.extract_strided_slice %245 {offsets = [0, 16], sizes = [4, 16], strides = [1, 1]} : vector<4x48xf32> to vector<4x16xf32>
    %248 = vector.extract_strided_slice %245 {offsets = [0, 32], sizes = [4, 16], strides = [1, 1]} : vector<4x48xf32> to vector<4x16xf32>
    %249 = vector.extract_strided_slice %239 {offsets = [0, 48], sizes = [4, 16], strides = [1, 1]} : vector<4x64xf32> to vector<4x16xf32>
    %250 = math.tanh %249 : vector<4x16xf32>
    %251 = arith.mulf %247, %37 : vector<4x16xf32>
    %252 = arith.mulf %246, %250 : vector<4x16xf32>
    %253 = arith.addf %251, %252 : vector<4x16xf32>
    %254 = math.tanh %253 : vector<4x16xf32>
    %255 = arith.mulf %248, %254 : vector<4x16xf32>
    %c0_45 = arith.constant 0 : index
    %c0_46 = arith.constant 0 : index
    %256 = vector.load %arg10[%c0_45, %c0_46] : memref<4x16xf32, #tpu.memory_space<vmem>>, vector<4x16xf32>
    tpu.vector_store %arg10[%c0_45, %c0_46], %255 {strides = array<i32>} : memref<4x16xf32, #tpu.memory_space<vmem>>, vector<4x16xf32>,
    %c0_47 = arith.constant 0 : index
    %c0_48 = arith.constant 0 : index
    %257 = vector.load %arg11[%c0_47, %c0_48] : memref<4x16xf32, #tpu.memory_space<vmem>>, vector<4x16xf32>
    tpu.vector_store %arg11[%c0_47, %c0_48], %253 {strides = array<i32>} : memref<4x16xf32, #tpu.memory_space<vmem>>, vector<4x16xf32>,
    %258 = arith.index_cast %35 : i32 to index
    %c0_49 = arith.constant 0 : index
    %c0_50 = arith.constant 0 : index
    %259 = vector.load %arg8[%258, %c0_49, %c0_50] : memref<4x4x16xf32, #tpu.memory_space<vmem>>, vector<1x4x16xf32>
    %260 = vector.shape_cast %259 : vector<1x4x16xf32> to vector<4x16xf32>
    %261 = vector.shape_cast %255 : vector<4x16xf32> to vector<1x4x16xf32>
    tpu.vector_store %arg8[%258, %c0_49, %c0_50], %261 {strides = array<i32>} : memref<4x4x16xf32, #tpu.memory_space<vmem>>, vector<1x4x16xf32>,
    %c1_i32_51 = arith.constant 1 : i32
    %c1_i32_52 = arith.constant 1 : i32
    %262 = arith.muli %c1_i32_51, %c1_i32_52 : i32
    %c0_i32_53 = arith.constant 0 : i32
    %263 = arith.addi %c0_i32_53, %262 : i32
    %c0_54 = arith.constant 0 : index
    %c0_55 = arith.constant 0 : index
    %264 = vector.load %arg10[%c0_54, %c0_55] : memref<4x16xf32, #tpu.memory_space<vmem>>, vector<4x16xf32>
    %c0_56 = arith.constant 0 : index
    %c0_57 = arith.constant 0 : index
    %265 = vector.load %arg11[%c0_56, %c0_57] : memref<4x16xf32, #tpu.memory_space<vmem>>, vector<4x16xf32>
    %266 = arith.index_cast %263 : i32 to index
    %c0_58 = arith.constant 0 : index
    %c0_59 = arith.constant 0 : index
    %267 = vector.load %arg1[%266, %c0_58, %c0_59] : memref<4x4x8xf32, #tpu.memory_space<vmem>>, vector<1x4x8xf32>
    %268 = vector.shape_cast %267 : vector<1x4x8xf32> to vector<4x8xf32>
    %c0_60 = arith.constant 0 : index
    %c0_61 = arith.constant 0 : index
    %269 = vector.load %arg2[%c0_60, %c0_61] : memref<16x20xf32, #tpu.memory_space<vmem>>, vector<16x20xf32>
    %cst_62 = arith.constant dense<0.000000e+00> : vector<4x20xf32>
    %270 = tpu.matmul %264, %269, %cst_62 {dimension_numbers = #tpu.dot_dimension_numbers<[1], [0], [0], [1], [0, 0, 1, 1], [], []>} : vector<4x16xf32>, vector<16x20xf32>, vector<4x20xf32> -> vector<4x20xf32>
    %c0_63 = arith.constant 0 : index
    %c0_64 = arith.constant 0 : index
    %271 = vector.load %arg3[%c0_63, %c0_64] : memref<8x20xf32, #tpu.memory_space<vmem>>, vector<8x20xf32>
    %cst_65 = arith.constant dense<0.000000e+00> : vector<4x20xf32>
    %272 = tpu.matmul %268, %271, %cst_65 {dimension_numbers = #tpu.dot_dimension_numbers<[1], [0], [0], [1], [0, 0, 1, 1], [], []>} : vector<4x8xf32>, vector<8x20xf32>, vector<4x20xf32> -> vector<4x20xf32>
    %273 = arith.addf %270, %272 : vector<4x20xf32>
    %c0_66 = arith.constant 0 : index
    %c0_67 = arith.constant 0 : index
    %274 = vector.load %arg4[%c0_66, %c0_67] : memref<1x20xf32, #tpu.memory_space<vmem>>, vector<1x20xf32>
    %275 = vector.broadcast %274 : vector<1x20xf32> to vector<4x20xf32>
    %276 = arith.addf %273, %275 : vector<4x20xf32>
    %cst_68 = arith.constant 1.57079637 : f32
    %277 = vector.broadcast %cst_68 : f32 to vector<4x20xf32>
    %278 = arith.mulf %276, %277 : vector<4x20xf32>
    %cst_69 = arith.constant 5.000000e-01 : f32
    %279 = vector.broadcast %cst_69 : f32 to vector<4x20xf32>
    %280 = arith.mulf %278, %279 : vector<4x20xf32>
    %281 = math.cos %280 : vector<4x20xf32>
    %cst_70 = arith.constant 5.000000e-01 : f32
    %282 = vector.broadcast %cst_70 : f32 to vector<4x20xf32>
    %283 = arith.mulf %278, %282 : vector<4x20xf32>
    %284 = math.sin %283 : vector<4x20xf32>
    %285 = arith.subf %281, %284 : vector<4x20xf32>
    %cst_71 = arith.constant 0.707106769 : f32
    %286 = vector.broadcast %cst_71 : f32 to vector<4x20xf32>
    %287 = arith.mulf %285, %286 : vector<4x20xf32>
    %288 = arith.addf %281, %284 : vector<4x20xf32>
    %cst_72 = arith.constant 0.707106769 : f32
    %289 = vector.broadcast %cst_72 : f32 to vector<4x20xf32>
    %290 = arith.mulf %288, %289 : vector<4x20xf32>
    %cst_73 = arith.constant 1.000000e+00 : f32
    %291 = vector.broadcast %cst_73 : f32 to vector<4x32xf32>
    %292 = vector.extract_strided_slice %290 {offsets = [0, 0], sizes = [4, 1], strides = [1, 1]} : vector<4x20xf32> to vector<4x1xf32>
    %293 = vector.extract_strided_slice %287 {offsets = [0, 0], sizes = [4, 1], strides = [1, 1]} : vector<4x20xf32> to vector<4x1xf32>
    %294 = vector.shape_cast %292 : vector<4x1xf32> to vector<4x1xf32>
    %295 = vector.broadcast %294 : vector<4x1xf32> to vector<4x32xf32>
    %296 = vector.shape_cast %293 : vector<4x1xf32> to vector<4x1xf32>
    %297 = vector.broadcast %296 : vector<4x1xf32> to vector<4x32xf32>
    %298 = arith.select %9, %295, %297 : vector<4x32xi1>, vector<4x32xf32>
    %299 = arith.mulf %291, %298 : vector<4x32xf32>
    %300 = vector.extract_strided_slice %290 {offsets = [0, 1], sizes = [4, 1], strides = [1, 1]} : vector<4x20xf32> to vector<4x1xf32>
    %301 = vector.extract_strided_slice %287 {offsets = [0, 1], sizes = [4, 1], strides = [1, 1]} : vector<4x20xf32> to vector<4x1xf32>
    %302 = vector.shape_cast %300 : vector<4x1xf32> to vector<4x1xf32>
    %303 = vector.broadcast %302 : vector<4x1xf32> to vector<4x32xf32>
    %304 = vector.shape_cast %301 : vector<4x1xf32> to vector<4x1xf32>
    %305 = vector.broadcast %304 : vector<4x1xf32> to vector<4x32xf32>
    %306 = arith.select %15, %303, %305 : vector<4x32xi1>, vector<4x32xf32>
    %307 = arith.mulf %299, %306 : vector<4x32xf32>
    %308 = vector.extract_strided_slice %290 {offsets = [0, 2], sizes = [4, 1], strides = [1, 1]} : vector<4x20xf32> to vector<4x1xf32>
    %309 = vector.extract_strided_slice %287 {offsets = [0, 2], sizes = [4, 1], strides = [1, 1]} : vector<4x20xf32> to vector<4x1xf32>
    %310 = vector.shape_cast %308 : vector<4x1xf32> to vector<4x1xf32>
    %311 = vector.broadcast %310 : vector<4x1xf32> to vector<4x32xf32>
    %312 = vector.shape_cast %309 : vector<4x1xf32> to vector<4x1xf32>
    %313 = vector.broadcast %312 : vector<4x1xf32> to vector<4x32xf32>
    %314 = arith.select %21, %311, %313 : vector<4x32xi1>, vector<4x32xf32>
    %315 = arith.mulf %307, %314 : vector<4x32xf32>
    %316 = vector.extract_strided_slice %290 {offsets = [0, 3], sizes = [4, 1], strides = [1, 1]} : vector<4x20xf32> to vector<4x1xf32>
    %317 = vector.extract_strided_slice %287 {offsets = [0, 3], sizes = [4, 1], strides = [1, 1]} : vector<4x20xf32> to vector<4x1xf32>
    %318 = vector.shape_cast %316 : vector<4x1xf32> to vector<4x1xf32>
    %319 = vector.broadcast %318 : vector<4x1xf32> to vector<4x32xf32>
    %320 = vector.shape_cast %317 : vector<4x1xf32> to vector<4x1xf32>
    %321 = vector.broadcast %320 : vector<4x1xf32> to vector<4x32xf32>
    %322 = arith.select %27, %319, %321 : vector<4x32xi1>, vector<4x32xf32>
    %323 = arith.mulf %315, %322 : vector<4x32xf32>
    %324 = vector.extract_strided_slice %290 {offsets = [0, 4], sizes = [4, 1], strides = [1, 1]} : vector<4x20xf32> to vector<4x1xf32>
    %325 = vector.extract_strided_slice %287 {offsets = [0, 4], sizes = [4, 1], strides = [1, 1]} : vector<4x20xf32> to vector<4x1xf32>
    %326 = vector.shape_cast %324 : vector<4x1xf32> to vector<4x1xf32>
    %327 = vector.broadcast %326 : vector<4x1xf32> to vector<4x32xf32>
    %328 = vector.shape_cast %325 : vector<4x1xf32> to vector<4x1xf32>
    %329 = vector.broadcast %328 : vector<4x1xf32> to vector<4x32xf32>
    %330 = arith.select %33, %327, %329 : vector<4x32xi1>, vector<4x32xf32>
    %331 = arith.mulf %323, %330 : vector<4x32xf32>
    %cst_74 = arith.constant 1.000000e+00 : f32
    %332 = vector.broadcast %cst_74 : f32 to vector<4x32xf32>
    %333 = vector.extract_strided_slice %290 {offsets = [0, 5], sizes = [4, 1], strides = [1, 1]} : vector<4x20xf32> to vector<4x1xf32>
    %334 = vector.extract_strided_slice %287 {offsets = [0, 5], sizes = [4, 1], strides = [1, 1]} : vector<4x20xf32> to vector<4x1xf32>
    %335 = vector.shape_cast %333 : vector<4x1xf32> to vector<4x1xf32>
    %336 = vector.broadcast %335 : vector<4x1xf32> to vector<4x32xf32>
    %337 = vector.shape_cast %334 : vector<4x1xf32> to vector<4x1xf32>
    %338 = vector.broadcast %337 : vector<4x1xf32> to vector<4x32xf32>
    %339 = arith.select %9, %336, %338 : vector<4x32xi1>, vector<4x32xf32>
    %340 = arith.mulf %332, %339 : vector<4x32xf32>
    %341 = vector.extract_strided_slice %290 {offsets = [0, 6], sizes = [4, 1], strides = [1, 1]} : vector<4x20xf32> to vector<4x1xf32>
    %342 = vector.extract_strided_slice %287 {offsets = [0, 6], sizes = [4, 1], strides = [1, 1]} : vector<4x20xf32> to vector<4x1xf32>
    %343 = vector.shape_cast %341 : vector<4x1xf32> to vector<4x1xf32>
    %344 = vector.broadcast %343 : vector<4x1xf32> to vector<4x32xf32>
    %345 = vector.shape_cast %342 : vector<4x1xf32> to vector<4x1xf32>
    %346 = vector.broadcast %345 : vector<4x1xf32> to vector<4x32xf32>
    %347 = arith.select %15, %344, %346 : vector<4x32xi1>, vector<4x32xf32>
    %348 = arith.mulf %340, %347 : vector<4x32xf32>
    %349 = vector.extract_strided_slice %290 {offsets = [0, 7], sizes = [4, 1], strides = [1, 1]} : vector<4x20xf32> to vector<4x1xf32>
    %350 = vector.extract_strided_slice %287 {offsets = [0, 7], sizes = [4, 1], strides = [1, 1]} : vector<4x20xf32> to vector<4x1xf32>
    %351 = vector.shape_cast %349 : vector<4x1xf32> to vector<4x1xf32>
    %352 = vector.broadcast %351 : vector<4x1xf32> to vector<4x32xf32>
    %353 = vector.shape_cast %350 : vector<4x1xf32> to vector<4x1xf32>
    %354 = vector.broadcast %353 : vector<4x1xf32> to vector<4x32xf32>
    %355 = arith.select %21, %352, %354 : vector<4x32xi1>, vector<4x32xf32>
    %356 = arith.mulf %348, %355 : vector<4x32xf32>
    %357 = vector.extract_strided_slice %290 {offsets = [0, 8], sizes = [4, 1], strides = [1, 1]} : vector<4x20xf32> to vector<4x1xf32>
    %358 = vector.extract_strided_slice %287 {offsets = [0, 8], sizes = [4, 1], strides = [1, 1]} : vector<4x20xf32> to vector<4x1xf32>
    %359 = vector.shape_cast %357 : vector<4x1xf32> to vector<4x1xf32>
    %360 = vector.broadcast %359 : vector<4x1xf32> to vector<4x32xf32>
    %361 = vector.shape_cast %358 : vector<4x1xf32> to vector<4x1xf32>
    %362 = vector.broadcast %361 : vector<4x1xf32> to vector<4x32xf32>
    %363 = arith.select %27, %360, %362 : vector<4x32xi1>, vector<4x32xf32>
    %364 = arith.mulf %356, %363 : vector<4x32xf32>
    %365 = vector.extract_strided_slice %290 {offsets = [0, 9], sizes = [4, 1], strides = [1, 1]} : vector<4x20xf32> to vector<4x1xf32>
    %366 = vector.extract_strided_slice %287 {offsets = [0, 9], sizes = [4, 1], strides = [1, 1]} : vector<4x20xf32> to vector<4x1xf32>
    %367 = vector.shape_cast %365 : vector<4x1xf32> to vector<4x1xf32>
    %368 = vector.broadcast %367 : vector<4x1xf32> to vector<4x32xf32>
    %369 = vector.shape_cast %366 : vector<4x1xf32> to vector<4x1xf32>
    %370 = vector.broadcast %369 : vector<4x1xf32> to vector<4x32xf32>
    %371 = arith.select %33, %368, %370 : vector<4x32xi1>, vector<4x32xf32>
    %372 = arith.mulf %364, %371 : vector<4x32xf32>
    %cst_75 = arith.constant 1.000000e+00 : f32
    %373 = vector.broadcast %cst_75 : f32 to vector<4x32xf32>
    %374 = vector.extract_strided_slice %290 {offsets = [0, 10], sizes = [4, 1], strides = [1, 1]} : vector<4x20xf32> to vector<4x1xf32>
    %375 = vector.extract_strided_slice %287 {offsets = [0, 10], sizes = [4, 1], strides = [1, 1]} : vector<4x20xf32> to vector<4x1xf32>
    %376 = vector.shape_cast %374 : vector<4x1xf32> to vector<4x1xf32>
    %377 = vector.broadcast %376 : vector<4x1xf32> to vector<4x32xf32>
    %378 = vector.shape_cast %375 : vector<4x1xf32> to vector<4x1xf32>
    %379 = vector.broadcast %378 : vector<4x1xf32> to vector<4x32xf32>
    %380 = arith.select %9, %377, %379 : vector<4x32xi1>, vector<4x32xf32>
    %381 = arith.mulf %373, %380 : vector<4x32xf32>
    %382 = vector.extract_strided_slice %290 {offsets = [0, 11], sizes = [4, 1], strides = [1, 1]} : vector<4x20xf32> to vector<4x1xf32>
    %383 = vector.extract_strided_slice %287 {offsets = [0, 11], sizes = [4, 1], strides = [1, 1]} : vector<4x20xf32> to vector<4x1xf32>
    %384 = vector.shape_cast %382 : vector<4x1xf32> to vector<4x1xf32>
    %385 = vector.broadcast %384 : vector<4x1xf32> to vector<4x32xf32>
    %386 = vector.shape_cast %383 : vector<4x1xf32> to vector<4x1xf32>
    %387 = vector.broadcast %386 : vector<4x1xf32> to vector<4x32xf32>
    %388 = arith.select %15, %385, %387 : vector<4x32xi1>, vector<4x32xf32>
    %389 = arith.mulf %381, %388 : vector<4x32xf32>
    %390 = vector.extract_strided_slice %290 {offsets = [0, 12], sizes = [4, 1], strides = [1, 1]} : vector<4x20xf32> to vector<4x1xf32>
    %391 = vector.extract_strided_slice %287 {offsets = [0, 12], sizes = [4, 1], strides = [1, 1]} : vector<4x20xf32> to vector<4x1xf32>
    %392 = vector.shape_cast %390 : vector<4x1xf32> to vector<4x1xf32>
    %393 = vector.broadcast %392 : vector<4x1xf32> to vector<4x32xf32>
    %394 = vector.shape_cast %391 : vector<4x1xf32> to vector<4x1xf32>
    %395 = vector.broadcast %394 : vector<4x1xf32> to vector<4x32xf32>
    %396 = arith.select %21, %393, %395 : vector<4x32xi1>, vector<4x32xf32>
    %397 = arith.mulf %389, %396 : vector<4x32xf32>
    %398 = vector.extract_strided_slice %290 {offsets = [0, 13], sizes = [4, 1], strides = [1, 1]} : vector<4x20xf32> to vector<4x1xf32>
    %399 = vector.extract_strided_slice %287 {offsets = [0, 13], sizes = [4, 1], strides = [1, 1]} : vector<4x20xf32> to vector<4x1xf32>
    %400 = vector.shape_cast %398 : vector<4x1xf32> to vector<4x1xf32>
    %401 = vector.broadcast %400 : vector<4x1xf32> to vector<4x32xf32>
    %402 = vector.shape_cast %399 : vector<4x1xf32> to vector<4x1xf32>
    %403 = vector.broadcast %402 : vector<4x1xf32> to vector<4x32xf32>
    %404 = arith.select %27, %401, %403 : vector<4x32xi1>, vector<4x32xf32>
    %405 = arith.mulf %397, %404 : vector<4x32xf32>
    %406 = vector.extract_strided_slice %290 {offsets = [0, 14], sizes = [4, 1], strides = [1, 1]} : vector<4x20xf32> to vector<4x1xf32>
    %407 = vector.extract_strided_slice %287 {offsets = [0, 14], sizes = [4, 1], strides = [1, 1]} : vector<4x20xf32> to vector<4x1xf32>
    %408 = vector.shape_cast %406 : vector<4x1xf32> to vector<4x1xf32>
    %409 = vector.broadcast %408 : vector<4x1xf32> to vector<4x32xf32>
    %410 = vector.shape_cast %407 : vector<4x1xf32> to vector<4x1xf32>
    %411 = vector.broadcast %410 : vector<4x1xf32> to vector<4x32xf32>
    %412 = arith.select %33, %409, %411 : vector<4x32xi1>, vector<4x32xf32>
    %413 = arith.mulf %405, %412 : vector<4x32xf32>
    %cst_76 = arith.constant 1.000000e+00 : f32
    %414 = vector.broadcast %cst_76 : f32 to vector<4x32xf32>
    %415 = vector.extract_strided_slice %290 {offsets = [0, 15], sizes = [4, 1], strides = [1, 1]} : vector<4x20xf32> to vector<4x1xf32>
    %416 = vector.extract_strided_slice %287 {offsets = [0, 15], sizes = [4, 1], strides = [1, 1]} : vector<4x20xf32> to vector<4x1xf32>
    %417 = vector.shape_cast %415 : vector<4x1xf32> to vector<4x1xf32>
    %418 = vector.broadcast %417 : vector<4x1xf32> to vector<4x32xf32>
    %419 = vector.shape_cast %416 : vector<4x1xf32> to vector<4x1xf32>
    %420 = vector.broadcast %419 : vector<4x1xf32> to vector<4x32xf32>
    %421 = arith.select %9, %418, %420 : vector<4x32xi1>, vector<4x32xf32>
    %422 = arith.mulf %414, %421 : vector<4x32xf32>
    %423 = vector.extract_strided_slice %290 {offsets = [0, 16], sizes = [4, 1], strides = [1, 1]} : vector<4x20xf32> to vector<4x1xf32>
    %424 = vector.extract_strided_slice %287 {offsets = [0, 16], sizes = [4, 1], strides = [1, 1]} : vector<4x20xf32> to vector<4x1xf32>
    %425 = vector.shape_cast %423 : vector<4x1xf32> to vector<4x1xf32>
    %426 = vector.broadcast %425 : vector<4x1xf32> to vector<4x32xf32>
    %427 = vector.shape_cast %424 : vector<4x1xf32> to vector<4x1xf32>
    %428 = vector.broadcast %427 : vector<4x1xf32> to vector<4x32xf32>
    %429 = arith.select %15, %426, %428 : vector<4x32xi1>, vector<4x32xf32>
    %430 = arith.mulf %422, %429 : vector<4x32xf32>
    %431 = vector.extract_strided_slice %290 {offsets = [0, 17], sizes = [4, 1], strides = [1, 1]} : vector<4x20xf32> to vector<4x1xf32>
    %432 = vector.extract_strided_slice %287 {offsets = [0, 17], sizes = [4, 1], strides = [1, 1]} : vector<4x20xf32> to vector<4x1xf32>
    %433 = vector.shape_cast %431 : vector<4x1xf32> to vector<4x1xf32>
    %434 = vector.broadcast %433 : vector<4x1xf32> to vector<4x32xf32>
    %435 = vector.shape_cast %432 : vector<4x1xf32> to vector<4x1xf32>
    %436 = vector.broadcast %435 : vector<4x1xf32> to vector<4x32xf32>
    %437 = arith.select %21, %434, %436 : vector<4x32xi1>, vector<4x32xf32>
    %438 = arith.mulf %430, %437 : vector<4x32xf32>
    %439 = vector.extract_strided_slice %290 {offsets = [0, 18], sizes = [4, 1], strides = [1, 1]} : vector<4x20xf32> to vector<4x1xf32>
    %440 = vector.extract_strided_slice %287 {offsets = [0, 18], sizes = [4, 1], strides = [1, 1]} : vector<4x20xf32> to vector<4x1xf32>
    %441 = vector.shape_cast %439 : vector<4x1xf32> to vector<4x1xf32>
    %442 = vector.broadcast %441 : vector<4x1xf32> to vector<4x32xf32>
    %443 = vector.shape_cast %440 : vector<4x1xf32> to vector<4x1xf32>
    %444 = vector.broadcast %443 : vector<4x1xf32> to vector<4x32xf32>
    %445 = arith.select %27, %442, %444 : vector<4x32xi1>, vector<4x32xf32>
    %446 = arith.mulf %438, %445 : vector<4x32xf32>
    %447 = vector.extract_strided_slice %290 {offsets = [0, 19], sizes = [4, 1], strides = [1, 1]} : vector<4x20xf32> to vector<4x1xf32>
    %448 = vector.extract_strided_slice %287 {offsets = [0, 19], sizes = [4, 1], strides = [1, 1]} : vector<4x20xf32> to vector<4x1xf32>
    %449 = vector.shape_cast %447 : vector<4x1xf32> to vector<4x1xf32>
    %450 = vector.broadcast %449 : vector<4x1xf32> to vector<4x32xf32>
    %451 = vector.shape_cast %448 : vector<4x1xf32> to vector<4x1xf32>
    %452 = vector.broadcast %451 : vector<4x1xf32> to vector<4x32xf32>
    %453 = arith.select %33, %450, %452 : vector<4x32xi1>, vector<4x32xf32>
    %454 = arith.mulf %446, %453 : vector<4x32xf32>
    %455 = tpu.concatenate %331, %372, %413, %454 in 1 : vector<4x32xf32>, vector<4x32xf32>, vector<4x32xf32>, vector<4x32xf32> -> vector<4x128xf32>
    %c0_77 = arith.constant 0 : index
    %c0_78 = arith.constant 0 : index
    %456 = vector.load %arg5[%c0_77, %c0_78] : memref<128x256xf32, #tpu.memory_space<vmem>>, vector<128x256xf32>
    %cst_79 = arith.constant dense<0.000000e+00> : vector<4x256xf32>
    %457 = tpu.matmul %455, %456, %cst_79 {dimension_numbers = #tpu.dot_dimension_numbers<[1], [0], [0], [1], [0, 0, 1, 1], [], []>} : vector<4x128xf32>, vector<128x256xf32>, vector<4x256xf32> -> vector<4x256xf32>
    %458 = vector.extract_strided_slice %457 {offsets = [0, 0], sizes = [4, 128], strides = [1, 1]} : vector<4x256xf32> to vector<4x128xf32>
    %459 = vector.extract_strided_slice %457 {offsets = [0, 128], sizes = [4, 128], strides = [1, 1]} : vector<4x256xf32> to vector<4x128xf32>
    %460 = arith.mulf %458, %458 : vector<4x128xf32>
    %461 = arith.mulf %459, %459 : vector<4x128xf32>
    %462 = arith.addf %460, %461 : vector<4x128xf32>
    %c0_80 = arith.constant 0 : index
    %c0_81 = arith.constant 0 : index
    %463 = vector.load %arg6[%c0_80, %c0_81] : memref<128x64xf32, #tpu.memory_space<vmem>>, vector<128x64xf32>
    %cst_82 = arith.constant dense<0.000000e+00> : vector<4x64xf32>
    %464 = tpu.matmul %462, %463, %cst_82 {dimension_numbers = #tpu.dot_dimension_numbers<[1], [0], [0], [1], [0, 0, 1, 1], [], []>} : vector<4x128xf32>, vector<128x64xf32>, vector<4x64xf32> -> vector<4x64xf32>
    %c0_83 = arith.constant 0 : index
    %c0_84 = arith.constant 0 : index
    %465 = vector.load %arg7[%c0_83, %c0_84] : memref<1x64xf32, #tpu.memory_space<vmem>>, vector<1x64xf32>
    %466 = vector.broadcast %465 : vector<1x64xf32> to vector<4x64xf32>
    %467 = arith.addf %464, %466 : vector<4x64xf32>
    %468 = vector.extract_strided_slice %467 {offsets = [0, 0], sizes = [4, 48], strides = [1, 1]} : vector<4x64xf32> to vector<4x48xf32>
    %469 = arith.negf %468 : vector<4x48xf32>
    %470 = math.exp %469 : vector<4x48xf32>
    %cst_85 = arith.constant 1.000000e+00 : f32
    %471 = vector.broadcast %cst_85 : f32 to vector<4x48xf32>
    %472 = arith.addf %471, %470 : vector<4x48xf32>
    %473 = arith.divf %471, %472 : vector<4x48xf32>
    %474 = vector.extract_strided_slice %473 {offsets = [0, 0], sizes = [4, 16], strides = [1, 1]} : vector<4x48xf32> to vector<4x16xf32>
    %475 = vector.extract_strided_slice %473 {offsets = [0, 16], sizes = [4, 16], strides = [1, 1]} : vector<4x48xf32> to vector<4x16xf32>
    %476 = vector.extract_strided_slice %473 {offsets = [0, 32], sizes = [4, 16], strides = [1, 1]} : vector<4x48xf32> to vector<4x16xf32>
    %477 = vector.extract_strided_slice %467 {offsets = [0, 48], sizes = [4, 16], strides = [1, 1]} : vector<4x64xf32> to vector<4x16xf32>
    %478 = math.tanh %477 : vector<4x16xf32>
    %479 = arith.mulf %475, %265 : vector<4x16xf32>
    %480 = arith.mulf %474, %478 : vector<4x16xf32>
    %481 = arith.addf %479, %480 : vector<4x16xf32>
    %482 = math.tanh %481 : vector<4x16xf32>
    %483 = arith.mulf %476, %482 : vector<4x16xf32>
    %c0_86 = arith.constant 0 : index
    %c0_87 = arith.constant 0 : index
    %484 = vector.load %arg10[%c0_86, %c0_87] : memref<4x16xf32, #tpu.memory_space<vmem>>, vector<4x16xf32>
    tpu.vector_store %arg10[%c0_86, %c0_87], %483 {strides = array<i32>} : memref<4x16xf32, #tpu.memory_space<vmem>>, vector<4x16xf32>,
    %c0_88 = arith.constant 0 : index
    %c0_89 = arith.constant 0 : index
    %485 = vector.load %arg11[%c0_88, %c0_89] : memref<4x16xf32, #tpu.memory_space<vmem>>, vector<4x16xf32>
    tpu.vector_store %arg11[%c0_88, %c0_89], %481 {strides = array<i32>} : memref<4x16xf32, #tpu.memory_space<vmem>>, vector<4x16xf32>,
    %486 = arith.index_cast %263 : i32 to index
    %c0_90 = arith.constant 0 : index
    %c0_91 = arith.constant 0 : index
    %487 = vector.load %arg8[%486, %c0_90, %c0_91] : memref<4x4x16xf32, #tpu.memory_space<vmem>>, vector<1x4x16xf32>
    %488 = vector.shape_cast %487 : vector<1x4x16xf32> to vector<4x16xf32>
    %489 = vector.shape_cast %483 : vector<4x16xf32> to vector<1x4x16xf32>
    tpu.vector_store %arg8[%486, %c0_90, %c0_91], %489 {strides = array<i32>} : memref<4x4x16xf32, #tpu.memory_space<vmem>>, vector<1x4x16xf32>,
    %c2_i32_92 = arith.constant 2 : i32
    %c1_i32_93 = arith.constant 1 : i32
    %490 = arith.muli %c2_i32_92, %c1_i32_93 : i32
    %c0_i32_94 = arith.constant 0 : i32
    %491 = arith.addi %c0_i32_94, %490 : i32
    %c0_95 = arith.constant 0 : index
    %c0_96 = arith.constant 0 : index
    %492 = vector.load %arg10[%c0_95, %c0_96] : memref<4x16xf32, #tpu.memory_space<vmem>>, vector<4x16xf32>
    %c0_97 = arith.constant 0 : index
    %c0_98 = arith.constant 0 : index
    %493 = vector.load %arg11[%c0_97, %c0_98] : memref<4x16xf32, #tpu.memory_space<vmem>>, vector<4x16xf32>
    %494 = arith.index_cast %491 : i32 to index
    %c0_99 = arith.constant 0 : index
    %c0_100 = arith.constant 0 : index
    %495 = vector.load %arg1[%494, %c0_99, %c0_100] : memref<4x4x8xf32, #tpu.memory_space<vmem>>, vector<1x4x8xf32>
    %496 = vector.shape_cast %495 : vector<1x4x8xf32> to vector<4x8xf32>
    %c0_101 = arith.constant 0 : index
    %c0_102 = arith.constant 0 : index
    %497 = vector.load %arg2[%c0_101, %c0_102] : memref<16x20xf32, #tpu.memory_space<vmem>>, vector<16x20xf32>
    %cst_103 = arith.constant dense<0.000000e+00> : vector<4x20xf32>
    %498 = tpu.matmul %492, %497, %cst_103 {dimension_numbers = #tpu.dot_dimension_numbers<[1], [0], [0], [1], [0, 0, 1, 1], [], []>} : vector<4x16xf32>, vector<16x20xf32>, vector<4x20xf32> -> vector<4x20xf32>
    %c0_104 = arith.constant 0 : index
    %c0_105 = arith.constant 0 : index
    %499 = vector.load %arg3[%c0_104, %c0_105] : memref<8x20xf32, #tpu.memory_space<vmem>>, vector<8x20xf32>
    %cst_106 = arith.constant dense<0.000000e+00> : vector<4x20xf32>
    %500 = tpu.matmul %496, %499, %cst_106 {dimension_numbers = #tpu.dot_dimension_numbers<[1], [0], [0], [1], [0, 0, 1, 1], [], []>} : vector<4x8xf32>, vector<8x20xf32>, vector<4x20xf32> -> vector<4x20xf32>
    %501 = arith.addf %498, %500 : vector<4x20xf32>
    %c0_107 = arith.constant 0 : index
    %c0_108 = arith.constant 0 : index
    %502 = vector.load %arg4[%c0_107, %c0_108] : memref<1x20xf32, #tpu.memory_space<vmem>>, vector<1x20xf32>
    %503 = vector.broadcast %502 : vector<1x20xf32> to vector<4x20xf32>
    %504 = arith.addf %501, %503 : vector<4x20xf32>
    %cst_109 = arith.constant 1.57079637 : f32
    %505 = vector.broadcast %cst_109 : f32 to vector<4x20xf32>
    %506 = arith.mulf %504, %505 : vector<4x20xf32>
    %cst_110 = arith.constant 5.000000e-01 : f32
    %507 = vector.broadcast %cst_110 : f32 to vector<4x20xf32>
    %508 = arith.mulf %506, %507 : vector<4x20xf32>
    %509 = math.cos %508 : vector<4x20xf32>
    %cst_111 = arith.constant 5.000000e-01 : f32
    %510 = vector.broadcast %cst_111 : f32 to vector<4x20xf32>
    %511 = arith.mulf %506, %510 : vector<4x20xf32>
    %512 = math.sin %511 : vector<4x20xf32>
    %513 = arith.subf %509, %512 : vector<4x20xf32>
    %cst_112 = arith.constant 0.707106769 : f32
    %514 = vector.broadcast %cst_112 : f32 to vector<4x20xf32>
    %515 = arith.mulf %513, %514 : vector<4x20xf32>
    %516 = arith.addf %509, %512 : vector<4x20xf32>
    %cst_113 = arith.constant 0.707106769 : f32
    %517 = vector.broadcast %cst_113 : f32 to vector<4x20xf32>
    %518 = arith.mulf %516, %517 : vector<4x20xf32>
    %cst_114 = arith.constant 1.000000e+00 : f32
    %519 = vector.broadcast %cst_114 : f32 to vector<4x32xf32>
    %520 = vector.extract_strided_slice %518 {offsets = [0, 0], sizes = [4, 1], strides = [1, 1]} : vector<4x20xf32> to vector<4x1xf32>
    %521 = vector.extract_strided_slice %515 {offsets = [0, 0], sizes = [4, 1], strides = [1, 1]} : vector<4x20xf32> to vector<4x1xf32>
    %522 = vector.shape_cast %520 : vector<4x1xf32> to vector<4x1xf32>
    %523 = vector.broadcast %522 : vector<4x1xf32> to vector<4x32xf32>
    %524 = vector.shape_cast %521 : vector<4x1xf32> to vector<4x1xf32>
    %525 = vector.broadcast %524 : vector<4x1xf32> to vector<4x32xf32>
    %526 = arith.select %9, %523, %525 : vector<4x32xi1>, vector<4x32xf32>
    %527 = arith.mulf %519, %526 : vector<4x32xf32>
    %528 = vector.extract_strided_slice %518 {offsets = [0, 1], sizes = [4, 1], strides = [1, 1]} : vector<4x20xf32> to vector<4x1xf32>
    %529 = vector.extract_strided_slice %515 {offsets = [0, 1], sizes = [4, 1], strides = [1, 1]} : vector<4x20xf32> to vector<4x1xf32>
    %530 = vector.shape_cast %528 : vector<4x1xf32> to vector<4x1xf32>
    %531 = vector.broadcast %530 : vector<4x1xf32> to vector<4x32xf32>
    %532 = vector.shape_cast %529 : vector<4x1xf32> to vector<4x1xf32>
    %533 = vector.broadcast %532 : vector<4x1xf32> to vector<4x32xf32>
    %534 = arith.select %15, %531, %533 : vector<4x32xi1>, vector<4x32xf32>
    %535 = arith.mulf %527, %534 : vector<4x32xf32>
    %536 = vector.extract_strided_slice %518 {offsets = [0, 2], sizes = [4, 1], strides = [1, 1]} : vector<4x20xf32> to vector<4x1xf32>
    %537 = vector.extract_strided_slice %515 {offsets = [0, 2], sizes = [4, 1], strides = [1, 1]} : vector<4x20xf32> to vector<4x1xf32>
    %538 = vector.shape_cast %536 : vector<4x1xf32> to vector<4x1xf32>
    %539 = vector.broadcast %538 : vector<4x1xf32> to vector<4x32xf32>
    %540 = vector.shape_cast %537 : vector<4x1xf32> to vector<4x1xf32>
    %541 = vector.broadcast %540 : vector<4x1xf32> to vector<4x32xf32>
    %542 = arith.select %21, %539, %541 : vector<4x32xi1>, vector<4x32xf32>
    %543 = arith.mulf %535, %542 : vector<4x32xf32>
    %544 = vector.extract_strided_slice %518 {offsets = [0, 3], sizes = [4, 1], strides = [1, 1]} : vector<4x20xf32> to vector<4x1xf32>
    %545 = vector.extract_strided_slice %515 {offsets = [0, 3], sizes = [4, 1], strides = [1, 1]} : vector<4x20xf32> to vector<4x1xf32>
    %546 = vector.shape_cast %544 : vector<4x1xf32> to vector<4x1xf32>
    %547 = vector.broadcast %546 : vector<4x1xf32> to vector<4x32xf32>
    %548 = vector.shape_cast %545 : vector<4x1xf32> to vector<4x1xf32>
    %549 = vector.broadcast %548 : vector<4x1xf32> to vector<4x32xf32>
    %550 = arith.select %27, %547, %549 : vector<4x32xi1>, vector<4x32xf32>
    %551 = arith.mulf %543, %550 : vector<4x32xf32>
    %552 = vector.extract_strided_slice %518 {offsets = [0, 4], sizes = [4, 1], strides = [1, 1]} : vector<4x20xf32> to vector<4x1xf32>
    %553 = vector.extract_strided_slice %515 {offsets = [0, 4], sizes = [4, 1], strides = [1, 1]} : vector<4x20xf32> to vector<4x1xf32>
    %554 = vector.shape_cast %552 : vector<4x1xf32> to vector<4x1xf32>
    %555 = vector.broadcast %554 : vector<4x1xf32> to vector<4x32xf32>
    %556 = vector.shape_cast %553 : vector<4x1xf32> to vector<4x1xf32>
    %557 = vector.broadcast %556 : vector<4x1xf32> to vector<4x32xf32>
    %558 = arith.select %33, %555, %557 : vector<4x32xi1>, vector<4x32xf32>
    %559 = arith.mulf %551, %558 : vector<4x32xf32>
    %cst_115 = arith.constant 1.000000e+00 : f32
    %560 = vector.broadcast %cst_115 : f32 to vector<4x32xf32>
    %561 = vector.extract_strided_slice %518 {offsets = [0, 5], sizes = [4, 1], strides = [1, 1]} : vector<4x20xf32> to vector<4x1xf32>
    %562 = vector.extract_strided_slice %515 {offsets = [0, 5], sizes = [4, 1], strides = [1, 1]} : vector<4x20xf32> to vector<4x1xf32>
    %563 = vector.shape_cast %561 : vector<4x1xf32> to vector<4x1xf32>
    %564 = vector.broadcast %563 : vector<4x1xf32> to vector<4x32xf32>
    %565 = vector.shape_cast %562 : vector<4x1xf32> to vector<4x1xf32>
    %566 = vector.broadcast %565 : vector<4x1xf32> to vector<4x32xf32>
    %567 = arith.select %9, %564, %566 : vector<4x32xi1>, vector<4x32xf32>
    %568 = arith.mulf %560, %567 : vector<4x32xf32>
    %569 = vector.extract_strided_slice %518 {offsets = [0, 6], sizes = [4, 1], strides = [1, 1]} : vector<4x20xf32> to vector<4x1xf32>
    %570 = vector.extract_strided_slice %515 {offsets = [0, 6], sizes = [4, 1], strides = [1, 1]} : vector<4x20xf32> to vector<4x1xf32>
    %571 = vector.shape_cast %569 : vector<4x1xf32> to vector<4x1xf32>
    %572 = vector.broadcast %571 : vector<4x1xf32> to vector<4x32xf32>
    %573 = vector.shape_cast %570 : vector<4x1xf32> to vector<4x1xf32>
    %574 = vector.broadcast %573 : vector<4x1xf32> to vector<4x32xf32>
    %575 = arith.select %15, %572, %574 : vector<4x32xi1>, vector<4x32xf32>
    %576 = arith.mulf %568, %575 : vector<4x32xf32>
    %577 = vector.extract_strided_slice %518 {offsets = [0, 7], sizes = [4, 1], strides = [1, 1]} : vector<4x20xf32> to vector<4x1xf32>
    %578 = vector.extract_strided_slice %515 {offsets = [0, 7], sizes = [4, 1], strides = [1, 1]} : vector<4x20xf32> to vector<4x1xf32>
    %579 = vector.shape_cast %577 : vector<4x1xf32> to vector<4x1xf32>
    %580 = vector.broadcast %579 : vector<4x1xf32> to vector<4x32xf32>
    %581 = vector.shape_cast %578 : vector<4x1xf32> to vector<4x1xf32>
    %582 = vector.broadcast %581 : vector<4x1xf32> to vector<4x32xf32>
    %583 = arith.select %21, %580, %582 : vector<4x32xi1>, vector<4x32xf32>
    %584 = arith.mulf %576, %583 : vector<4x32xf32>
    %585 = vector.extract_strided_slice %518 {offsets = [0, 8], sizes = [4, 1], strides = [1, 1]} : vector<4x20xf32> to vector<4x1xf32>
    %586 = vector.extract_strided_slice %515 {offsets = [0, 8], sizes = [4, 1], strides = [1, 1]} : vector<4x20xf32> to vector<4x1xf32>
    %587 = vector.shape_cast %585 : vector<4x1xf32> to vector<4x1xf32>
    %588 = vector.broadcast %587 : vector<4x1xf32> to vector<4x32xf32>
    %589 = vector.shape_cast %586 : vector<4x1xf32> to vector<4x1xf32>
    %590 = vector.broadcast %589 : vector<4x1xf32> to vector<4x32xf32>
    %591 = arith.select %27, %588, %590 : vector<4x32xi1>, vector<4x32xf32>
    %592 = arith.mulf %584, %591 : vector<4x32xf32>
    %593 = vector.extract_strided_slice %518 {offsets = [0, 9], sizes = [4, 1], strides = [1, 1]} : vector<4x20xf32> to vector<4x1xf32>
    %594 = vector.extract_strided_slice %515 {offsets = [0, 9], sizes = [4, 1], strides = [1, 1]} : vector<4x20xf32> to vector<4x1xf32>
    %595 = vector.shape_cast %593 : vector<4x1xf32> to vector<4x1xf32>
    %596 = vector.broadcast %595 : vector<4x1xf32> to vector<4x32xf32>
    %597 = vector.shape_cast %594 : vector<4x1xf32> to vector<4x1xf32>
    %598 = vector.broadcast %597 : vector<4x1xf32> to vector<4x32xf32>
    %599 = arith.select %33, %596, %598 : vector<4x32xi1>, vector<4x32xf32>
    %600 = arith.mulf %592, %599 : vector<4x32xf32>
    %cst_116 = arith.constant 1.000000e+00 : f32
    %601 = vector.broadcast %cst_116 : f32 to vector<4x32xf32>
    %602 = vector.extract_strided_slice %518 {offsets = [0, 10], sizes = [4, 1], strides = [1, 1]} : vector<4x20xf32> to vector<4x1xf32>
    %603 = vector.extract_strided_slice %515 {offsets = [0, 10], sizes = [4, 1], strides = [1, 1]} : vector<4x20xf32> to vector<4x1xf32>
    %604 = vector.shape_cast %602 : vector<4x1xf32> to vector<4x1xf32>
    %605 = vector.broadcast %604 : vector<4x1xf32> to vector<4x32xf32>
    %606 = vector.shape_cast %603 : vector<4x1xf32> to vector<4x1xf32>
    %607 = vector.broadcast %606 : vector<4x1xf32> to vector<4x32xf32>
    %608 = arith.select %9, %605, %607 : vector<4x32xi1>, vector<4x32xf32>
    %609 = arith.mulf %601, %608 : vector<4x32xf32>
    %610 = vector.extract_strided_slice %518 {offsets = [0, 11], sizes = [4, 1], strides = [1, 1]} : vector<4x20xf32> to vector<4x1xf32>
    %611 = vector.extract_strided_slice %515 {offsets = [0, 11], sizes = [4, 1], strides = [1, 1]} : vector<4x20xf32> to vector<4x1xf32>
    %612 = vector.shape_cast %610 : vector<4x1xf32> to vector<4x1xf32>
    %613 = vector.broadcast %612 : vector<4x1xf32> to vector<4x32xf32>
    %614 = vector.shape_cast %611 : vector<4x1xf32> to vector<4x1xf32>
    %615 = vector.broadcast %614 : vector<4x1xf32> to vector<4x32xf32>
    %616 = arith.select %15, %613, %615 : vector<4x32xi1>, vector<4x32xf32>
    %617 = arith.mulf %609, %616 : vector<4x32xf32>
    %618 = vector.extract_strided_slice %518 {offsets = [0, 12], sizes = [4, 1], strides = [1, 1]} : vector<4x20xf32> to vector<4x1xf32>
    %619 = vector.extract_strided_slice %515 {offsets = [0, 12], sizes = [4, 1], strides = [1, 1]} : vector<4x20xf32> to vector<4x1xf32>
    %620 = vector.shape_cast %618 : vector<4x1xf32> to vector<4x1xf32>
    %621 = vector.broadcast %620 : vector<4x1xf32> to vector<4x32xf32>
    %622 = vector.shape_cast %619 : vector<4x1xf32> to vector<4x1xf32>
    %623 = vector.broadcast %622 : vector<4x1xf32> to vector<4x32xf32>
    %624 = arith.select %21, %621, %623 : vector<4x32xi1>, vector<4x32xf32>
    %625 = arith.mulf %617, %624 : vector<4x32xf32>
    %626 = vector.extract_strided_slice %518 {offsets = [0, 13], sizes = [4, 1], strides = [1, 1]} : vector<4x20xf32> to vector<4x1xf32>
    %627 = vector.extract_strided_slice %515 {offsets = [0, 13], sizes = [4, 1], strides = [1, 1]} : vector<4x20xf32> to vector<4x1xf32>
    %628 = vector.shape_cast %626 : vector<4x1xf32> to vector<4x1xf32>
    %629 = vector.broadcast %628 : vector<4x1xf32> to vector<4x32xf32>
    %630 = vector.shape_cast %627 : vector<4x1xf32> to vector<4x1xf32>
    %631 = vector.broadcast %630 : vector<4x1xf32> to vector<4x32xf32>
    %632 = arith.select %27, %629, %631 : vector<4x32xi1>, vector<4x32xf32>
    %633 = arith.mulf %625, %632 : vector<4x32xf32>
    %634 = vector.extract_strided_slice %518 {offsets = [0, 14], sizes = [4, 1], strides = [1, 1]} : vector<4x20xf32> to vector<4x1xf32>
    %635 = vector.extract_strided_slice %515 {offsets = [0, 14], sizes = [4, 1], strides = [1, 1]} : vector<4x20xf32> to vector<4x1xf32>
    %636 = vector.shape_cast %634 : vector<4x1xf32> to vector<4x1xf32>
    %637 = vector.broadcast %636 : vector<4x1xf32> to vector<4x32xf32>
    %638 = vector.shape_cast %635 : vector<4x1xf32> to vector<4x1xf32>
    %639 = vector.broadcast %638 : vector<4x1xf32> to vector<4x32xf32>
    %640 = arith.select %33, %637, %639 : vector<4x32xi1>, vector<4x32xf32>
    %641 = arith.mulf %633, %640 : vector<4x32xf32>
    %cst_117 = arith.constant 1.000000e+00 : f32
    %642 = vector.broadcast %cst_117 : f32 to vector<4x32xf32>
    %643 = vector.extract_strided_slice %518 {offsets = [0, 15], sizes = [4, 1], strides = [1, 1]} : vector<4x20xf32> to vector<4x1xf32>
    %644 = vector.extract_strided_slice %515 {offsets = [0, 15], sizes = [4, 1], strides = [1, 1]} : vector<4x20xf32> to vector<4x1xf32>
    %645 = vector.shape_cast %643 : vector<4x1xf32> to vector<4x1xf32>
    %646 = vector.broadcast %645 : vector<4x1xf32> to vector<4x32xf32>
    %647 = vector.shape_cast %644 : vector<4x1xf32> to vector<4x1xf32>
    %648 = vector.broadcast %647 : vector<4x1xf32> to vector<4x32xf32>
    %649 = arith.select %9, %646, %648 : vector<4x32xi1>, vector<4x32xf32>
    %650 = arith.mulf %642, %649 : vector<4x32xf32>
    %651 = vector.extract_strided_slice %518 {offsets = [0, 16], sizes = [4, 1], strides = [1, 1]} : vector<4x20xf32> to vector<4x1xf32>
    %652 = vector.extract_strided_slice %515 {offsets = [0, 16], sizes = [4, 1], strides = [1, 1]} : vector<4x20xf32> to vector<4x1xf32>
    %653 = vector.shape_cast %651 : vector<4x1xf32> to vector<4x1xf32>
    %654 = vector.broadcast %653 : vector<4x1xf32> to vector<4x32xf32>
    %655 = vector.shape_cast %652 : vector<4x1xf32> to vector<4x1xf32>
    %656 = vector.broadcast %655 : vector<4x1xf32> to vector<4x32xf32>
    %657 = arith.select %15, %654, %656 : vector<4x32xi1>, vector<4x32xf32>
    %658 = arith.mulf %650, %657 : vector<4x32xf32>
    %659 = vector.extract_strided_slice %518 {offsets = [0, 17], sizes = [4, 1], strides = [1, 1]} : vector<4x20xf32> to vector<4x1xf32>
    %660 = vector.extract_strided_slice %515 {offsets = [0, 17], sizes = [4, 1], strides = [1, 1]} : vector<4x20xf32> to vector<4x1xf32>
    %661 = vector.shape_cast %659 : vector<4x1xf32> to vector<4x1xf32>
    %662 = vector.broadcast %661 : vector<4x1xf32> to vector<4x32xf32>
    %663 = vector.shape_cast %660 : vector<4x1xf32> to vector<4x1xf32>
    %664 = vector.broadcast %663 : vector<4x1xf32> to vector<4x32xf32>
    %665 = arith.select %21, %662, %664 : vector<4x32xi1>, vector<4x32xf32>
    %666 = arith.mulf %658, %665 : vector<4x32xf32>
    %667 = vector.extract_strided_slice %518 {offsets = [0, 18], sizes = [4, 1], strides = [1, 1]} : vector<4x20xf32> to vector<4x1xf32>
    %668 = vector.extract_strided_slice %515 {offsets = [0, 18], sizes = [4, 1], strides = [1, 1]} : vector<4x20xf32> to vector<4x1xf32>
    %669 = vector.shape_cast %667 : vector<4x1xf32> to vector<4x1xf32>
    %670 = vector.broadcast %669 : vector<4x1xf32> to vector<4x32xf32>
    %671 = vector.shape_cast %668 : vector<4x1xf32> to vector<4x1xf32>
    %672 = vector.broadcast %671 : vector<4x1xf32> to vector<4x32xf32>
    %673 = arith.select %27, %670, %672 : vector<4x32xi1>, vector<4x32xf32>
    %674 = arith.mulf %666, %673 : vector<4x32xf32>
    %675 = vector.extract_strided_slice %518 {offsets = [0, 19], sizes = [4, 1], strides = [1, 1]} : vector<4x20xf32> to vector<4x1xf32>
    %676 = vector.extract_strided_slice %515 {offsets = [0, 19], sizes = [4, 1], strides = [1, 1]} : vector<4x20xf32> to vector<4x1xf32>
    %677 = vector.shape_cast %675 : vector<4x1xf32> to vector<4x1xf32>
    %678 = vector.broadcast %677 : vector<4x1xf32> to vector<4x32xf32>
    %679 = vector.shape_cast %676 : vector<4x1xf32> to vector<4x1xf32>
    %680 = vector.broadcast %679 : vector<4x1xf32> to vector<4x32xf32>
    %681 = arith.select %33, %678, %680 : vector<4x32xi1>, vector<4x32xf32>
    %682 = arith.mulf %674, %681 : vector<4x32xf32>
    %683 = tpu.concatenate %559, %600, %641, %682 in 1 : vector<4x32xf32>, vector<4x32xf32>, vector<4x32xf32>, vector<4x32xf32> -> vector<4x128xf32>
    %c0_118 = arith.constant 0 : index
    %c0_119 = arith.constant 0 : index
    %684 = vector.load %arg5[%c0_118, %c0_119] : memref<128x256xf32, #tpu.memory_space<vmem>>, vector<128x256xf32>
    %cst_120 = arith.constant dense<0.000000e+00> : vector<4x256xf32>
    %685 = tpu.matmul %683, %684, %cst_120 {dimension_numbers = #tpu.dot_dimension_numbers<[1], [0], [0], [1], [0, 0, 1, 1], [], []>} : vector<4x128xf32>, vector<128x256xf32>, vector<4x256xf32> -> vector<4x256xf32>
    %686 = vector.extract_strided_slice %685 {offsets = [0, 0], sizes = [4, 128], strides = [1, 1]} : vector<4x256xf32> to vector<4x128xf32>
    %687 = vector.extract_strided_slice %685 {offsets = [0, 128], sizes = [4, 128], strides = [1, 1]} : vector<4x256xf32> to vector<4x128xf32>
    %688 = arith.mulf %686, %686 : vector<4x128xf32>
    %689 = arith.mulf %687, %687 : vector<4x128xf32>
    %690 = arith.addf %688, %689 : vector<4x128xf32>
    %c0_121 = arith.constant 0 : index
    %c0_122 = arith.constant 0 : index
    %691 = vector.load %arg6[%c0_121, %c0_122] : memref<128x64xf32, #tpu.memory_space<vmem>>, vector<128x64xf32>
    %cst_123 = arith.constant dense<0.000000e+00> : vector<4x64xf32>
    %692 = tpu.matmul %690, %691, %cst_123 {dimension_numbers = #tpu.dot_dimension_numbers<[1], [0], [0], [1], [0, 0, 1, 1], [], []>} : vector<4x128xf32>, vector<128x64xf32>, vector<4x64xf32> -> vector<4x64xf32>
    %c0_124 = arith.constant 0 : index
    %c0_125 = arith.constant 0 : index
    %693 = vector.load %arg7[%c0_124, %c0_125] : memref<1x64xf32, #tpu.memory_space<vmem>>, vector<1x64xf32>
    %694 = vector.broadcast %693 : vector<1x64xf32> to vector<4x64xf32>
    %695 = arith.addf %692, %694 : vector<4x64xf32>
    %696 = vector.extract_strided_slice %695 {offsets = [0, 0], sizes = [4, 48], strides = [1, 1]} : vector<4x64xf32> to vector<4x48xf32>
    %697 = arith.negf %696 : vector<4x48xf32>
    %698 = math.exp %697 : vector<4x48xf32>
    %cst_126 = arith.constant 1.000000e+00 : f32
    %699 = vector.broadcast %cst_126 : f32 to vector<4x48xf32>
    %700 = arith.addf %699, %698 : vector<4x48xf32>
    %701 = arith.divf %699, %700 : vector<4x48xf32>
    %702 = vector.extract_strided_slice %701 {offsets = [0, 0], sizes = [4, 16], strides = [1, 1]} : vector<4x48xf32> to vector<4x16xf32>
    %703 = vector.extract_strided_slice %701 {offsets = [0, 16], sizes = [4, 16], strides = [1, 1]} : vector<4x48xf32> to vector<4x16xf32>
    %704 = vector.extract_strided_slice %701 {offsets = [0, 32], sizes = [4, 16], strides = [1, 1]} : vector<4x48xf32> to vector<4x16xf32>
    %705 = vector.extract_strided_slice %695 {offsets = [0, 48], sizes = [4, 16], strides = [1, 1]} : vector<4x64xf32> to vector<4x16xf32>
    %706 = math.tanh %705 : vector<4x16xf32>
    %707 = arith.mulf %703, %493 : vector<4x16xf32>
    %708 = arith.mulf %702, %706 : vector<4x16xf32>
    %709 = arith.addf %707, %708 : vector<4x16xf32>
    %710 = math.tanh %709 : vector<4x16xf32>
    %711 = arith.mulf %704, %710 : vector<4x16xf32>
    %c0_127 = arith.constant 0 : index
    %c0_128 = arith.constant 0 : index
    %712 = vector.load %arg10[%c0_127, %c0_128] : memref<4x16xf32, #tpu.memory_space<vmem>>, vector<4x16xf32>
    tpu.vector_store %arg10[%c0_127, %c0_128], %711 {strides = array<i32>} : memref<4x16xf32, #tpu.memory_space<vmem>>, vector<4x16xf32>,
    %c0_129 = arith.constant 0 : index
    %c0_130 = arith.constant 0 : index
    %713 = vector.load %arg11[%c0_129, %c0_130] : memref<4x16xf32, #tpu.memory_space<vmem>>, vector<4x16xf32>
    tpu.vector_store %arg11[%c0_129, %c0_130], %709 {strides = array<i32>} : memref<4x16xf32, #tpu.memory_space<vmem>>, vector<4x16xf32>,
    %714 = arith.index_cast %491 : i32 to index
    %c0_131 = arith.constant 0 : index
    %c0_132 = arith.constant 0 : index
    %715 = vector.load %arg8[%714, %c0_131, %c0_132] : memref<4x4x16xf32, #tpu.memory_space<vmem>>, vector<1x4x16xf32>
    %716 = vector.shape_cast %715 : vector<1x4x16xf32> to vector<4x16xf32>
    %717 = vector.shape_cast %711 : vector<4x16xf32> to vector<1x4x16xf32>
    tpu.vector_store %arg8[%714, %c0_131, %c0_132], %717 {strides = array<i32>} : memref<4x4x16xf32, #tpu.memory_space<vmem>>, vector<1x4x16xf32>,
    %c3_i32_133 = arith.constant 3 : i32
    %c1_i32_134 = arith.constant 1 : i32
    %718 = arith.muli %c3_i32_133, %c1_i32_134 : i32
    %c0_i32_135 = arith.constant 0 : i32
    %719 = arith.addi %c0_i32_135, %718 : i32
    %c0_136 = arith.constant 0 : index
    %c0_137 = arith.constant 0 : index
    %720 = vector.load %arg10[%c0_136, %c0_137] : memref<4x16xf32, #tpu.memory_space<vmem>>, vector<4x16xf32>
    %c0_138 = arith.constant 0 : index
    %c0_139 = arith.constant 0 : index
    %721 = vector.load %arg11[%c0_138, %c0_139] : memref<4x16xf32, #tpu.memory_space<vmem>>, vector<4x16xf32>
    %722 = arith.index_cast %719 : i32 to index
    %c0_140 = arith.constant 0 : index
    %c0_141 = arith.constant 0 : index
    %723 = vector.load %arg1[%722, %c0_140, %c0_141] : memref<4x4x8xf32, #tpu.memory_space<vmem>>, vector<1x4x8xf32>
    %724 = vector.shape_cast %723 : vector<1x4x8xf32> to vector<4x8xf32>
    %c0_142 = arith.constant 0 : index
    %c0_143 = arith.constant 0 : index
    %725 = vector.load %arg2[%c0_142, %c0_143] : memref<16x20xf32, #tpu.memory_space<vmem>>, vector<16x20xf32>
    %cst_144 = arith.constant dense<0.000000e+00> : vector<4x20xf32>
    %726 = tpu.matmul %720, %725, %cst_144 {dimension_numbers = #tpu.dot_dimension_numbers<[1], [0], [0], [1], [0, 0, 1, 1], [], []>} : vector<4x16xf32>, vector<16x20xf32>, vector<4x20xf32> -> vector<4x20xf32>
    %c0_145 = arith.constant 0 : index
    %c0_146 = arith.constant 0 : index
    %727 = vector.load %arg3[%c0_145, %c0_146] : memref<8x20xf32, #tpu.memory_space<vmem>>, vector<8x20xf32>
    %cst_147 = arith.constant dense<0.000000e+00> : vector<4x20xf32>
    %728 = tpu.matmul %724, %727, %cst_147 {dimension_numbers = #tpu.dot_dimension_numbers<[1], [0], [0], [1], [0, 0, 1, 1], [], []>} : vector<4x8xf32>, vector<8x20xf32>, vector<4x20xf32> -> vector<4x20xf32>
    %729 = arith.addf %726, %728 : vector<4x20xf32>
    %c0_148 = arith.constant 0 : index
    %c0_149 = arith.constant 0 : index
    %730 = vector.load %arg4[%c0_148, %c0_149] : memref<1x20xf32, #tpu.memory_space<vmem>>, vector<1x20xf32>
    %731 = vector.broadcast %730 : vector<1x20xf32> to vector<4x20xf32>
    %732 = arith.addf %729, %731 : vector<4x20xf32>
    %cst_150 = arith.constant 1.57079637 : f32
    %733 = vector.broadcast %cst_150 : f32 to vector<4x20xf32>
    %734 = arith.mulf %732, %733 : vector<4x20xf32>
    %cst_151 = arith.constant 5.000000e-01 : f32
    %735 = vector.broadcast %cst_151 : f32 to vector<4x20xf32>
    %736 = arith.mulf %734, %735 : vector<4x20xf32>
    %737 = math.cos %736 : vector<4x20xf32>
    %cst_152 = arith.constant 5.000000e-01 : f32
    %738 = vector.broadcast %cst_152 : f32 to vector<4x20xf32>
    %739 = arith.mulf %734, %738 : vector<4x20xf32>
    %740 = math.sin %739 : vector<4x20xf32>
    %741 = arith.subf %737, %740 : vector<4x20xf32>
    %cst_153 = arith.constant 0.707106769 : f32
    %742 = vector.broadcast %cst_153 : f32 to vector<4x20xf32>
    %743 = arith.mulf %741, %742 : vector<4x20xf32>
    %744 = arith.addf %737, %740 : vector<4x20xf32>
    %cst_154 = arith.constant 0.707106769 : f32
    %745 = vector.broadcast %cst_154 : f32 to vector<4x20xf32>
    %746 = arith.mulf %744, %745 : vector<4x20xf32>
    %cst_155 = arith.constant 1.000000e+00 : f32
    %747 = vector.broadcast %cst_155 : f32 to vector<4x32xf32>
    %748 = vector.extract_strided_slice %746 {offsets = [0, 0], sizes = [4, 1], strides = [1, 1]} : vector<4x20xf32> to vector<4x1xf32>
    %749 = vector.extract_strided_slice %743 {offsets = [0, 0], sizes = [4, 1], strides = [1, 1]} : vector<4x20xf32> to vector<4x1xf32>
    %750 = vector.shape_cast %748 : vector<4x1xf32> to vector<4x1xf32>
    %751 = vector.broadcast %750 : vector<4x1xf32> to vector<4x32xf32>
    %752 = vector.shape_cast %749 : vector<4x1xf32> to vector<4x1xf32>
    %753 = vector.broadcast %752 : vector<4x1xf32> to vector<4x32xf32>
    %754 = arith.select %9, %751, %753 : vector<4x32xi1>, vector<4x32xf32>
    %755 = arith.mulf %747, %754 : vector<4x32xf32>
    %756 = vector.extract_strided_slice %746 {offsets = [0, 1], sizes = [4, 1], strides = [1, 1]} : vector<4x20xf32> to vector<4x1xf32>
    %757 = vector.extract_strided_slice %743 {offsets = [0, 1], sizes = [4, 1], strides = [1, 1]} : vector<4x20xf32> to vector<4x1xf32>
    %758 = vector.shape_cast %756 : vector<4x1xf32> to vector<4x1xf32>
    %759 = vector.broadcast %758 : vector<4x1xf32> to vector<4x32xf32>
    %760 = vector.shape_cast %757 : vector<4x1xf32> to vector<4x1xf32>
    %761 = vector.broadcast %760 : vector<4x1xf32> to vector<4x32xf32>
    %762 = arith.select %15, %759, %761 : vector<4x32xi1>, vector<4x32xf32>
    %763 = arith.mulf %755, %762 : vector<4x32xf32>
    %764 = vector.extract_strided_slice %746 {offsets = [0, 2], sizes = [4, 1], strides = [1, 1]} : vector<4x20xf32> to vector<4x1xf32>
    %765 = vector.extract_strided_slice %743 {offsets = [0, 2], sizes = [4, 1], strides = [1, 1]} : vector<4x20xf32> to vector<4x1xf32>
    %766 = vector.shape_cast %764 : vector<4x1xf32> to vector<4x1xf32>
    %767 = vector.broadcast %766 : vector<4x1xf32> to vector<4x32xf32>
    %768 = vector.shape_cast %765 : vector<4x1xf32> to vector<4x1xf32>
    %769 = vector.broadcast %768 : vector<4x1xf32> to vector<4x32xf32>
    %770 = arith.select %21, %767, %769 : vector<4x32xi1>, vector<4x32xf32>
    %771 = arith.mulf %763, %770 : vector<4x32xf32>
    %772 = vector.extract_strided_slice %746 {offsets = [0, 3], sizes = [4, 1], strides = [1, 1]} : vector<4x20xf32> to vector<4x1xf32>
    %773 = vector.extract_strided_slice %743 {offsets = [0, 3], sizes = [4, 1], strides = [1, 1]} : vector<4x20xf32> to vector<4x1xf32>
    %774 = vector.shape_cast %772 : vector<4x1xf32> to vector<4x1xf32>
    %775 = vector.broadcast %774 : vector<4x1xf32> to vector<4x32xf32>
    %776 = vector.shape_cast %773 : vector<4x1xf32> to vector<4x1xf32>
    %777 = vector.broadcast %776 : vector<4x1xf32> to vector<4x32xf32>
    %778 = arith.select %27, %775, %777 : vector<4x32xi1>, vector<4x32xf32>
    %779 = arith.mulf %771, %778 : vector<4x32xf32>
    %780 = vector.extract_strided_slice %746 {offsets = [0, 4], sizes = [4, 1], strides = [1, 1]} : vector<4x20xf32> to vector<4x1xf32>
    %781 = vector.extract_strided_slice %743 {offsets = [0, 4], sizes = [4, 1], strides = [1, 1]} : vector<4x20xf32> to vector<4x1xf32>
    %782 = vector.shape_cast %780 : vector<4x1xf32> to vector<4x1xf32>
    %783 = vector.broadcast %782 : vector<4x1xf32> to vector<4x32xf32>
    %784 = vector.shape_cast %781 : vector<4x1xf32> to vector<4x1xf32>
    %785 = vector.broadcast %784 : vector<4x1xf32> to vector<4x32xf32>
    %786 = arith.select %33, %783, %785 : vector<4x32xi1>, vector<4x32xf32>
    %787 = arith.mulf %779, %786 : vector<4x32xf32>
    %cst_156 = arith.constant 1.000000e+00 : f32
    %788 = vector.broadcast %cst_156 : f32 to vector<4x32xf32>
    %789 = vector.extract_strided_slice %746 {offsets = [0, 5], sizes = [4, 1], strides = [1, 1]} : vector<4x20xf32> to vector<4x1xf32>
    %790 = vector.extract_strided_slice %743 {offsets = [0, 5], sizes = [4, 1], strides = [1, 1]} : vector<4x20xf32> to vector<4x1xf32>
    %791 = vector.shape_cast %789 : vector<4x1xf32> to vector<4x1xf32>
    %792 = vector.broadcast %791 : vector<4x1xf32> to vector<4x32xf32>
    %793 = vector.shape_cast %790 : vector<4x1xf32> to vector<4x1xf32>
    %794 = vector.broadcast %793 : vector<4x1xf32> to vector<4x32xf32>
    %795 = arith.select %9, %792, %794 : vector<4x32xi1>, vector<4x32xf32>
    %796 = arith.mulf %788, %795 : vector<4x32xf32>
    %797 = vector.extract_strided_slice %746 {offsets = [0, 6], sizes = [4, 1], strides = [1, 1]} : vector<4x20xf32> to vector<4x1xf32>
    %798 = vector.extract_strided_slice %743 {offsets = [0, 6], sizes = [4, 1], strides = [1, 1]} : vector<4x20xf32> to vector<4x1xf32>
    %799 = vector.shape_cast %797 : vector<4x1xf32> to vector<4x1xf32>
    %800 = vector.broadcast %799 : vector<4x1xf32> to vector<4x32xf32>
    %801 = vector.shape_cast %798 : vector<4x1xf32> to vector<4x1xf32>
    %802 = vector.broadcast %801 : vector<4x1xf32> to vector<4x32xf32>
    %803 = arith.select %15, %800, %802 : vector<4x32xi1>, vector<4x32xf32>
    %804 = arith.mulf %796, %803 : vector<4x32xf32>
    %805 = vector.extract_strided_slice %746 {offsets = [0, 7], sizes = [4, 1], strides = [1, 1]} : vector<4x20xf32> to vector<4x1xf32>
    %806 = vector.extract_strided_slice %743 {offsets = [0, 7], sizes = [4, 1], strides = [1, 1]} : vector<4x20xf32> to vector<4x1xf32>
    %807 = vector.shape_cast %805 : vector<4x1xf32> to vector<4x1xf32>
    %808 = vector.broadcast %807 : vector<4x1xf32> to vector<4x32xf32>
    %809 = vector.shape_cast %806 : vector<4x1xf32> to vector<4x1xf32>
    %810 = vector.broadcast %809 : vector<4x1xf32> to vector<4x32xf32>
    %811 = arith.select %21, %808, %810 : vector<4x32xi1>, vector<4x32xf32>
    %812 = arith.mulf %804, %811 : vector<4x32xf32>
    %813 = vector.extract_strided_slice %746 {offsets = [0, 8], sizes = [4, 1], strides = [1, 1]} : vector<4x20xf32> to vector<4x1xf32>
    %814 = vector.extract_strided_slice %743 {offsets = [0, 8], sizes = [4, 1], strides = [1, 1]} : vector<4x20xf32> to vector<4x1xf32>
    %815 = vector.shape_cast %813 : vector<4x1xf32> to vector<4x1xf32>
    %816 = vector.broadcast %815 : vector<4x1xf32> to vector<4x32xf32>
    %817 = vector.shape_cast %814 : vector<4x1xf32> to vector<4x1xf32>
    %818 = vector.broadcast %817 : vector<4x1xf32> to vector<4x32xf32>
    %819 = arith.select %27, %816, %818 : vector<4x32xi1>, vector<4x32xf32>
    %820 = arith.mulf %812, %819 : vector<4x32xf32>
    %821 = vector.extract_strided_slice %746 {offsets = [0, 9], sizes = [4, 1], strides = [1, 1]} : vector<4x20xf32> to vector<4x1xf32>
    %822 = vector.extract_strided_slice %743 {offsets = [0, 9], sizes = [4, 1], strides = [1, 1]} : vector<4x20xf32> to vector<4x1xf32>
    %823 = vector.shape_cast %821 : vector<4x1xf32> to vector<4x1xf32>
    %824 = vector.broadcast %823 : vector<4x1xf32> to vector<4x32xf32>
    %825 = vector.shape_cast %822 : vector<4x1xf32> to vector<4x1xf32>
    %826 = vector.broadcast %825 : vector<4x1xf32> to vector<4x32xf32>
    %827 = arith.select %33, %824, %826 : vector<4x32xi1>, vector<4x32xf32>
    %828 = arith.mulf %820, %827 : vector<4x32xf32>
    %cst_157 = arith.constant 1.000000e+00 : f32
    %829 = vector.broadcast %cst_157 : f32 to vector<4x32xf32>
    %830 = vector.extract_strided_slice %746 {offsets = [0, 10], sizes = [4, 1], strides = [1, 1]} : vector<4x20xf32> to vector<4x1xf32>
    %831 = vector.extract_strided_slice %743 {offsets = [0, 10], sizes = [4, 1], strides = [1, 1]} : vector<4x20xf32> to vector<4x1xf32>
    %832 = vector.shape_cast %830 : vector<4x1xf32> to vector<4x1xf32>
    %833 = vector.broadcast %832 : vector<4x1xf32> to vector<4x32xf32>
    %834 = vector.shape_cast %831 : vector<4x1xf32> to vector<4x1xf32>
    %835 = vector.broadcast %834 : vector<4x1xf32> to vector<4x32xf32>
    %836 = arith.select %9, %833, %835 : vector<4x32xi1>, vector<4x32xf32>
    %837 = arith.mulf %829, %836 : vector<4x32xf32>
    %838 = vector.extract_strided_slice %746 {offsets = [0, 11], sizes = [4, 1], strides = [1, 1]} : vector<4x20xf32> to vector<4x1xf32>
    %839 = vector.extract_strided_slice %743 {offsets = [0, 11], sizes = [4, 1], strides = [1, 1]} : vector<4x20xf32> to vector<4x1xf32>
    %840 = vector.shape_cast %838 : vector<4x1xf32> to vector<4x1xf32>
    %841 = vector.broadcast %840 : vector<4x1xf32> to vector<4x32xf32>
    %842 = vector.shape_cast %839 : vector<4x1xf32> to vector<4x1xf32>
    %843 = vector.broadcast %842 : vector<4x1xf32> to vector<4x32xf32>
    %844 = arith.select %15, %841, %843 : vector<4x32xi1>, vector<4x32xf32>
    %845 = arith.mulf %837, %844 : vector<4x32xf32>
    %846 = vector.extract_strided_slice %746 {offsets = [0, 12], sizes = [4, 1], strides = [1, 1]} : vector<4x20xf32> to vector<4x1xf32>
    %847 = vector.extract_strided_slice %743 {offsets = [0, 12], sizes = [4, 1], strides = [1, 1]} : vector<4x20xf32> to vector<4x1xf32>
    %848 = vector.shape_cast %846 : vector<4x1xf32> to vector<4x1xf32>
    %849 = vector.broadcast %848 : vector<4x1xf32> to vector<4x32xf32>
    %850 = vector.shape_cast %847 : vector<4x1xf32> to vector<4x1xf32>
    %851 = vector.broadcast %850 : vector<4x1xf32> to vector<4x32xf32>
    %852 = arith.select %21, %849, %851 : vector<4x32xi1>, vector<4x32xf32>
    %853 = arith.mulf %845, %852 : vector<4x32xf32>
    %854 = vector.extract_strided_slice %746 {offsets = [0, 13], sizes = [4, 1], strides = [1, 1]} : vector<4x20xf32> to vector<4x1xf32>
    %855 = vector.extract_strided_slice %743 {offsets = [0, 13], sizes = [4, 1], strides = [1, 1]} : vector<4x20xf32> to vector<4x1xf32>
    %856 = vector.shape_cast %854 : vector<4x1xf32> to vector<4x1xf32>
    %857 = vector.broadcast %856 : vector<4x1xf32> to vector<4x32xf32>
    %858 = vector.shape_cast %855 : vector<4x1xf32> to vector<4x1xf32>
    %859 = vector.broadcast %858 : vector<4x1xf32> to vector<4x32xf32>
    %860 = arith.select %27, %857, %859 : vector<4x32xi1>, vector<4x32xf32>
    %861 = arith.mulf %853, %860 : vector<4x32xf32>
    %862 = vector.extract_strided_slice %746 {offsets = [0, 14], sizes = [4, 1], strides = [1, 1]} : vector<4x20xf32> to vector<4x1xf32>
    %863 = vector.extract_strided_slice %743 {offsets = [0, 14], sizes = [4, 1], strides = [1, 1]} : vector<4x20xf32> to vector<4x1xf32>
    %864 = vector.shape_cast %862 : vector<4x1xf32> to vector<4x1xf32>
    %865 = vector.broadcast %864 : vector<4x1xf32> to vector<4x32xf32>
    %866 = vector.shape_cast %863 : vector<4x1xf32> to vector<4x1xf32>
    %867 = vector.broadcast %866 : vector<4x1xf32> to vector<4x32xf32>
    %868 = arith.select %33, %865, %867 : vector<4x32xi1>, vector<4x32xf32>
    %869 = arith.mulf %861, %868 : vector<4x32xf32>
    %cst_158 = arith.constant 1.000000e+00 : f32
    %870 = vector.broadcast %cst_158 : f32 to vector<4x32xf32>
    %871 = vector.extract_strided_slice %746 {offsets = [0, 15], sizes = [4, 1], strides = [1, 1]} : vector<4x20xf32> to vector<4x1xf32>
    %872 = vector.extract_strided_slice %743 {offsets = [0, 15], sizes = [4, 1], strides = [1, 1]} : vector<4x20xf32> to vector<4x1xf32>
    %873 = vector.shape_cast %871 : vector<4x1xf32> to vector<4x1xf32>
    %874 = vector.broadcast %873 : vector<4x1xf32> to vector<4x32xf32>
    %875 = vector.shape_cast %872 : vector<4x1xf32> to vector<4x1xf32>
    %876 = vector.broadcast %875 : vector<4x1xf32> to vector<4x32xf32>
    %877 = arith.select %9, %874, %876 : vector<4x32xi1>, vector<4x32xf32>
    %878 = arith.mulf %870, %877 : vector<4x32xf32>
    %879 = vector.extract_strided_slice %746 {offsets = [0, 16], sizes = [4, 1], strides = [1, 1]} : vector<4x20xf32> to vector<4x1xf32>
    %880 = vector.extract_strided_slice %743 {offsets = [0, 16], sizes = [4, 1], strides = [1, 1]} : vector<4x20xf32> to vector<4x1xf32>
    %881 = vector.shape_cast %879 : vector<4x1xf32> to vector<4x1xf32>
    %882 = vector.broadcast %881 : vector<4x1xf32> to vector<4x32xf32>
    %883 = vector.shape_cast %880 : vector<4x1xf32> to vector<4x1xf32>
    %884 = vector.broadcast %883 : vector<4x1xf32> to vector<4x32xf32>
    %885 = arith.select %15, %882, %884 : vector<4x32xi1>, vector<4x32xf32>
    %886 = arith.mulf %878, %885 : vector<4x32xf32>
    %887 = vector.extract_strided_slice %746 {offsets = [0, 17], sizes = [4, 1], strides = [1, 1]} : vector<4x20xf32> to vector<4x1xf32>
    %888 = vector.extract_strided_slice %743 {offsets = [0, 17], sizes = [4, 1], strides = [1, 1]} : vector<4x20xf32> to vector<4x1xf32>
    %889 = vector.shape_cast %887 : vector<4x1xf32> to vector<4x1xf32>
    %890 = vector.broadcast %889 : vector<4x1xf32> to vector<4x32xf32>
    %891 = vector.shape_cast %888 : vector<4x1xf32> to vector<4x1xf32>
    %892 = vector.broadcast %891 : vector<4x1xf32> to vector<4x32xf32>
    %893 = arith.select %21, %890, %892 : vector<4x32xi1>, vector<4x32xf32>
    %894 = arith.mulf %886, %893 : vector<4x32xf32>
    %895 = vector.extract_strided_slice %746 {offsets = [0, 18], sizes = [4, 1], strides = [1, 1]} : vector<4x20xf32> to vector<4x1xf32>
    %896 = vector.extract_strided_slice %743 {offsets = [0, 18], sizes = [4, 1], strides = [1, 1]} : vector<4x20xf32> to vector<4x1xf32>
    %897 = vector.shape_cast %895 : vector<4x1xf32> to vector<4x1xf32>
    %898 = vector.broadcast %897 : vector<4x1xf32> to vector<4x32xf32>
    %899 = vector.shape_cast %896 : vector<4x1xf32> to vector<4x1xf32>
    %900 = vector.broadcast %899 : vector<4x1xf32> to vector<4x32xf32>
    %901 = arith.select %27, %898, %900 : vector<4x32xi1>, vector<4x32xf32>
    %902 = arith.mulf %894, %901 : vector<4x32xf32>
    %903 = vector.extract_strided_slice %746 {offsets = [0, 19], sizes = [4, 1], strides = [1, 1]} : vector<4x20xf32> to vector<4x1xf32>
    %904 = vector.extract_strided_slice %743 {offsets = [0, 19], sizes = [4, 1], strides = [1, 1]} : vector<4x20xf32> to vector<4x1xf32>
    %905 = vector.shape_cast %903 : vector<4x1xf32> to vector<4x1xf32>
    %906 = vector.broadcast %905 : vector<4x1xf32> to vector<4x32xf32>
    %907 = vector.shape_cast %904 : vector<4x1xf32> to vector<4x1xf32>
    %908 = vector.broadcast %907 : vector<4x1xf32> to vector<4x32xf32>
    %909 = arith.select %33, %906, %908 : vector<4x32xi1>, vector<4x32xf32>
    %910 = arith.mulf %902, %909 : vector<4x32xf32>
    %911 = tpu.concatenate %787, %828, %869, %910 in 1 : vector<4x32xf32>, vector<4x32xf32>, vector<4x32xf32>, vector<4x32xf32> -> vector<4x128xf32>
    %c0_159 = arith.constant 0 : index
    %c0_160 = arith.constant 0 : index
    %912 = vector.load %arg5[%c0_159, %c0_160] : memref<128x256xf32, #tpu.memory_space<vmem>>, vector<128x256xf32>
    %cst_161 = arith.constant dense<0.000000e+00> : vector<4x256xf32>
    %913 = tpu.matmul %911, %912, %cst_161 {dimension_numbers = #tpu.dot_dimension_numbers<[1], [0], [0], [1], [0, 0, 1, 1], [], []>} : vector<4x128xf32>, vector<128x256xf32>, vector<4x256xf32> -> vector<4x256xf32>
    %914 = vector.extract_strided_slice %913 {offsets = [0, 0], sizes = [4, 128], strides = [1, 1]} : vector<4x256xf32> to vector<4x128xf32>
    %915 = vector.extract_strided_slice %913 {offsets = [0, 128], sizes = [4, 128], strides = [1, 1]} : vector<4x256xf32> to vector<4x128xf32>
    %916 = arith.mulf %914, %914 : vector<4x128xf32>
    %917 = arith.mulf %915, %915 : vector<4x128xf32>
    %918 = arith.addf %916, %917 : vector<4x128xf32>
    %c0_162 = arith.constant 0 : index
    %c0_163 = arith.constant 0 : index
    %919 = vector.load %arg6[%c0_162, %c0_163] : memref<128x64xf32, #tpu.memory_space<vmem>>, vector<128x64xf32>
    %cst_164 = arith.constant dense<0.000000e+00> : vector<4x64xf32>
    %920 = tpu.matmul %918, %919, %cst_164 {dimension_numbers = #tpu.dot_dimension_numbers<[1], [0], [0], [1], [0, 0, 1, 1], [], []>} : vector<4x128xf32>, vector<128x64xf32>, vector<4x64xf32> -> vector<4x64xf32>
    %c0_165 = arith.constant 0 : index
    %c0_166 = arith.constant 0 : index
    %921 = vector.load %arg7[%c0_165, %c0_166] : memref<1x64xf32, #tpu.memory_space<vmem>>, vector<1x64xf32>
    %922 = vector.broadcast %921 : vector<1x64xf32> to vector<4x64xf32>
    %923 = arith.addf %920, %922 : vector<4x64xf32>
    %924 = vector.extract_strided_slice %923 {offsets = [0, 0], sizes = [4, 48], strides = [1, 1]} : vector<4x64xf32> to vector<4x48xf32>
    %925 = arith.negf %924 : vector<4x48xf32>
    %926 = math.exp %925 : vector<4x48xf32>
    %cst_167 = arith.constant 1.000000e+00 : f32
    %927 = vector.broadcast %cst_167 : f32 to vector<4x48xf32>
    %928 = arith.addf %927, %926 : vector<4x48xf32>
    %929 = arith.divf %927, %928 : vector<4x48xf32>
    %930 = vector.extract_strided_slice %929 {offsets = [0, 0], sizes = [4, 16], strides = [1, 1]} : vector<4x48xf32> to vector<4x16xf32>
    %931 = vector.extract_strided_slice %929 {offsets = [0, 16], sizes = [4, 16], strides = [1, 1]} : vector<4x48xf32> to vector<4x16xf32>
    %932 = vector.extract_strided_slice %929 {offsets = [0, 32], sizes = [4, 16], strides = [1, 1]} : vector<4x48xf32> to vector<4x16xf32>
    %933 = vector.extract_strided_slice %923 {offsets = [0, 48], sizes = [4, 16], strides = [1, 1]} : vector<4x64xf32> to vector<4x16xf32>
    %934 = math.tanh %933 : vector<4x16xf32>
    %935 = arith.mulf %931, %721 : vector<4x16xf32>
    %936 = arith.mulf %930, %934 : vector<4x16xf32>
    %937 = arith.addf %935, %936 : vector<4x16xf32>
    %938 = math.tanh %937 : vector<4x16xf32>
    %939 = arith.mulf %932, %938 : vector<4x16xf32>
    %c0_168 = arith.constant 0 : index
    %c0_169 = arith.constant 0 : index
    %940 = vector.load %arg10[%c0_168, %c0_169] : memref<4x16xf32, #tpu.memory_space<vmem>>, vector<4x16xf32>
    tpu.vector_store %arg10[%c0_168, %c0_169], %939 {strides = array<i32>} : memref<4x16xf32, #tpu.memory_space<vmem>>, vector<4x16xf32>,
    %c0_170 = arith.constant 0 : index
    %c0_171 = arith.constant 0 : index
    %941 = vector.load %arg11[%c0_170, %c0_171] : memref<4x16xf32, #tpu.memory_space<vmem>>, vector<4x16xf32>
    tpu.vector_store %arg11[%c0_170, %c0_171], %937 {strides = array<i32>} : memref<4x16xf32, #tpu.memory_space<vmem>>, vector<4x16xf32>,
    %942 = arith.index_cast %719 : i32 to index
    %c0_172 = arith.constant 0 : index
    %c0_173 = arith.constant 0 : index
    %943 = vector.load %arg8[%942, %c0_172, %c0_173] : memref<4x4x16xf32, #tpu.memory_space<vmem>>, vector<1x4x16xf32>
    %944 = vector.shape_cast %943 : vector<1x4x16xf32> to vector<4x16xf32>
    %945 = vector.shape_cast %939 : vector<4x16xf32> to vector<1x4x16xf32>
    tpu.vector_store %arg8[%942, %c0_172, %c0_173], %945 {strides = array<i32>} : memref<4x4x16xf32, #tpu.memory_space<vmem>>, vector<1x4x16xf32>,
    %c4_i32_174 = arith.constant 4 : i32
    %c1_i32_175 = arith.constant 1 : i32
    %946 = arith.cmpi eq, %arg0, %c1_i32_175 : i32
    %947 = arith.extui %946 : i1 to i32
    %c0_i32_176 = arith.constant 0 : i32
    %948 = arith.cmpi ne, %947, %c0_i32_176 : i32
    scf.if %948 {
      %c0_177 = arith.constant 0 : index
      %c0_178 = arith.constant 0 : index
      %949 = vector.load %arg11[%c0_177, %c0_178] : memref<4x16xf32, #tpu.memory_space<vmem>>, vector<4x16xf32>
      %c0_179 = arith.constant 0 : index
      %c0_180 = arith.constant 0 : index
      %c0_181 = arith.constant 0 : index
      %950 = vector.load %arg9[%c0_179, %c0_180, %c0_181] : memref<1x4x16xf32, #tpu.memory_space<vmem>>, vector<1x4x16xf32>
      %951 = vector.shape_cast %950 : vector<1x4x16xf32> to vector<4x16xf32>
      %952 = vector.shape_cast %949 : vector<4x16xf32> to vector<1x4x16xf32>
      tpu.vector_store %arg9[%c0_179, %c0_180, %c0_181], %952 {strides = array<i32>} : memref<1x4x16xf32, #tpu.memory_space<vmem>>, vector<1x4x16xf32>,
    } else {
    }
    return
  }
  func.func @transform_0(%arg0: i32) -> (i32, i32, i32) {
    %c0_i32 = arith.constant 0 : i32
    %c0_i32_0 = arith.constant 0 : i32
    %c0_i32_1 = arith.constant 0 : i32
    return %arg0, %c0_i32, %c0_i32_0 : i32, i32, i32
  }
  func.func @transform_1(%arg0: i32) -> (i32, i32) {
    %c0_i32 = arith.constant 0 : i32
    %c0_i32_0 = arith.constant 0 : i32
    %c0_i32_1 = arith.constant 0 : i32
    return %c0_i32, %c0_i32_0 : i32, i32
  }
  func.func @transform_2(%arg0: i32) -> (i32, i32) {
    %c0_i32 = arith.constant 0 : i32
    %c0_i32_0 = arith.constant 0 : i32
    %c0_i32_1 = arith.constant 0 : i32
    return %c0_i32, %c0_i32_0 : i32, i32
  }
  func.func @transform_3(%arg0: i32) -> (i32, i32) {
    %c0_i32 = arith.constant 0 : i32
    %c0_i32_0 = arith.constant 0 : i32
    %c0_i32_1 = arith.constant 0 : i32
    return %c0_i32, %c0_i32_0 : i32, i32
  }
  func.func @transform_4(%arg0: i32) -> (i32, i32) {
    %c0_i32 = arith.constant 0 : i32
    %c0_i32_0 = arith.constant 0 : i32
    %c0_i32_1 = arith.constant 0 : i32
    return %c0_i32, %c0_i32_0 : i32, i32
  }
  func.func @transform_5(%arg0: i32) -> (i32, i32) {
    %c0_i32 = arith.constant 0 : i32
    %c0_i32_0 = arith.constant 0 : i32
    %c0_i32_1 = arith.constant 0 : i32
    return %c0_i32, %c0_i32_0 : i32, i32
  }
  func.func @transform_6(%arg0: i32) -> (i32, i32) {
    %c0_i32 = arith.constant 0 : i32
    %c0_i32_0 = arith.constant 0 : i32
    %c0_i32_1 = arith.constant 0 : i32
    return %c0_i32, %c0_i32_0 : i32, i32
  }
  func.func @transform_7(%arg0: i32) -> (i32, i32, i32) {
    %c0_i32 = arith.constant 0 : i32
    %c0_i32_0 = arith.constant 0 : i32
    %c0_i32_1 = arith.constant 0 : i32
    return %arg0, %c0_i32, %c0_i32_0 : i32, i32, i32
  }
  func.func @transform_8(%arg0: i32) -> (i32, i32, i32) {
    %c0_i32 = arith.constant 0 : i32
    %c0_i32_0 = arith.constant 0 : i32
    %c0_i32_1 = arith.constant 0 : i32
    %c0_i32_2 = arith.constant 0 : i32
    return %c0_i32, %c0_i32_0, %c0_i32_1 : i32, i32, i32
  }
}

</mosaic_0001>

<llo_original>
// kernel: tpu_custom_call.1
$region0: #{tpu_custom_call.1}
  #allocation0 [shape = 'u32[]', space=smem, size = 0x4, offset = 0x4, fixed_abs, tag = 'smem constant byte address 0x4 - core index']
  #allocation1 [shape = 'u32[144,128]{1,0:T(1,128)}', space=vmem, size = 0x12000, scoped, tag = 'internal scratch']
  #allocation2 [shape = 'f32[4,16]{1,0:T(4,128)}', space=vmem, size = 0x800, scoped, tag = 'scratch operand']
  #allocation3 [shape = 'f32[4,16]{1,0:T(4,128)}', space=vmem, size = 0x800, scoped, tag = 'scratch operand']
  %s0 = inlined_call_operand.vmem [shape: f32[8,4,8], index: 0, kind: input, shape index: {}]
  %s1 = inlined_call_operand.vmem [shape: f32[16,20], index: 1, kind: input, shape index: {}]
  %s2 = inlined_call_operand.vmem [shape: f32[8,20], index: 2, kind: input, shape index: {}]
  %s3 = inlined_call_operand.vmem [shape: f32[1,20], index: 3, kind: input, shape index: {}]
  %s4 = inlined_call_operand.hbm [shape: f32[128,256], index: 4, kind: input, shape index: {}]
  %s5 = inlined_call_operand.vmem [shape: f32[128,64], index: 5, kind: input, shape index: {}]
  %s6 = inlined_call_operand.vmem [shape: f32[1,64], index: 6, kind: input, shape index: {}]
  %s7 = inlined_call_operand.hbm [shape: f32[8,4,16], index: 7, kind: output, shape index: {0}]
  %s8 = inlined_call_operand.hbm [shape: f32[1,4,16], index: 8, kind: output, shape index: {1}]
  %9 = xla_tuple %s7, %s8
  %s10 = sld [smem:[#allocation0]]
  $region81: #{tpu_custom_call.1} parent=0
    _
  %s12 = ssub.s32 1, %s10
  %s13 = scalar_select 0, %s12, %s10
  $region1: #{tpu_custom_call.1} parent=0
    #allocation4 [shape = 'u8[131072]{0}', space=vmem, size = 0x20000, scoped, tag = 'input window, operand 4, single buffered']
    #allocation5 [shape = 's32[2]{0}', space=sflag, size = 0x8, scoped, tag = 'scoped memory for tpu_custom_call.1']
    #allocation6 [shape = 's32[2]{0}', space=sflag, size = 0x8, scoped, tag = 'scoped memory for tpu_custom_call.1']
    #allocation7 [shape = 'u8[16384]{0}', space=vmem, size = 0x4000, scoped, tag = 'output window, operand 0']
    #allocation8 [shape = 'u8[2048]{0}', space=vmem, size = 0x800, scoped, tag = 'output window, operand 1, single buffered']
    #allocation9 [shape = 's32[1]{0}', space=sflag, size = 0x4, scoped, tag = 'scoped memory for tpu_custom_call.1']
    %14 = vsyncpa [#allocation5], 0
    %15 = vsyncpa [#allocation6], 0
    %s16 = scalar_lea.sflag [#allocation6], 1
    %17 = vsyncpa %s16, 0
    %18 = vsyncpa [#allocation9], 0
    loop: start=0, step=1, limit=4
    $region2: #{tpu_custom_call.1} parent=1 // loop_pre_header
      _
    $region3: #{tpu_custom_call.1} parent=1 // loop_header
      %s20 = sphi 0, %s24
      %p21 = scmp.ge.s32.totalorder %s20, 4
      %s30 = sphi 0, %s32
      %s33 = sphi 0, %s30
      %s34 = sphi 0, %s33
      %s50 = sphi 0, %s34
      %s54 = sphi 0, %s54
      %s56 = sphi 0, %s54
      %s57 = sphi 0, %s56
      %s71 = sphi 0, %s57
      %s75 = sphi 0, %s75
      %s77 = sphi 0, %s75
      %s78 = sphi 0, %s77
      %s92 = sphi 0, %s78
      %s96 = sphi 0, %s96
      %s98 = sphi 0, %s96
      %s99 = sphi 0, %s98
      %s113 = sphi 0, %s99
      %s117 = sphi 0, %s117
      %s119 = sphi 0, %s117
      %s120 = sphi 0, %s119
      %s134 = sphi 0, %s120
      %s138 = sphi 0, %s138
      %s140 = sphi 0, %s138
      %s141 = sphi 0, %s140
      %s155 = sphi 0, %s141
      %s159 = sphi 0, %s159
      %s161 = sphi 0, %s159
      %s162 = sphi 0, %s161
      %s176 = sphi 0, %s162
      %s182 = sphi 0, %s184
      %s185 = sphi 0, %s182
      %s186 = sphi 0, %s185
      %s202 = sphi 0, %s186
      %s206 = sphi 0, %s206
      %s208 = sphi 0, %s206
      %s209 = sphi 0, %s208
      %s223 = sphi 0, %s209
    $region4: #{tpu_custom_call.1} parent=1 // loop_header_branch
      %23 = sbr.rel (%p21) target = $region8
    $region5: #{tpu_custom_call.1} parent=1 // loop_body
      %s25 = ssub.s32 %s20, 1
      %s26 = ssub.s32 %s20, 2
      %s27 = sadd.s32 %s20, 1
      %s28 = ssub.s32 %s20, %s27
      %p29 = scmp.eq.s32.totalorder %s28, 0
      %s31 = sadd.s32 %s30, 1
      %s32 = scalar_select %p29, %s30, %s31
      %p35 = pneg %p29
      %p36 = scmp.eq.s32.totalorder %s20, 1
      %p37 = por %p35, %p36
      %p38 = scmp.ne.s32.totalorder %s30, %s33
      %p39 = scmp.eq.s32.totalorder %s20, 0
      %p40 = por %p38, %p39
      %p41 = scmp.ne.s32.totalorder %s30, %s33
      %p42 = scmp.eq.s32.totalorder %s25, 1
      %p43 = por %p41, %p42
      %p44 = scmp.ne.s32.totalorder %s33, %s34
      %p45 = scmp.eq.s32.totalorder %s25, 0
      %p46 = por %p44, %p45
      %p47 = scmp.ne.s32.totalorder %s33, %s34
      %p48 = scmp.eq.s32.totalorder %s26, 1
      %p49 = por %p47, %p48
      %p51 = scmp.ne.s32.totalorder %s34, %s50
      %p52 = scmp.eq.s32.totalorder %s26, 0
      %p53 = por %p51, %p52
      %s55 = sadd.s32 %s54, 1
      %p58 = scmp.eq.s32.totalorder %s20, 1
      %p59 = scmp.ne.s32.totalorder %s54, %s56
      %p60 = scmp.eq.s32.totalorder %s20, 0
      %p61 = por %p59, %p60
      %p62 = scmp.ne.s32.totalorder %s54, %s56
      %p63 = scmp.eq.s32.totalorder %s25, 1
      %p64 = por %p62, %p63
      %p65 = scmp.ne.s32.totalorder %s56, %s57
      %p66 = scmp.eq.s32.totalorder %s25, 0
      %p67 = por %p65, %p66
      %p68 = scmp.ne.s32.totalorder %s56, %s57
      %p69 = scmp.eq.s32.totalorder %s26, 1
      %p70 = por %p68, %p69
      %p72 = scmp.ne.s32.totalorder %s57, %s71
      %p73 = scmp.eq.s32.totalorder %s26, 0
      %p74 = por %p72, %p73
      %s76 = sadd.s32 %s75, 1
      %p79 = scmp.eq.s32.totalorder %s20, 1
      %p80 = scmp.ne.s32.totalorder %s75, %s77
      %p81 = scmp.eq.s32.totalorder %s20, 0
      %p82 = por %p80, %p81
      %p83 = scmp.ne.s32.totalorder %s75, %s77
      %p84 = scmp.eq.s32.totalorder %s25, 1
      %p85 = por %p83, %p84
      %p86 = scmp.ne.s32.totalorder %s77, %s78
      %p87 = scmp.eq.s32.totalorder %s25, 0
      %p88 = por %p86, %p87
      %p89 = scmp.ne.s32.totalorder %s77, %s78
      %p90 = scmp.eq.s32.totalorder %s26, 1
      %p91 = por %p89, %p90
      %p93 = scmp.ne.s32.totalorder %s78, %s92
      %p94 = scmp.eq.s32.totalorder %s26, 0
      %p95 = por %p93, %p94
      %s97 = sadd.s32 %s96, 1
      %p100 = scmp.eq.s32.totalorder %s20, 1
      %p101 = scmp.ne.s32.totalorder %s96, %s98
      %p102 = scmp.eq.s32.totalorder %s20, 0
      %p103 = por %p101, %p102
      %p104 = scmp.ne.s32.totalorder %s96, %s98
      %p105 = scmp.eq.s32.totalorder %s25, 1
      %p106 = por %p104, %p105
      %p107 = scmp.ne.s32.totalorder %s98, %s99
      %p108 = scmp.eq.s32.totalorder %s25, 0
      %p109 = por %p107, %p108
      %p110 = scmp.ne.s32.totalorder %s98, %s99
      %p111 = scmp.eq.s32.totalorder %s26, 1
      %p112 = por %p110, %p111
      %p114 = scmp.ne.s32.totalorder %s99, %s113
      %p115 = scmp.eq.s32.totalorder %s26, 0
      %p116 = por %p114, %p115
      %s118 = sadd.s32 %s117, 1
      %p121 = scmp.eq.s32.totalorder %s20, 1
      %p122 = scmp.ne.s32.totalorder %s117, %s119
      %p123 = scmp.eq.s32.totalorder %s20, 0
      %p124 = por %p122, %p123
      %p125 = scmp.ne.s32.totalorder %s117, %s119
      %p126 = scmp.eq.s32.totalorder %s25, 1
      %p127 = por %p125, %p126
      %p128 = scmp.ne.s32.totalorder %s119, %s120
      %p129 = scmp.eq.s32.totalorder %s25, 0
      %p130 = por %p128, %p129
      %p131 = scmp.ne.s32.totalorder %s119, %s120
      %p132 = scmp.eq.s32.totalorder %s26, 1
      %p133 = por %p131, %p132
      %p135 = scmp.ne.s32.totalorder %s120, %s134
      %p136 = scmp.eq.s32.totalorder %s26, 0
      %p137 = por %p135, %p136
      %s139 = sadd.s32 %s138, 1
      %p142 = scmp.eq.s32.totalorder %s20, 1
      %p143 = scmp.ne.s32.totalorder %s138, %s140
      %p144 = scmp.eq.s32.totalorder %s20, 0
      %p145 = por %p143, %p144
      %p146 = scmp.ne.s32.totalorder %s138, %s140
      %p147 = scmp.eq.s32.totalorder %s25, 1
      %p148 = por %p146, %p147
      %p149 = scmp.ne.s32.totalorder %s140, %s141
      %p150 = scmp.eq.s32.totalorder %s25, 0
      %p151 = por %p149, %p150
      %p152 = scmp.ne.s32.totalorder %s140, %s141
      %p153 = scmp.eq.s32.totalorder %s26, 1
      %p154 = por %p152, %p153
      %p156 = scmp.ne.s32.totalorder %s141, %s155
      %p157 = scmp.eq.s32.totalorder %s26, 0
      %p158 = por %p156, %p157
      %s160 = sadd.s32 %s159, 1
      %p163 = scmp.eq.s32.totalorder %s20, 1
      %p164 = scmp.ne.s32.totalorder %s159, %s161
      %p165 = scmp.eq.s32.totalorder %s20, 0
      %p166 = por %p164, %p165
      %p167 = scmp.ne.s32.totalorder %s159, %s161
      %p168 = scmp.eq.s32.totalorder %s25, 1
      %p169 = por %p167, %p168
      %p170 = scmp.ne.s32.totalorder %s161, %s162
      %p171 = scmp.eq.s32.totalorder %s25, 0
      %p172 = por %p170, %p171
      %p173 = scmp.ne.s32.totalorder %s161, %s162
      %p174 = scmp.eq.s32.totalorder %s26, 1
      %p175 = por %p173, %p174
      %p177 = scmp.ne.s32.totalorder %s162, %s176
      %p178 = scmp.eq.s32.totalorder %s26, 0
      %p179 = por %p177, %p178
      %s180 = ssub.s32 %s20, %s27
      %p181 = scmp.eq.s32.totalorder %s180, 0
      %s183 = sadd.s32 %s182, 1
      %s184 = scalar_select %p181, %s182, %s183
      %p187 = pneg %p181
      %p188 = scmp.eq.s32.totalorder %s20, 1
      %p189 = por %p187, %p188
      %p190 = scmp.ne.s32.totalorder %s182, %s185
      %p191 = scmp.eq.s32.totalorder %s20, 0
      %p192 = por %p190, %p191
      %p193 = scmp.ne.s32.totalorder %s182, %s185
      %p194 = scmp.eq.s32.totalorder %s25, 1
      %p195 = por %p193, %p194
      %p196 = scmp.ne.s32.totalorder %s185, %s186
      %p197 = scmp.eq.s32.totalorder %s25, 0
      %p198 = por %p196, %p197
      %p199 = scmp.ne.s32.totalorder %s185, %s186
      %p200 = scmp.eq.s32.totalorder %s26, 1
      %p201 = por %p199, %p200
      %p203 = scmp.ne.s32.totalorder %s186, %s202
      %p204 = scmp.eq.s32.totalorder %s26, 0
      %p205 = por %p203, %p204
      %s207 = sadd.s32 %s206, 1
      %p210 = scmp.eq.s32.totalorder %s20, 1
      %p211 = scmp.ne.s32.totalorder %s206, %s208
      %p212 = scmp.eq.s32.totalorder %s20, 0
      %p213 = por %p211, %p212
      %p214 = scmp.ne.s32.totalorder %s206, %s208
      %p215 = scmp.eq.s32.totalorder %s25, 1
      %p216 = por %p214, %p215
      %p217 = scmp.ne.s32.totalorder %s208, %s209
      %p218 = scmp.eq.s32.totalorder %s25, 0
      %p219 = por %p217, %p218
      %p220 = scmp.ne.s32.totalorder %s208, %s209
      %p221 = scmp.eq.s32.totalorder %s26, 1
      %p222 = por %p220, %p221
      %p224 = scmp.ne.s32.totalorder %s209, %s223
      %p225 = scmp.eq.s32.totalorder %s26, 0
      %p226 = por %p224, %p225
      %p227 = scmp.le.s32.totalorder 1, %s20
      %p228 = scmp.lt.s32.totalorder %s20, 3
      %p229 = pnand %p227, %p228
      %p230 = pneg %p229
      // Predicated region
      $region9: #{tpu_custom_call.1} parent=5 // pred_check
        _
      $region10: #{tpu_custom_call.1} parent=5 // pred_check_branch
        %232 = sbr.rel (%p229) target = $region12
      $region11: #{tpu_custom_call.1} parent=5 // pred_region
        %s233 = ssub.s32 %s20, 1
        // Predicated region
        $region13: #{tpu_custom_call.1} parent=11 // pred_check
          %p234 = pneg %p67
        $region14: #{tpu_custom_call.1} parent=11 // pred_check_branch
          %236 = sbr.rel (%p234) target = $region16
        $region15: #{tpu_custom_call.1} parent=11 // pred_region
          _
        $region16: #{tpu_custom_call.1} parent=11 // pred_fallthru
          _
        // Predicated region
        $region17: #{tpu_custom_call.1} parent=11 // pred_check
          %p237 = pneg %p88
        $region18: #{tpu_custom_call.1} parent=11 // pred_check_branch
          %239 = sbr.rel (%p237) target = $region20
        $region19: #{tpu_custom_call.1} parent=11 // pred_region
          _
        $region20: #{tpu_custom_call.1} parent=11 // pred_fallthru
          _
        // Predicated region
        $region21: #{tpu_custom_call.1} parent=11 // pred_check
          %p240 = pneg %p109
        $region22: #{tpu_custom_call.1} parent=11 // pred_check_branch
          %242 = sbr.rel (%p240) target = $region24
        $region23: #{tpu_custom_call.1} parent=11 // pred_region
          _
        $region24: #{tpu_custom_call.1} parent=11 // pred_fallthru
          _
        // Predicated region
        $region25: #{tpu_custom_call.1} parent=11 // pred_check
          %p243 = pneg %p130
        $region26: #{tpu_custom_call.1} parent=11 // pred_check_branch
          %245 = sbr.rel (%p243) target = $region28
        $region27: #{tpu_custom_call.1} parent=11 // pred_region
          %s247 = ssub.s32 4096, 4096
          %248 = vsyncadd [#allocation5], %s247
          %s249 = sshll.u32 [#allocation4], 4
          %s250 = int_to_ptr.vmem [resolvable:$true] %s249
          %255 = dma.hbm_to_vmem [thread:$0]  %s4, 4096, %s250, [#allocation5], 256, 256, 16
        $region28: #{tpu_custom_call.1} parent=11 // pred_fallthru
          _
        // Predicated region
        $region29: #{tpu_custom_call.1} parent=11 // pred_check
          %p256 = pneg %p151
        $region30: #{tpu_custom_call.1} parent=11 // pred_check_branch
          %258 = sbr.rel (%p256) target = $region32
        $region31: #{tpu_custom_call.1} parent=11 // pred_region
          _
        $region32: #{tpu_custom_call.1} parent=11 // pred_fallthru
          _
        // Predicated region
        $region33: #{tpu_custom_call.1} parent=11 // pred_check
          %p259 = pneg %p172
        $region34: #{tpu_custom_call.1} parent=11 // pred_check_branch
          %261 = sbr.rel (%p259) target = $region36
        $region35: #{tpu_custom_call.1} parent=11 // pred_region
          _
        $region36: #{tpu_custom_call.1} parent=11 // pred_fallthru
          _
      $region12: #{tpu_custom_call.1} parent=5 // pred_fallthru
        _
      %p262 = scmp.lt.s32.totalorder %s20, 2
      // Predicated region
      $region37: #{tpu_custom_call.1} parent=5 // pred_check
        %p263 = pneg %p262
      $region38: #{tpu_custom_call.1} parent=5 // pred_check_branch
        %265 = sbr.rel (%p263) target = $region40
      $region39: #{tpu_custom_call.1} parent=5 // pred_region
        // Predicated region
        $region41: #{tpu_custom_call.1} parent=39 // pred_check
          %p266 = pneg %p40
        $region42: #{tpu_custom_call.1} parent=39 // pred_check_branch
          %268 = sbr.rel (%p266) target = $region44
        $region43: #{tpu_custom_call.1} parent=39 // pred_region
          %s269 = smul.u32 4, %s20
          %p270 = scmp.lt.s32.totalorder %s269, 7
          %s271 = scalar_select %p270, %s269, 7
          %s272 = smul.addr %s271, 4
          %s273 = scalar_lea.vmem %s0, %s272
          %s274 = smul.u32 4, %s20
        $region44: #{tpu_custom_call.1} parent=39 // pred_fallthru
          _
      $region40: #{tpu_custom_call.1} parent=5 // pred_fallthru
        _
      %p275 = scmp.le.s32.totalorder 1, %s20
      %p276 = scmp.lt.s32.totalorder %s20, 3
      %p277 = pnand %p275, %p276
      %p278 = pneg %p277
      // Predicated region
      $region45: #{tpu_custom_call.1} parent=5 // pred_check
        _
      $region46: #{tpu_custom_call.1} parent=5 // pred_check_branch
        %280 = sbr.rel (%p277) target = $region48
      $region47: #{tpu_custom_call.1} parent=5 // pred_region
        %s281 = ssub.s32 %s20, 1
        // Predicated region
        $region49: #{tpu_custom_call.1} parent=47 // pred_check
          %p282 = pneg %p130
        $region50: #{tpu_custom_call.1} parent=47 // pred_check_branch
          %284 = sbr.rel (%p282) target = $region52
        $region51: #{tpu_custom_call.1} parent=47 // pred_region
          %285 = dma.done [#allocation5], 4096
        $region52: #{tpu_custom_call.1} parent=47 // pred_fallthru
          _
        %s286 = smul.u32 4, %s25
        %p287 = scmp.lt.s32.totalorder %s286, 7
        %s288 = scalar_select %p287, %s286, 7
        %s289 = smul.addr %s288, 4
        %s290 = scalar_lea.vmem %s0, %s289
        %p291 = pneg %p46
        %p292 = pneg %p43
        %p293 = pneg %p67
        %p294 = pneg %p64
        %p295 = pneg %p88
        %p296 = pneg %p85
        %p297 = pneg %p109
        %p298 = pneg %p106
        %p299 = pneg %p130
        %p300 = pneg %p127
        %p301 = pneg %p151
        %p302 = pneg %p148
        %p303 = pneg %p172
        %p304 = pneg %p169
        %p305 = pneg %p198
        %p306 = pneg %p195
        %s307 = sand.u32 %s185, 1
        %s308 = scalar_lea.sflag [#allocation6], %s307
        %s309 = sand.u32 %s185, 1
        %s310 = smul.addr %s309, 16
        %s311 = scalar_lea.vmem [#allocation7], %s310
        %p312 = pneg %p219
        %p313 = pneg %p216
        %s314 = smul.u32 4, %s25
        %p315 = scmp.lt.s32.totalorder %s314, 7
        %s316 = scalar_select %p315, %s314, 7
        %s317 = smul.addr %s316, 4
        %s318 = scalar_lea.vmem %s0, %s317
        %s319 = smul.u32 4, %s25
        %s320 = smul.u32 4, %s25
        %p321 = scmp.eq.s32.totalorder %s25, 0
        // Predicated region
        $region53: #{tpu_custom_call.1} parent=47 // pred_check
          %p322 = pneg %p321
        $region54: #{tpu_custom_call.1} parent=47 // pred_check_branch
          %324 = sbr.rel (%p322) target = $region56
        $region55: #{tpu_custom_call.1} parent=47 // pred_region
          %vm325 = vcmask 125952
          %326 = vst.msk [vmem:[#allocation2] sm:$0xf] %vm325, 0.0
          %327 = vst.msk [vmem:[#allocation3] sm:$0xf] %vm325, 0.0
        $region56: #{tpu_custom_call.1} parent=47 // pred_fallthru
          _
        %v328 = vlaneseq
        %v329 = vand.u32 %v328, 127
        %v330 = vand.u32 %v329, 1
        %vm331 = vcmp.eq.s32.totalorder %v330, 1
        %v332 = vshra.s32 %v329, 1
        %v333 = vand.u32 %v332, 1
        %vm334 = vcmp.eq.s32.totalorder %v333, 1
        %v335 = vshra.s32 %v329, 2
        %v336 = vand.u32 %v335, 1
        %vm337 = vcmp.eq.s32.totalorder %v336, 1
        %v338 = vshra.s32 %v329, 3
        %v339 = vand.u32 %v338, 1
        %vm340 = vcmp.eq.s32.totalorder %v339, 1
        %v341 = vshra.s32 %v329, 4
        %v342 = vand.u32 %v341, 1
        %vm343 = vcmp.eq.s32.totalorder %v342, 1
        %v344 = vld [vmem:[#allocation2] sm:$0xf]
        %v345 = vld [vmem:[#allocation3] sm:$0xf]
        %v346 = vld [vmem:[%s318] sm:$0xf]
        %v347 = vld [vmem:[%s1] sm:$0xff]
        %v348 = vld [vmem:[%s1 + $0x8] sm:$0xff]
        %v349 = vld [vmem:[%s2] sm:$0xff]
        %vm350 = vcmask 64512
        %v352 = vsel %vm350, %v346, 0
        %354 = vmatprep.subr.mxu0 0.0
        %355 = vmatpush1.msra.mxu0 %v349
        %356 = vmatprep.subr.mxu0 0.0
        %357 = vmatpush1.msra.mxu0 0.0
        %358 = vmatprep.subr.mxu0 0.0
        %359 = vmatpush1.msra.mxu0 0.0
        %360 = vmatprep.subr.mxu0 0.0
        %361 = vmatpush1.msra.mxu0 0.0
        %362 = vmatprep.subr.mxu0 0.0
        %363 = vmatpush1.msra.mxu0 0.0
        %364 = vmatprep.subr.mxu0 0.0
        %365 = vmatpush1.msra.mxu0 0.0
        %366 = vmatprep.subr.mxu0 0.0
        %367 = vmatpush1.msra.mxu0 0.0
        %368 = vmatprep.subr.mxu0 0.0
        %369 = vmatpush1.msra.mxu0 0.0
        %370 = vmatprep.subr.mxu0 0.0
        %371 = vmatpush1.msra.mxu0 0.0
        %372 = vmatprep.subr.mxu0 0.0
        %373 = vmatpush1.msra.mxu0 0.0
        %374 = vmatprep.subr.mxu0 0.0
        %375 = vmatpush1.msra.mxu0 0.0
        %376 = vmatprep.subr.mxu0 0.0
        %377 = vmatpush1.msra.mxu0 0.0
        %378 = vmatprep.subr.mxu0 0.0
        %379 = vmatpush1.msra.mxu0 0.0
        %380 = vmatprep.subr.mxu0 0.0
        %381 = vmatpush1.msra.mxu0 0.0
        %382 = vmatprep.subr.mxu0 0.0
        %383 = vmatpush1.msra.mxu0 0.0
        %384 = vmatprep.subr.mxu0 0.0
        %385 = vmatpush1.msra.mxu0 0.0
        %386 = vmatprep.subr.mxu0 0.0
        %387 = vmatpush1.msra.mxu0 0.0
        %388 = vmatprep.subr.mxu0 0.0
        %389 = vmatpush1.msra.mxu0 0.0
        %390 = vmatprep.subr.mxu0 0.0
        %391 = vmatpush1.msra.mxu0 0.0
        %392 = vmatprep.subr.mxu0 0.0
        %393 = vmatpush1.msra.mxu0 0.0
        %394 = vmatprep.subr.mxu0 0.0
        %395 = vmatpush1.msra.mxu0 0.0
        %396 = vmatprep.subr.mxu0 0.0
        %397 = vmatpush1.msra.mxu0 0.0
        %398 = vmatprep.subr.mxu0 0.0
        %399 = vmatpush1.msra.mxu0 0.0
        %400 = vmatprep.subr.mxu0 0.0
        %401 = vmatpush1.msra.mxu0 0.0
        %402 = vmatprep.subr.mxu0 0.0
        %403 = vmatpush1.msra.mxu0 0.0
        %404 = vmatprep.subr.mxu0 0.0
        %405 = vmatpush1.msra.mxu0 0.0
        %406 = vmatprep.subr.mxu0 0.0
        %407 = vmatpush1.msra.mxu0 0.0
        %408 = vmatprep.subr.mxu0 0.0
        %409 = vmatpush1.msra.mxu0 0.0
        %410 = vmatprep.subr.mxu0 0.0
        %411 = vmatpush1.msra.mxu0 0.0
        %412 = vmatprep.subr.mxu0 0.0
        %413 = vmatpush1.msra.mxu0 0.0
        %414 = vmatprep.subr.mxu0 0.0
        %415 = vmatpush1.msra.mxu0 0.0
        %416 = vmatprep.subr.mxu0 0.0
        %417 = vmatpush1.msra.mxu0 0.0
        %418 = vmatprep.mubr.f32.mxu0 0.0
        %419 = vmatmul.mubr.f32.gmra.mrb[0].mxu0 %v352
        %v420 = vpop.f32.mrb[0].mxu0
        %v421 = vadd.f32 0.0, %v420
        %v422 = vpop.f32.mrb[0].mxu0
        %423 = vdwg.mxu0
        %vm424 = vcmask 130048
        %v426 = vsel %vm424, %v344, 0
        %428 = vmatprep.subr.mxu0 0.0
        %429 = vmatpush1.msra.mxu0 %v347
        %430 = vmatprep.subr.mxu0 0.0
        %431 = vmatpush1.msra.mxu0 %v348
        %432 = vmatprep.subr.mxu0 0.0
        %433 = vmatpush1.msra.mxu0 0.0
        %434 = vmatprep.subr.mxu0 0.0
        %435 = vmatpush1.msra.mxu0 0.0
        %436 = vmatprep.subr.mxu0 0.0
        %437 = vmatpush1.msra.mxu0 0.0
        %438 = vmatprep.subr.mxu0 0.0
        %439 = vmatpush1.msra.mxu0 0.0
        %440 = vmatprep.subr.mxu0 0.0
        %441 = vmatpush1.msra.mxu0 0.0
        %442 = vmatprep.subr.mxu0 0.0
        %443 = vmatpush1.msra.mxu0 0.0
        %444 = vmatprep.subr.mxu0 0.0
        %445 = vmatpush1.msra.mxu0 0.0
        %446 = vmatprep.subr.mxu0 0.0
        %447 = vmatpush1.msra.mxu0 0.0
        %448 = vmatprep.subr.mxu0 0.0
        %449 = vmatpush1.msra.mxu0 0.0
        %450 = vmatprep.subr.mxu0 0.0
        %451 = vmatpush1.msra.mxu0 0.0
        %452 = vmatprep.subr.mxu0 0.0
        %453 = vmatpush1.msra.mxu0 0.0
        %454 = vmatprep.subr.mxu0 0.0
        %455 = vmatpush1.msra.mxu0 0.0
        %456 = vmatprep.subr.mxu0 0.0
        %457 = vmatpush1.msra.mxu0 0.0
        %458 = vmatprep.subr.mxu0 0.0
        %459 = vmatpush1.msra.mxu0 0.0
        %460 = vmatprep.subr.mxu0 0.0
        %461 = vmatpush1.msra.mxu0 0.0
        %462 = vmatprep.subr.mxu0 0.0
        %463 = vmatpush1.msra.mxu0 0.0
        %464 = vmatprep.subr.mxu0 0.0
        %465 = vmatpush1.msra.mxu0 0.0
        %466 = vmatprep.subr.mxu0 0.0
        %467 = vmatpush1.msra.mxu0 0.0
        %468 = vmatprep.subr.mxu0 0.0
        %469 = vmatpush1.msra.mxu0 0.0
        %470 = vmatprep.subr.mxu0 0.0
        %471 = vmatpush1.msra.mxu0 0.0
        %472 = vmatprep.subr.mxu0 0.0
        %473 = vmatpush1.msra.mxu0 0.0
        %474 = vmatprep.subr.mxu0 0.0
        %475 = vmatpush1.msra.mxu0 0.0
        %476 = vmatprep.subr.mxu0 0.0
        %477 = vmatpush1.msra.mxu0 0.0
        %478 = vmatprep.subr.mxu0 0.0
        %479 = vmatpush1.msra.mxu0 0.0
        %480 = vmatprep.subr.mxu0 0.0
        %481 = vmatpush1.msra.mxu0 0.0
        %482 = vmatprep.subr.mxu0 0.0
        %483 = vmatpush1.msra.mxu0 0.0
        %484 = vmatprep.subr.mxu0 0.0
        %485 = vmatpush1.msra.mxu0 0.0
        %486 = vmatprep.subr.mxu0 0.0
        %487 = vmatpush1.msra.mxu0 0.0
        %488 = vmatprep.subr.mxu0 0.0
        %489 = vmatpush1.msra.mxu0 0.0
        %490 = vmatprep.subr.mxu0 0.0
        %491 = vmatpush1.msra.mxu0 0.0
        %492 = vmatprep.mubr.f32.mxu0 0.0
        %493 = vmatmul.mubr.f32.gmra.mrb[0].mxu0 %v426
        %v494 = vpop.f32.mrb[0].mxu0
        %v495 = vadd.f32 %v421, %v494
        %v496 = vpop.f32.mrb[0].mxu0
        %497 = vdwg.mxu0
        %v498 = vld [vmem:[%s3] sm:$0x1]
        %v500 = vlaneseq
        %v501 = vshrl.u32 %v500, 7
        %v502 = vsub.s32 0, %v501
        %v503 = vrot.slane %v498, %v502
        %v505 = vadd.f32 %v495, %v503
        %v506 = vmul.f32 %v505, 1.5707964
        %v507 = vmul.f32 %v506, 0.5
        %v508 = vand.u32 2147483647, %v507
        %vm509 = vcmp.le.f32.partialorder %v508, 0.7853982
        %vm510 = vcmp.lt.s32.totalorder %v507, 0
        %v511 = vand.u32 %v507, 2139095040
        %v512 = vshrl.u32 %v511, 23
        %v513 = vsub.s32 %v512, 127
        %v514 = vand.u32 2147483647, %v507
        %v515 = vand.u32 %v514, 8388607
        %v516 = vor.u32 %v515, 8388608
        %v517 = vsub.s32 0, %v516
        %v518 = vadd.s32 %v513, 1
        %vm519 = vcmp.gt.s32.totalorder %v518, 0
        %v520 = vsel %vm519, %v518, 0
        %v521 = vshrl.u32 %v520, 5
        %v522 = vand.u32 %v520, 31
        %v523 = vsub.s32 32, %v522
        %v524 = vshrl.u32 683565275, %v523
        %v525 = vshll.u32 683565275, %v522
        %v526 = vshrl.u32 2475754826, %v523
        %v527 = vor.u32 %v525, %v526
        %v528 = vshll.u32 2475754826, %v522
        %v529 = vshrl.u32 2131351028, %v523
        %v530 = vor.u32 %v528, %v529
        %v531 = vshll.u32 2131351028, %v522
        %v532 = vshrl.u32 2102212464, %v523
        %v533 = vor.u32 %v531, %v532
        %v534 = vshll.u32 2102212464, %v522
        %v535 = vshrl.u32 920167782, %v523
        %v536 = vor.u32 %v534, %v535
        %v537 = vshll.u32 920167782, %v522
        %v538 = vshrl.u32 1326507024, %v523
        %v539 = vor.u32 %v537, %v538
        %vm540 = vcmp.lt.s32.totalorder %v521, 1
        %vm541 = vcmp.lt.s32.totalorder %v521, 2
        %vm542 = vcmp.lt.s32.totalorder %v521, 3
        %vm543 = vcmp.lt.s32.totalorder %v521, 4
        %v544 = vsel %vm540, %v524, %v527
        %v545 = vsel %vm543, %v533, 2102212464
        %v546 = vsel %vm542, %v530, %v545
        %v547 = vsel %vm541, %v544, %v546
        %v548 = vsel %vm540, %v527, %v530
        %v549 = vsel %vm543, %v536, 920167782
        %v550 = vsel %vm542, %v533, %v549
        %v551 = vsel %vm541, %v548, %v550
        %v552 = vsel %vm540, %v530, %v533
        %v553 = vsel %vm543, %v539, 1326507024
        %v554 = vsel %vm542, %v536, %v553
        %v555 = vsel %vm541, %v552, %v554
        %v556 = vshll.u32 %v516, 8
        %v557 = vmul.u32.u64.compose %v556, %v555
        %v558 = vextract.low.u32 %v557
        %v559 = vextract.high.u32 %v557
        %v560 = vmul.u32.u64.compose %v556, %v551
        %v561 = vextract.low.u32 %v560
        %v562 = vextract.high.u32 %v560
        %v563 = vmul.u32 %v556, %v547
        %v564 = vadd.s32 %v559, %v561
        %vm565 = vc.u32 %v559, %v561
        %v566 = vadd.s32 %v562, 1
        %v567 = vsel %vm565, %v566, %v562
        %v568 = vadd.s32 %v563, %v567
        %v569 = vadd.s32 %v568, 536870912
        %v570 = vshrl.u32 %v569, 30
        %v571 = vshll.u32 %v570, 30
        %v572 = vsub.s32 %v568, %v571
        %vm573 = vcmp.lt.s32.totalorder %v572, 0
        %v574 = vsub.s32 0, %v572
        %v575 = vsel %vm573, %v574, %v572
        %v576 = vclz %v575
        %v577 = vsub.s32 %v576, 2
        %vm578 = vcmp.gt.s32.totalorder 0, %v577
        %v579 = vsel %vm578, 0, %v577
        %v580 = vsub.s32 32, %v579
        %v581 = vshll.u32 %v572, %v579
        %v582 = vshrl.u32 %v564, %v580
        %v583 = vor.u32 %v581, %v582
        %v584 = vsub.s32 4294967266, %v579
        %v585 = vadd.s32 %v584, 127
        %v586 = vshll.u32 %v585, 23
        %v587 = vor.u32 4788187, %v586
        %v588 = vand.u32 2147483647, %v587
        %v590 = vcvt.s32.f32 %v583
        %v591 = vmul.f32 %v590, %v588
        %v592 = vxor.u32 %v591, 2147483648
        %v593 = vsel %vm510, %v592, %v591
        %v594 = vsub.s32 4, %v570
        %v595 = vsel %vm510, %v594, %v570
        %v596 = vsel %vm509, %v507, %v593
        %v597 = vsel %vm509, 0, %v595
        %v598 = vcosq.f32.pop %v596
        %v599 = vsinq.f32.pop %v596
        %vm600 = vweird.f32 %v507
        %v601 = vand.u32 %v597, 3
        %vm602 = vcmp.lt.s32.totalorder %v601, 2
        %vm603 = vcmp.eq.s32.totalorder %v601, 0
        %v604 = vxor.u32 %v599, 2147483648
        %v605 = vsel %vm603, %v598, %v604
        %vm606 = vcmp.eq.s32.totalorder %v601, 2
        %v607 = vxor.u32 %v598, 2147483648
        %v608 = vsel %vm606, %v607, %v599
        %v609 = vsel %vm602, %v605, %v608
        %v610 = vsel %vm600, nan, %v609
        %v611 = vand.u32 2147483647, %v507
        %vm612 = vcmp.le.f32.partialorder %v611, 0.7853982
        %vm613 = vcmp.lt.s32.totalorder %v507, 0
        %v614 = vand.u32 %v507, 2139095040
        %v615 = vshrl.u32 %v614, 23
        %v616 = vsub.s32 %v615, 127
        %v617 = vand.u32 2147483647, %v507
        %v618 = vand.u32 %v617, 8388607
        %v619 = vor.u32 %v618, 8388608
        %v620 = vsub.s32 0, %v619
        %v621 = vadd.s32 %v616, 1
        %vm622 = vcmp.gt.s32.totalorder %v621, 0
        %v623 = vsel %vm622, %v621, 0
        %v624 = vshrl.u32 %v623, 5
        %v625 = vand.u32 %v623, 31
        %v626 = vsub.s32 32, %v625
        %v627 = vshrl.u32 683565275, %v626
        %v628 = vshll.u32 683565275, %v625
        %v629 = vshrl.u32 2475754826, %v626
        %v630 = vor.u32 %v628, %v629
        %v631 = vshll.u32 2475754826, %v625
        %v632 = vshrl.u32 2131351028, %v626
        %v633 = vor.u32 %v631, %v632
        %v634 = vshll.u32 2131351028, %v625
        %v635 = vshrl.u32 2102212464, %v626
        %v636 = vor.u32 %v634, %v635
        %v637 = vshll.u32 2102212464, %v625
        %v638 = vshrl.u32 920167782, %v626
        %v639 = vor.u32 %v637, %v638
        %v640 = vshll.u32 920167782, %v625
        %v641 = vshrl.u32 1326507024, %v626
        %v642 = vor.u32 %v640, %v641
        %vm643 = vcmp.lt.s32.totalorder %v624, 1
        %vm644 = vcmp.lt.s32.totalorder %v624, 2
        %vm645 = vcmp.lt.s32.totalorder %v624, 3
        %vm646 = vcmp.lt.s32.totalorder %v624, 4
        %v647 = vsel %vm643, %v627, %v630
        %v648 = vsel %vm646, %v636, 2102212464
        %v649 = vsel %vm645, %v633, %v648
        %v650 = vsel %vm644, %v647, %v649
        %v651 = vsel %vm643, %v630, %v633
        %v652 = vsel %vm646, %v639, 920167782
        %v653 = vsel %vm645, %v636, %v652
        %v654 = vsel %vm644, %v651, %v653
        %v655 = vsel %vm643, %v633, %v636
        %v656 = vsel %vm646, %v642, 1326507024
        %v657 = vsel %vm645, %v639, %v656
        %v658 = vsel %vm644, %v655, %v657
        %v659 = vshll.u32 %v619, 8
        %v660 = vmul.u32.u64.compose %v659, %v658
        %v661 = vextract.low.u32 %v660
        %v662 = vextract.high.u32 %v660
        %v663 = vmul.u32.u64.compose %v659, %v654
        %v664 = vextract.low.u32 %v663
        %v665 = vextract.high.u32 %v663
        %v666 = vmul.u32 %v659, %v650
        %v667 = vadd.s32 %v662, %v664
        %vm668 = vc.u32 %v662, %v664
        %v669 = vadd.s32 %v665, 1
        %v670 = vsel %vm668, %v669, %v665
        %v671 = vadd.s32 %v666, %v670
        %v672 = vadd.s32 %v671, 536870912
        %v673 = vshrl.u32 %v672, 30
        %v674 = vshll.u32 %v673, 30
        %v675 = vsub.s32 %v671, %v674
        %vm676 = vcmp.lt.s32.totalorder %v675, 0
        %v677 = vsub.s32 0, %v675
        %v678 = vsel %vm676, %v677, %v675
        %v679 = vclz %v678
        %v680 = vsub.s32 %v679, 2
        %vm681 = vcmp.gt.s32.totalorder 0, %v680
        %v682 = vsel %vm681, 0, %v680
        %v683 = vsub.s32 32, %v682
        %v684 = vshll.u32 %v675, %v682
        %v685 = vshrl.u32 %v667, %v683
        %v686 = vor.u32 %v684, %v685
        %v687 = vsub.s32 4294967266, %v682
        %v688 = vadd.s32 %v687, 127
        %v689 = vshll.u32 %v688, 23
        %v690 = vor.u32 4788187, %v689
        %v691 = vand.u32 2147483647, %v690
        %v693 = vcvt.s32.f32 %v686
        %v694 = vmul.f32 %v693, %v691
        %v695 = vxor.u32 %v694, 2147483648
        %v696 = vsel %vm613, %v695, %v694
        %v697 = vsub.s32 4, %v673
        %v698 = vsel %vm613, %v697, %v673
        %v699 = vsel %vm612, %v507, %v696
        %v700 = vsel %vm612, 0, %v698
        %v701 = vcosq.f32.pop %v699
        %v702 = vsinq.f32.pop %v699
        %vm703 = vweird.f32 %v507
        %v704 = vadd.s32 %v700, 3
        %v705 = vand.u32 %v704, 3
        %vm706 = vcmp.lt.s32.totalorder %v705, 2
        %vm707 = vcmp.eq.s32.totalorder %v705, 0
        %v708 = vxor.u32 %v702, 2147483648
        %v709 = vsel %vm707, %v701, %v708
        %vm710 = vcmp.eq.s32.totalorder %v705, 2
        %v711 = vxor.u32 %v701, 2147483648
        %v712 = vsel %vm710, %v711, %v702
        %v713 = vsel %vm706, %v709, %v712
        %v714 = vsel %vm703, nan, %v713
        %v715 = vsub.f32 %v610, %v714
        %v716 = vmul.f32 %v715, 0.70710677
        %v717 = vadd.f32 %v610, %v714
        %v718 = vmul.f32 %v717, 0.70710677
        %720 = vset.pattern.permute.xlu0 0
        %721 = vperm.xlu0 %720, %v718
        %v722 = vpop.permute.xlu0 %721
        %725 = vset.pattern.permute.xlu0 0
        %726 = vperm.xlu0 %725, %v716
        %v727 = vpop.permute.xlu0 %726
        %v729 = vsel %vm331, %v722, %v727
        %730 = vset.pattern.permute.xlu0 1
        %731 = vperm.xlu0 %730, %v718
        %v732 = vpop.permute.xlu0 %731
        %734 = vset.pattern.permute.xlu0 1
        %735 = vperm.xlu0 %734, %v716
        %v736 = vpop.permute.xlu0 %735
        %v738 = vsel %vm334, %v732, %v736
        %v739 = vmul.f32 %v729, %v738
        %740 = vset.pattern.permute.xlu0 2
        %741 = vperm.xlu0 %740, %v718
        %v742 = vpop.permute.xlu0 %741
        %744 = vset.pattern.permute.xlu0 2
        %745 = vperm.xlu0 %744, %v716
        %v746 = vpop.permute.xlu0 %745
        %v748 = vsel %vm337, %v742, %v746
        %v749 = vmul.f32 %v739, %v748
        %750 = vset.pattern.permute.xlu0 3
        %751 = vperm.xlu0 %750, %v718
        %v752 = vpop.permute.xlu0 %751
        %754 = vset.pattern.permute.xlu0 3
        %755 = vperm.xlu0 %754, %v716
        %v756 = vpop.permute.xlu0 %755
        %v758 = vsel %vm340, %v752, %v756
        %v759 = vmul.f32 %v749, %v758
        %760 = vset.pattern.permute.xlu0 4
        %761 = vperm.xlu0 %760, %v718
        %v762 = vpop.permute.xlu0 %761
        %764 = vset.pattern.permute.xlu0 4
        %765 = vperm.xlu0 %764, %v716
        %v766 = vpop.permute.xlu0 %765
        %v768 = vsel %vm343, %v762, %v766
        %v769 = vmul.f32 %v759, %v768
        %770 = vset.pattern.permute.xlu0 5
        %771 = vperm.xlu0 %770, %v718
        %v772 = vpop.permute.xlu0 %771
        %774 = vset.pattern.permute.xlu0 5
        %775 = vperm.xlu0 %774, %v716
        %v776 = vpop.permute.xlu0 %775
        %v778 = vsel %vm331, %v772, %v776
        %779 = vset.pattern.permute.xlu0 6
        %780 = vperm.xlu0 %779, %v718
        %v781 = vpop.permute.xlu0 %780
        %783 = vset.pattern.permute.xlu0 6
        %784 = vperm.xlu0 %783, %v716
        %v785 = vpop.permute.xlu0 %784
        %v787 = vsel %vm334, %v781, %v785
        %v788 = vmul.f32 %v778, %v787
        %789 = vset.pattern.permute.xlu0 7
        %790 = vperm.xlu0 %789, %v718
        %v791 = vpop.permute.xlu0 %790
        %793 = vset.pattern.permute.xlu0 7
        %794 = vperm.xlu0 %793, %v716
        %v795 = vpop.permute.xlu0 %794
        %v797 = vsel %vm337, %v791, %v795
        %v798 = vmul.f32 %v788, %v797
        %799 = vset.pattern.permute.xlu0 8
        %800 = vperm.xlu0 %799, %v718
        %v801 = vpop.permute.xlu0 %800
        %803 = vset.pattern.permute.xlu0 8
        %804 = vperm.xlu0 %803, %v716
        %v805 = vpop.permute.xlu0 %804
        %v807 = vsel %vm340, %v801, %v805
        %v808 = vmul.f32 %v798, %v807
        %809 = vset.pattern.permute.xlu0 9
        %810 = vperm.xlu0 %809, %v718
        %v811 = vpop.permute.xlu0 %810
        %813 = vset.pattern.permute.xlu0 9
        %814 = vperm.xlu0 %813, %v716
        %v815 = vpop.permute.xlu0 %814
        %v817 = vsel %vm343, %v811, %v815
        %v818 = vmul.f32 %v808, %v817
        %819 = vset.pattern.permute.xlu0 10
        %820 = vperm.xlu0 %819, %v718
        %v821 = vpop.permute.xlu0 %820
        %823 = vset.pattern.permute.xlu0 10
        %824 = vperm.xlu0 %823, %v716
        %v825 = vpop.permute.xlu0 %824
        %v827 = vsel %vm331, %v821, %v825
        %828 = vset.pattern.permute.xlu0 11
        %829 = vperm.xlu0 %828, %v718
        %v830 = vpop.permute.xlu0 %829
        %832 = vset.pattern.permute.xlu0 11
        %833 = vperm.xlu0 %832, %v716
        %v834 = vpop.permute.xlu0 %833
        %v836 = vsel %vm334, %v830, %v834
        %v837 = vmul.f32 %v827, %v836
        %838 = vset.pattern.permute.xlu0 12
        %839 = vperm.xlu0 %838, %v718
        %v840 = vpop.permute.xlu0 %839
        %842 = vset.pattern.permute.xlu0 12
        %843 = vperm.xlu0 %842, %v716
        %v844 = vpop.permute.xlu0 %843
        %v846 = vsel %vm337, %v840, %v844
        %v847 = vmul.f32 %v837, %v846
        %848 = vset.pattern.permute.xlu0 13
        %849 = vperm.xlu0 %848, %v718
        %v850 = vpop.permute.xlu0 %849
        %852 = vset.pattern.permute.xlu0 13
        %853 = vperm.xlu0 %852, %v716
        %v854 = vpop.permute.xlu0 %853
        %v856 = vsel %vm340, %v850, %v854
        %v857 = vmul.f32 %v847, %v856
        %858 = vset.pattern.permute.xlu0 14
        %859 = vperm.xlu0 %858, %v718
        %v860 = vpop.permute.xlu0 %859
        %862 = vset.pattern.permute.xlu0 14
        %863 = vperm.xlu0 %862, %v716
        %v864 = vpop.permute.xlu0 %863
        %v866 = vsel %vm343, %v860, %v864
        %v867 = vmul.f32 %v857, %v866
        %868 = vset.pattern.permute.xlu0 15
        %869 = vperm.xlu0 %868, %v718
        %v870 = vpop.permute.xlu0 %869
        %872 = vset.pattern.permute.xlu0 15
        %873 = vperm.xlu0 %872, %v716
        %v874 = vpop.permute.xlu0 %873
        %v876 = vsel %vm331, %v870, %v874
        %877 = vset.pattern.permute.xlu0 16
        %878 = vperm.xlu0 %877, %v718
        %v879 = vpop.permute.xlu0 %878
        %881 = vset.pattern.permute.xlu0 16
        %882 = vperm.xlu0 %881, %v716
        %v883 = vpop.permute.xlu0 %882
        %v885 = vsel %vm334, %v879, %v883
        %v886 = vmul.f32 %v876, %v885
        %887 = vset.pattern.permute.xlu0 17
        %888 = vperm.xlu0 %887, %v718
        %v889 = vpop.permute.xlu0 %888
        %891 = vset.pattern.permute.xlu0 17
        %892 = vperm.xlu0 %891, %v716
        %v893 = vpop.permute.xlu0 %892
        %v895 = vsel %vm337, %v889, %v893
        %v896 = vmul.f32 %v886, %v895
        %897 = vset.pattern.permute.xlu0 18
        %898 = vperm.xlu0 %897, %v718
        %v899 = vpop.permute.xlu0 %898
        %901 = vset.pattern.permute.xlu0 18
        %902 = vperm.xlu0 %901, %v716
        %v903 = vpop.permute.xlu0 %902
        %v905 = vsel %vm340, %v899, %v903
        %v906 = vmul.f32 %v896, %v905
        %907 = vset.pattern.permute.xlu0 19
        %908 = vperm.xlu0 %907, %v718
        %v909 = vpop.permute.xlu0 %908
        %911 = vset.pattern.permute.xlu0 19
        %912 = vperm.xlu0 %911, %v716
        %v913 = vpop.permute.xlu0 %912
        %v915 = vsel %vm343, %v909, %v913
        %v916 = vmul.f32 %v906, %v915
        %918 = vrot.lane.b32.xlu0 %v818, 32
        %v919 = vpop.permute.xlu0 %918
        %922 = vrot.lane.b32.xlu0 %v867, 64
        %v923 = vpop.permute.xlu0 %922
        %926 = vrot.lane.b32.xlu0 %v916, 96
        %v927 = vpop.permute.xlu0 %926
        %vm929 = vcmask 261120
        %v930 = vsel %vm929, %v769, %v919
        %vm931 = vcmask 523264
        %v932 = vsel %vm931, %v930, %v923
        %vm933 = vcmask 785408
        %v934 = vsel %vm933, %v932, %v927
        %v935 = vld [vmem:[#allocation4] sm:$0xff]
        %v936 = vld [vmem:[#allocation4 + $0x8] sm:$0xff]
        %v937 = vld [vmem:[#allocation4 + $0x10] sm:$0xff]
        %v938 = vld [vmem:[#allocation4 + $0x18] sm:$0xff]
        %v939 = vld [vmem:[#allocation4 + $0x20] sm:$0xff]
        %v940 = vld [vmem:[#allocation4 + $0x28] sm:$0xff]
        %v941 = vld [vmem:[#allocation4 + $0x30] sm:$0xff]
        %v942 = vld [vmem:[#allocation4 + $0x38] sm:$0xff]
        %v943 = vld [vmem:[#allocation4 + $0x40] sm:$0xff]
        %v944 = vld [vmem:[#allocation4 + $0x48] sm:$0xff]
        %v945 = vld [vmem:[#allocation4 + $0x50] sm:$0xff]
        %v946 = vld [vmem:[#allocation4 + $0x58] sm:$0xff]
        %v947 = vld [vmem:[#allocation4 + $0x60] sm:$0xff]
        %v948 = vld [vmem:[#allocation4 + $0x68] sm:$0xff]
        %v949 = vld [vmem:[#allocation4 + $0x70] sm:$0xff]
        %v950 = vld [vmem:[#allocation4 + $0x78] sm:$0xff]
        %v951 = vld [vmem:[#allocation4 + $0x80] sm:$0xff]
        %v952 = vld [vmem:[#allocation4 + $0x88] sm:$0xff]
        %v953 = vld [vmem:[#allocation4 + $0x90] sm:$0xff]
        %v954 = vld [vmem:[#allocation4 + $0x98] sm:$0xff]
        %v955 = vld [vmem:[#allocation4 + $0xa0] sm:$0xff]
        %v956 = vld [vmem:[#allocation4 + $0xa8] sm:$0xff]
        %v957 = vld [vmem:[#allocation4 + $0xb0] sm:$0xff]
        %v958 = vld [vmem:[#allocation4 + $0xb8] sm:$0xff]
        %v959 = vld [vmem:[#allocation4 + $0xc0] sm:$0xff]
        %v960 = vld [vmem:[#allocation4 + $0xc8] sm:$0xff]
        %v961 = vld [vmem:[#allocation4 + $0xd0] sm:$0xff]
        %v962 = vld [vmem:[#allocation4 + $0xd8] sm:$0xff]
        %v963 = vld [vmem:[#allocation4 + $0xe0] sm:$0xff]
        %v964 = vld [vmem:[#allocation4 + $0xe8] sm:$0xff]
        %v965 = vld [vmem:[#allocation4 + $0xf0] sm:$0xff]
        %v966 = vld [vmem:[#allocation4 + $0xf8] sm:$0xff]
        %967 = vmatprep.subr.mxu0 %v936
        %968 = vmatpush1.msra.mxu0 %v935
        %969 = vmatprep.subr.mxu0 %v938
        %970 = vmatpush1.msra.mxu0 %v937
        %971 = vmatprep.subr.mxu0 %v940
        %972 = vmatpush1.msra.mxu0 %v939
        %973 = vmatprep.subr.mxu0 %v942
        %974 = vmatpush1.msra.mxu0 %v941
        %975 = vmatprep.subr.mxu0 %v944
        %976 = vmatpush1.msra.mxu0 %v943
        %977 = vmatprep.subr.mxu0 %v946
        %978 = vmatpush1.msra.mxu0 %v945
        %979 = vmatprep.subr.mxu0 %v948
        %980 = vmatpush1.msra.mxu0 %v947
        %981 = vmatprep.subr.mxu0 %v950
        %982 = vmatpush1.msra.mxu0 %v949
        %983 = vmatprep.subr.mxu0 %v952
        %984 = vmatpush1.msra.mxu0 %v951
        %985 = vmatprep.subr.mxu0 %v954
        %986 = vmatpush1.msra.mxu0 %v953
        %987 = vmatprep.subr.mxu0 %v956
        %988 = vmatpush1.msra.mxu0 %v955
        %989 = vmatprep.subr.mxu0 %v958
        %990 = vmatpush1.msra.mxu0 %v957
        %991 = vmatprep.subr.mxu0 %v960
        %992 = vmatpush1.msra.mxu0 %v959
        %993 = vmatprep.subr.mxu0 %v962
        %994 = vmatpush1.msra.mxu0 %v961
        %995 = vmatprep.subr.mxu0 %v964
        %996 = vmatpush1.msra.mxu0 %v963
        %997 = vmatprep.subr.mxu0 %v966
        %998 = vmatpush1.msra.mxu0 %v965
        %999 = vmatprep.subr.mxu0 0.0
        %1000 = vmatpush1.msra.mxu0 0.0
        %1001 = vmatprep.subr.mxu0 0.0
        %1002 = vmatpush1.msra.mxu0 0.0
        %1003 = vmatprep.subr.mxu0 0.0
        %1004 = vmatpush1.msra.mxu0 0.0
        %1005 = vmatprep.subr.mxu0 0.0
        %1006 = vmatpush1.msra.mxu0 0.0
        %1007 = vmatprep.subr.mxu0 0.0
        %1008 = vmatpush1.msra.mxu0 0.0
        %1009 = vmatprep.subr.mxu0 0.0
        %1010 = vmatpush1.msra.mxu0 0.0
        %1011 = vmatprep.subr.mxu0 0.0
        %1012 = vmatpush1.msra.mxu0 0.0
        %1013 = vmatprep.subr.mxu0 0.0
        %1014 = vmatpush1.msra.mxu0 0.0
        %1015 = vmatprep.subr.mxu0 0.0
        %1016 = vmatpush1.msra.mxu0 0.0
        %1017 = vmatprep.subr.mxu0 0.0
        %1018 = vmatpush1.msra.mxu0 0.0
        %1019 = vmatprep.subr.mxu0 0.0
        %1020 = vmatpush1.msra.mxu0 0.0
        %1021 = vmatprep.subr.mxu0 0.0
        %1022 = vmatpush1.msra.mxu0 0.0
        %1023 = vmatprep.subr.mxu0 0.0
        %1024 = vmatpush1.msra.mxu0 0.0
        %1025 = vmatprep.subr.mxu0 0.0
        %1026 = vmatpush1.msra.mxu0 0.0
        %1027 = vmatprep.subr.mxu0 0.0
        %1028 = vmatpush1.msra.mxu0 0.0
        %1029 = vmatprep.subr.mxu0 0.0
        %1030 = vmatpush1.msra.mxu0 0.0
        %1031 = vmatprep.mubr.f32.mxu0 0.0
        %1032 = vmatmul.mubr.f32.gmra.mrb[0].mxu0 %v934
        %v1033 = vpop.f32.mrb[0].mxu0
        %v1034 = vadd.f32 0.0, %v1033
        %v1035 = vpop.f32.mrb[0].mxu0
        %v1036 = vadd.f32 0.0, %v1035
        %1037 = vdwg.mxu0
        %v1038 = vmul.f32 %v1034, %v1034
        %v1039 = vmul.f32 %v1036, %v1036
        %v1040 = vadd.f32 %v1038, %v1039
        %v1041 = vld [vmem:[%s5] sm:$0xff]
        %v1042 = vld [vmem:[%s5 + $0x8] sm:$0xff]
        %v1043 = vld [vmem:[%s5 + $0x10] sm:$0xff]
        %v1044 = vld [vmem:[%s5 + $0x18] sm:$0xff]
        %v1045 = vld [vmem:[%s5 + $0x20] sm:$0xff]
        %v1046 = vld [vmem:[%s5 + $0x28] sm:$0xff]
        %v1047 = vld [vmem:[%s5 + $0x30] sm:$0xff]
        %v1048 = vld [vmem:[%s5 + $0x38] sm:$0xff]
        %v1049 = vld [vmem:[%s5 + $0x40] sm:$0xff]
        %v1050 = vld [vmem:[%s5 + $0x48] sm:$0xff]
        %v1051 = vld [vmem:[%s5 + $0x50] sm:$0xff]
        %v1052 = vld [vmem:[%s5 + $0x58] sm:$0xff]
        %v1053 = vld [vmem:[%s5 + $0x60] sm:$0xff]
        %v1054 = vld [vmem:[%s5 + $0x68] sm:$0xff]
        %v1055 = vld [vmem:[%s5 + $0x70] sm:$0xff]
        %v1056 = vld [vmem:[%s5 + $0x78] sm:$0xff]
        %v1057 = vld [vmem:[%s6] sm:$0x1]
        %v1059 = vlaneseq
        %v1060 = vshrl.u32 %v1059, 7
        %v1061 = vsub.s32 0, %v1060
        %v1062 = vrot.slane %v1057, %v1061
        %1064 = vmatprep.subr.mxu0 0.0
        %1065 = vmatpush1.msra.mxu0 %v1041
        %1066 = vmatprep.subr.mxu0 0.0
        %1067 = vmatpush1.msra.mxu0 %v1042
        %1068 = vmatprep.subr.mxu0 0.0
        %1069 = vmatpush1.msra.mxu0 %v1043
        %1070 = vmatprep.subr.mxu0 0.0
        %1071 = vmatpush1.msra.mxu0 %v1044
        %1072 = vmatprep.subr.mxu0 0.0
        %1073 = vmatpush1.msra.mxu0 %v1045
        %1074 = vmatprep.subr.mxu0 0.0
        %1075 = vmatpush1.msra.mxu0 %v1046
        %1076 = vmatprep.subr.mxu0 0.0
        %1077 = vmatpush1.msra.mxu0 %v1047
        %1078 = vmatprep.subr.mxu0 0.0
        %1079 = vmatpush1.msra.mxu0 %v1048
        %1080 = vmatprep.subr.mxu0 0.0
        %1081 = vmatpush1.msra.mxu0 %v1049
        %1082 = vmatprep.subr.mxu0 0.0
        %1083 = vmatpush1.msra.mxu0 %v1050
        %1084 = vmatprep.subr.mxu0 0.0
        %1085 = vmatpush1.msra.mxu0 %v1051
        %1086 = vmatprep.subr.mxu0 0.0
        %1087 = vmatpush1.msra.mxu0 %v1052
        %1088 = vmatprep.subr.mxu0 0.0
        %1089 = vmatpush1.msra.mxu0 %v1053
        %1090 = vmatprep.subr.mxu0 0.0
        %1091 = vmatpush1.msra.mxu0 %v1054
        %1092 = vmatprep.subr.mxu0 0.0
        %1093 = vmatpush1.msra.mxu0 %v1055
        %1094 = vmatprep.subr.mxu0 0.0
        %1095 = vmatpush1.msra.mxu0 %v1056
        %1096 = vmatprep.subr.mxu0 0.0
        %1097 = vmatpush1.msra.mxu0 0.0
        %1098 = vmatprep.subr.mxu0 0.0
        %1099 = vmatpush1.msra.mxu0 0.0
        %1100 = vmatprep.subr.mxu0 0.0
        %1101 = vmatpush1.msra.mxu0 0.0
        %1102 = vmatprep.subr.mxu0 0.0
        %1103 = vmatpush1.msra.mxu0 0.0
        %1104 = vmatprep.subr.mxu0 0.0
        %1105 = vmatpush1.msra.mxu0 0.0
        %1106 = vmatprep.subr.mxu0 0.0
        %1107 = vmatpush1.msra.mxu0 0.0
        %1108 = vmatprep.subr.mxu0 0.0
        %1109 = vmatpush1.msra.mxu0 0.0
        %1110 = vmatprep.subr.mxu0 0.0
        %1111 = vmatpush1.msra.mxu0 0.0
        %1112 = vmatprep.subr.mxu0 0.0
        %1113 = vmatpush1.msra.mxu0 0.0
        %1114 = vmatprep.subr.mxu0 0.0
        %1115 = vmatpush1.msra.mxu0 0.0
        %1116 = vmatprep.subr.mxu0 0.0
        %1117 = vmatpush1.msra.mxu0 0.0
        %1118 = vmatprep.subr.mxu0 0.0
        %1119 = vmatpush1.msra.mxu0 0.0
        %1120 = vmatprep.subr.mxu0 0.0
        %1121 = vmatpush1.msra.mxu0 0.0
        %1122 = vmatprep.subr.mxu0 0.0
        %1123 = vmatpush1.msra.mxu0 0.0
        %1124 = vmatprep.subr.mxu0 0.0
        %1125 = vmatpush1.msra.mxu0 0.0
        %1126 = vmatprep.subr.mxu0 0.0
        %1127 = vmatpush1.msra.mxu0 0.0
        %1128 = vmatprep.mubr.f32.mxu0 0.0
        %1129 = vmatmul.mubr.f32.gmra.mrb[0].mxu0 %v1040
        %v1130 = vpop.f32.mrb[0].mxu0
        %v1131 = vadd.f32 %v1062, %v1130
        %v1132 = vpop.f32.mrb[0].mxu0
        %1133 = vdwg.mxu0
        %v1134 = vxor.u32 %v1131, 2147483648
        %v1135 = vmul.f32 %v1134, 1.442695
        %v1136 = vpow.pop %v1135
        %v1137 = vadd.f32 %v1136, 1.0
        %v1138 = vrcp.pop %v1137
        %v1139 = vmul.f32 1.0, %v1138
        %v1140 = vtanh.pop %v1131
        %1142 = vrot.lane.b32.xlu0 %v345, 16
        %v1143 = vpop.permute.xlu0 %1142
        %v1145 = vmul.f32 %v1139, %v1143
        %1147 = vrot.lane.b32.xlu0 %v1140, 80
        %v1148 = vpop.permute.xlu0 %1147
        %v1150 = vmul.f32 %v1139, %v1148
        %1152 = vrot.lane.b32.xlu0 %v1150, 16
        %v1153 = vpop.permute.xlu0 %1152
        %v1155 = vadd.f32 %v1145, %v1153
        %v1156 = vtanh.pop %v1155
        %1158 = vrot.lane.b32.xlu0 %v1156, 16
        %v1159 = vpop.permute.xlu0 %1158
        %v1161 = vmul.f32 %v1139, %v1159
        %1163 = vrot.lane.b32.xlu0 %v1161, 96
        %v1164 = vpop.permute.xlu0 %1163
        %vm1166 = vcmask 125952
        %1167 = vst.msk [vmem:[#allocation2] sm:$0xf] %vm1166, %v1164
        %1169 = vrot.lane.b32.xlu0 %v1155, 112
        %v1170 = vpop.permute.xlu0 %1169
        %1172 = vst.msk [vmem:[#allocation3] sm:$0xf] %vm1166, %v1170
        %1173 = vst.msk [vmem:[%s311] sm:$0xf] %vm1166, %v1164
        %v1174 = vld [vmem:[#allocation2] sm:$0xf]
        %v1175 = vld [vmem:[#allocation3] sm:$0xf]
        %s1176 = scalar_lea.vmem %s318, 4
        %v1177 = vld [vmem:[%s1176] sm:$0xf]
        %v1178 = vld [vmem:[%s1] sm:$0xff]
        %v1179 = vld [vmem:[%s1 + $0x8] sm:$0xff]
        %v1180 = vld [vmem:[%s2] sm:$0xff]
        %v1182 = vsel %vm350, %v1177, 0
        %1184 = vmatprep.subr.mxu0 0.0
        %1185 = vmatpush1.msra.mxu0 %v1180
        %1186 = vmatprep.subr.mxu0 0.0
        %1187 = vmatpush1.msra.mxu0 0.0
        %1188 = vmatprep.subr.mxu0 0.0
        %1189 = vmatpush1.msra.mxu0 0.0
        %1190 = vmatprep.subr.mxu0 0.0
        %1191 = vmatpush1.msra.mxu0 0.0
        %1192 = vmatprep.subr.mxu0 0.0
        %1193 = vmatpush1.msra.mxu0 0.0
        %1194 = vmatprep.subr.mxu0 0.0
        %1195 = vmatpush1.msra.mxu0 0.0
        %1196 = vmatprep.subr.mxu0 0.0
        %1197 = vmatpush1.msra.mxu0 0.0
        %1198 = vmatprep.subr.mxu0 0.0
        %1199 = vmatpush1.msra.mxu0 0.0
        %1200 = vmatprep.subr.mxu0 0.0
        %1201 = vmatpush1.msra.mxu0 0.0
        %1202 = vmatprep.subr.mxu0 0.0
        %1203 = vmatpush1.msra.mxu0 0.0
        %1204 = vmatprep.subr.mxu0 0.0
        %1205 = vmatpush1.msra.mxu0 0.0
        %1206 = vmatprep.subr.mxu0 0.0
        %1207 = vmatpush1.msra.mxu0 0.0
        %1208 = vmatprep.subr.mxu0 0.0
        %1209 = vmatpush1.msra.mxu0 0.0
        %1210 = vmatprep.subr.mxu0 0.0
        %1211 = vmatpush1.msra.mxu0 0.0
        %1212 = vmatprep.subr.mxu0 0.0
        %1213 = vmatpush1.msra.mxu0 0.0
        %1214 = vmatprep.subr.mxu0 0.0
        %1215 = vmatpush1.msra.mxu0 0.0
        %1216 = vmatprep.subr.mxu0 0.0
        %1217 = vmatpush1.msra.mxu0 0.0
        %1218 = vmatprep.subr.mxu0 0.0
        %1219 = vmatpush1.msra.mxu0 0.0
        %1220 = vmatprep.subr.mxu0 0.0
        %1221 = vmatpush1.msra.mxu0 0.0
        %1222 = vmatprep.subr.mxu0 0.0
        %1223 = vmatpush1.msra.mxu0 0.0
        %1224 = vmatprep.subr.mxu0 0.0
        %1225 = vmatpush1.msra.mxu0 0.0
        %1226 = vmatprep.subr.mxu0 0.0
        %1227 = vmatpush1.msra.mxu0 0.0
        %1228 = vmatprep.subr.mxu0 0.0
        %1229 = vmatpush1.msra.mxu0 0.0
        %1230 = vmatprep.subr.mxu0 0.0
        %1231 = vmatpush1.msra.mxu0 0.0
        %1232 = vmatprep.subr.mxu0 0.0
        %1233 = vmatpush1.msra.mxu0 0.0
        %1234 = vmatprep.subr.mxu0 0.0
        %1235 = vmatpush1.msra.mxu0 0.0
        %1236 = vmatprep.subr.mxu0 0.0
        %1237 = vmatpush1.msra.mxu0 0.0
        %1238 = vmatprep.subr.mxu0 0.0
        %1239 = vmatpush1.msra.mxu0 0.0
        %1240 = vmatprep.subr.mxu0 0.0
        %1241 = vmatpush1.msra.mxu0 0.0
        %1242 = vmatprep.subr.mxu0 0.0
        %1243 = vmatpush1.msra.mxu0 0.0
        %1244 = vmatprep.subr.mxu0 0.0
        %1245 = vmatpush1.msra.mxu0 0.0
        %1246 = vmatprep.subr.mxu0 0.0
        %1247 = vmatpush1.msra.mxu0 0.0
        %1248 = vmatprep.mubr.f32.mxu0 0.0
        %1249 = vmatmul.mubr.f32.gmra.mrb[0].mxu0 %v1182
        %v1250 = vpop.f32.mrb[0].mxu0
        %v1251 = vadd.f32 0.0, %v1250
        %v1252 = vpop.f32.mrb[0].mxu0
        %1253 = vdwg.mxu0
        %v1255 = vsel %vm424, %v1174, 0
        %1257 = vmatprep.subr.mxu0 0.0
        %1258 = vmatpush1.msra.mxu0 %v1178
        %1259 = vmatprep.subr.mxu0 0.0
        %1260 = vmatpush1.msra.mxu0 %v1179
        %1261 = vmatprep.subr.mxu0 0.0
        %1262 = vmatpush1.msra.mxu0 0.0
        %1263 = vmatprep.subr.mxu0 0.0
        %1264 = vmatpush1.msra.mxu0 0.0
        %1265 = vmatprep.subr.mxu0 0.0
        %1266 = vmatpush1.msra.mxu0 0.0
        %1267 = vmatprep.subr.mxu0 0.0
        %1268 = vmatpush1.msra.mxu0 0.0
        %1269 = vmatprep.subr.mxu0 0.0
        %1270 = vmatpush1.msra.mxu0 0.0
        %1271 = vmatprep.subr.mxu0 0.0
        %1272 = vmatpush1.msra.mxu0 0.0
        %1273 = vmatprep.subr.mxu0 0.0
        %1274 = vmatpush1.msra.mxu0 0.0
        %1275 = vmatprep.subr.mxu0 0.0
        %1276 = vmatpush1.msra.mxu0 0.0
        %1277 = vmatprep.subr.mxu0 0.0
        %1278 = vmatpush1.msra.mxu0 0.0
        %1279 = vmatprep.subr.mxu0 0.0
        %1280 = vmatpush1.msra.mxu0 0.0
        %1281 = vmatprep.subr.mxu0 0.0
        %1282 = vmatpush1.msra.mxu0 0.0
        %1283 = vmatprep.subr.mxu0 0.0
        %1284 = vmatpush1.msra.mxu0 0.0
        %1285 = vmatprep.subr.mxu0 0.0
        %1286 = vmatpush1.msra.mxu0 0.0
        %1287 = vmatprep.subr.mxu0 0.0
        %1288 = vmatpush1.msra.mxu0 0.0
        %1289 = vmatprep.subr.mxu0 0.0
        %1290 = vmatpush1.msra.mxu0 0.0
        %1291 = vmatprep.subr.mxu0 0.0
        %1292 = vmatpush1.msra.mxu0 0.0
        %1293 = vmatprep.subr.mxu0 0.0
        %1294 = vmatpush1.msra.mxu0 0.0
        %1295 = vmatprep.subr.mxu0 0.0
        %1296 = vmatpush1.msra.mxu0 0.0
        %1297 = vmatprep.subr.mxu0 0.0
        %1298 = vmatpush1.msra.mxu0 0.0
        %1299 = vmatprep.subr.mxu0 0.0
        %1300 = vmatpush1.msra.mxu0 0.0
        %1301 = vmatprep.subr.mxu0 0.0
        %1302 = vmatpush1.msra.mxu0 0.0
        %1303 = vmatprep.subr.mxu0 0.0
        %1304 = vmatpush1.msra.mxu0 0.0
        %1305 = vmatprep.subr.mxu0 0.0
        %1306 = vmatpush1.msra.mxu0 0.0
        %1307 = vmatprep.subr.mxu0 0.0
        %1308 = vmatpush1.msra.mxu0 0.0
        %1309 = vmatprep.subr.mxu0 0.0
        %1310 = vmatpush1.msra.mxu0 0.0
        %1311 = vmatprep.subr.mxu0 0.0
        %1312 = vmatpush1.msra.mxu0 0.0
        %1313 = vmatprep.subr.mxu0 0.0
        %1314 = vmatpush1.msra.mxu0 0.0
        %1315 = vmatprep.subr.mxu0 0.0
        %1316 = vmatpush1.msra.mxu0 0.0
        %1317 = vmatprep.subr.mxu0 0.0
        %1318 = vmatpush1.msra.mxu0 0.0
        %1319 = vmatprep.subr.mxu0 0.0
        %1320 = vmatpush1.msra.mxu0 0.0
        %1321 = vmatprep.mubr.f32.mxu0 0.0
        %1322 = vmatmul.mubr.f32.gmra.mrb[0].mxu0 %v1255
        %v1323 = vpop.f32.mrb[0].mxu0
        %v1324 = vadd.f32 %v1251, %v1323
        %v1325 = vpop.f32.mrb[0].mxu0
        %1326 = vdwg.mxu0
        %v1327 = vld [vmem:[%s3] sm:$0x1]
        %v1329 = vlaneseq
        %v1330 = vshrl.u32 %v1329, 7
        %v1331 = vsub.s32 0, %v1330
        %v1332 = vrot.slane %v1327, %v1331
        %v1334 = vadd.f32 %v1324, %v1332
        %v1335 = vmul.f32 %v1334, 1.5707964
        %v1336 = vmul.f32 %v1335, 0.5
        %v1337 = vand.u32 2147483647, %v1336
        %vm1338 = vcmp.le.f32.partialorder %v1337, 0.7853982
        %vm1339 = vcmp.lt.s32.totalorder %v1336, 0
        %v1340 = vand.u32 %v1336, 2139095040
        %v1341 = vshrl.u32 %v1340, 23
        %v1342 = vsub.s32 %v1341, 127
        %v1343 = vand.u32 2147483647, %v1336
        %v1344 = vand.u32 %v1343, 8388607
        %v1345 = vor.u32 %v1344, 8388608
        %v1346 = vsub.s32 0, %v1345
        %v1347 = vadd.s32 %v1342, 1
        %vm1348 = vcmp.gt.s32.totalorder %v1347, 0
        %v1349 = vsel %vm1348, %v1347, 0
        %v1350 = vshrl.u32 %v1349, 5
        %v1351 = vand.u32 %v1349, 31
        %v1352 = vsub.s32 32, %v1351
        %v1353 = vshrl.u32 683565275, %v1352
        %v1354 = vshll.u32 683565275, %v1351
        %v1355 = vshrl.u32 2475754826, %v1352
        %v1356 = vor.u32 %v1354, %v1355
        %v1357 = vshll.u32 2475754826, %v1351
        %v1358 = vshrl.u32 2131351028, %v1352
        %v1359 = vor.u32 %v1357, %v1358
        %v1360 = vshll.u32 2131351028, %v1351
        %v1361 = vshrl.u32 2102212464, %v1352
        %v1362 = vor.u32 %v1360, %v1361
        %v1363 = vshll.u32 2102212464, %v1351
        %v1364 = vshrl.u32 920167782, %v1352
        %v1365 = vor.u32 %v1363, %v1364
        %v1366 = vshll.u32 920167782, %v1351
        %v1367 = vshrl.u32 1326507024, %v1352
        %v1368 = vor.u32 %v1366, %v1367
        %vm1369 = vcmp.lt.s32.totalorder %v1350, 1
        %vm1370 = vcmp.lt.s32.totalorder %v1350, 2
        %vm1371 = vcmp.lt.s32.totalorder %v1350, 3
        %vm1372 = vcmp.lt.s32.totalorder %v1350, 4
        %v1373 = vsel %vm1369, %v1353, %v1356
        %v1374 = vsel %vm1372, %v1362, 2102212464
        %v1375 = vsel %vm1371, %v1359, %v1374
        %v1376 = vsel %vm1370, %v1373, %v1375
        %v1377 = vsel %vm1369, %v1356, %v1359
        %v1378 = vsel %vm1372, %v1365, 920167782
        %v1379 = vsel %vm1371, %v1362, %v1378
        %v1380 = vsel %vm1370, %v1377, %v1379
        %v1381 = vsel %vm1369, %v1359, %v1362
        %v1382 = vsel %vm1372, %v1368, 1326507024
        %v1383 = vsel %vm1371, %v1365, %v1382
        %v1384 = vsel %vm1370, %v1381, %v1383
        %v1385 = vshll.u32 %v1345, 8
        %v1386 = vmul.u32.u64.compose %v1385, %v1384
        %v1387 = vextract.low.u32 %v1386
        %v1388 = vextract.high.u32 %v1386
        %v1389 = vmul.u32.u64.compose %v1385, %v1380
        %v1390 = vextract.low.u32 %v1389
        %v1391 = vextract.high.u32 %v1389
        %v1392 = vmul.u32 %v1385, %v1376
        %v1393 = vadd.s32 %v1388, %v1390
        %vm1394 = vc.u32 %v1388, %v1390
        %v1395 = vadd.s32 %v1391, 1
        %v1396 = vsel %vm1394, %v1395, %v1391
        %v1397 = vadd.s32 %v1392, %v1396
        %v1398 = vadd.s32 %v1397, 536870912
        %v1399 = vshrl.u32 %v1398, 30
        %v1400 = vshll.u32 %v1399, 30
        %v1401 = vsub.s32 %v1397, %v1400
        %vm1402 = vcmp.lt.s32.totalorder %v1401, 0
        %v1403 = vsub.s32 0, %v1401
        %v1404 = vsel %vm1402, %v1403, %v1401
        %v1405 = vclz %v1404
        %v1406 = vsub.s32 %v1405, 2
        %vm1407 = vcmp.gt.s32.totalorder 0, %v1406
        %v1408 = vsel %vm1407, 0, %v1406
        %v1409 = vsub.s32 32, %v1408
        %v1410 = vshll.u32 %v1401, %v1408
        %v1411 = vshrl.u32 %v1393, %v1409
        %v1412 = vor.u32 %v1410, %v1411
        %v1413 = vsub.s32 4294967266, %v1408
        %v1414 = vadd.s32 %v1413, 127
        %v1415 = vshll.u32 %v1414, 23
        %v1416 = vor.u32 4788187, %v1415
        %v1417 = vand.u32 2147483647, %v1416
        %v1419 = vcvt.s32.f32 %v1412
        %v1420 = vmul.f32 %v1419, %v1417
        %v1421 = vxor.u32 %v1420, 2147483648
        %v1422 = vsel %vm1339, %v1421, %v1420
        %v1423 = vsub.s32 4, %v1399
        %v1424 = vsel %vm1339, %v1423, %v1399
        %v1425 = vsel %vm1338, %v1336, %v1422
        %v1426 = vsel %vm1338, 0, %v1424
        %v1427 = vcosq.f32.pop %v1425
        %v1428 = vsinq.f32.pop %v1425
        %vm1429 = vweird.f32 %v1336
        %v1430 = vand.u32 %v1426, 3
        %vm1431 = vcmp.lt.s32.totalorder %v1430, 2
        %vm1432 = vcmp.eq.s32.totalorder %v1430, 0
        %v1433 = vxor.u32 %v1428, 2147483648
        %v1434 = vsel %vm1432, %v1427, %v1433
        %vm1435 = vcmp.eq.s32.totalorder %v1430, 2
        %v1436 = vxor.u32 %v1427, 2147483648
        %v1437 = vsel %vm1435, %v1436, %v1428
        %v1438 = vsel %vm1431, %v1434, %v1437
        %v1439 = vsel %vm1429, nan, %v1438
        %v1440 = vand.u32 2147483647, %v1336
        %vm1441 = vcmp.le.f32.partialorder %v1440, 0.7853982
        %vm1442 = vcmp.lt.s32.totalorder %v1336, 0
        %v1443 = vand.u32 %v1336, 2139095040
        %v1444 = vshrl.u32 %v1443, 23
        %v1445 = vsub.s32 %v1444, 127
        %v1446 = vand.u32 2147483647, %v1336
        %v1447 = vand.u32 %v1446, 8388607
        %v1448 = vor.u32 %v1447, 8388608
        %v1449 = vsub.s32 0, %v1448
        %v1450 = vadd.s32 %v1445, 1
        %vm1451 = vcmp.gt.s32.totalorder %v1450, 0
        %v1452 = vsel %vm1451, %v1450, 0
        %v1453 = vshrl.u32 %v1452, 5
        %v1454 = vand.u32 %v1452, 31
        %v1455 = vsub.s32 32, %v1454
        %v1456 = vshrl.u32 683565275, %v1455
        %v1457 = vshll.u32 683565275, %v1454
        %v1458 = vshrl.u32 2475754826, %v1455
        %v1459 = vor.u32 %v1457, %v1458
        %v1460 = vshll.u32 2475754826, %v1454
        %v1461 = vshrl.u32 2131351028, %v1455
        %v1462 = vor.u32 %v1460, %v1461
        %v1463 = vshll.u32 2131351028, %v1454
        %v1464 = vshrl.u32 2102212464, %v1455
        %v1465 = vor.u32 %v1463, %v1464
        %v1466 = vshll.u32 2102212464, %v1454
        %v1467 = vshrl.u32 920167782, %v1455
        %v1468 = vor.u32 %v1466, %v1467
        %v1469 = vshll.u32 920167782, %v1454
        %v1470 = vshrl.u32 1326507024, %v1455
        %v1471 = vor.u32 %v1469, %v1470
        %vm1472 = vcmp.lt.s32.totalorder %v1453, 1
        %vm1473 = vcmp.lt.s32.totalorder %v1453, 2
        %vm1474 = vcmp.lt.s32.totalorder %v1453, 3
        %vm1475 = vcmp.lt.s32.totalorder %v1453, 4
        %v1476 = vsel %vm1472, %v1456, %v1459
        %v1477 = vsel %vm1475, %v1465, 2102212464
        %v1478 = vsel %vm1474, %v1462, %v1477
        %v1479 = vsel %vm1473, %v1476, %v1478
        %v1480 = vsel %vm1472, %v1459, %v1462
        %v1481 = vsel %vm1475, %v1468, 920167782
        %v1482 = vsel %vm1474, %v1465, %v1481
        %v1483 = vsel %vm1473, %v1480, %v1482
        %v1484 = vsel %vm1472, %v1462, %v1465
        %v1485 = vsel %vm1475, %v1471, 1326507024
        %v1486 = vsel %vm1474, %v1468, %v1485
        %v1487 = vsel %vm1473, %v1484, %v1486
        %v1488 = vshll.u32 %v1448, 8
        %v1489 = vmul.u32.u64.compose %v1488, %v1487
        %v1490 = vextract.low.u32 %v1489
        %v1491 = vextract.high.u32 %v1489
        %v1492 = vmul.u32.u64.compose %v1488, %v1483
        %v1493 = vextract.low.u32 %v1492
        %v1494 = vextract.high.u32 %v1492
        %v1495 = vmul.u32 %v1488, %v1479
        %v1496 = vadd.s32 %v1491, %v1493
        %vm1497 = vc.u32 %v1491, %v1493
        %v1498 = vadd.s32 %v1494, 1
        %v1499 = vsel %vm1497, %v1498, %v1494
        %v1500 = vadd.s32 %v1495, %v1499
        %v1501 = vadd.s32 %v1500, 536870912
        %v1502 = vshrl.u32 %v1501, 30
        %v1503 = vshll.u32 %v1502, 30
        %v1504 = vsub.s32 %v1500, %v1503
        %vm1505 = vcmp.lt.s32.totalorder %v1504, 0
        %v1506 = vsub.s32 0, %v1504
        %v1507 = vsel %vm1505, %v1506, %v1504
        %v1508 = vclz %v1507
        %v1509 = vsub.s32 %v1508, 2
        %vm1510 = vcmp.gt.s32.totalorder 0, %v1509
        %v1511 = vsel %vm1510, 0, %v1509
        %v1512 = vsub.s32 32, %v1511
        %v1513 = vshll.u32 %v1504, %v1511
        %v1514 = vshrl.u32 %v1496, %v1512
        %v1515 = vor.u32 %v1513, %v1514
        %v1516 = vsub.s32 4294967266, %v1511
        %v1517 = vadd.s32 %v1516, 127
        %v1518 = vshll.u32 %v1517, 23
        %v1519 = vor.u32 4788187, %v1518
        %v1520 = vand.u32 2147483647, %v1519
        %v1522 = vcvt.s32.f32 %v1515
        %v1523 = vmul.f32 %v1522, %v1520
        %v1524 = vxor.u32 %v1523, 2147483648
        %v1525 = vsel %vm1442, %v1524, %v1523
        %v1526 = vsub.s32 4, %v1502
        %v1527 = vsel %vm1442, %v1526, %v1502
        %v1528 = vsel %vm1441, %v1336, %v1525
        %v1529 = vsel %vm1441, 0, %v1527
        %v1530 = vcosq.f32.pop %v1528
        %v1531 = vsinq.f32.pop %v1528
        %vm1532 = vweird.f32 %v1336
        %v1533 = vadd.s32 %v1529, 3
        %v1534 = vand.u32 %v1533, 3
        %vm1535 = vcmp.lt.s32.totalorder %v1534, 2
        %vm1536 = vcmp.eq.s32.totalorder %v1534, 0
        %v1537 = vxor.u32 %v1531, 2147483648
        %v1538 = vsel %vm1536, %v1530, %v1537
        %vm1539 = vcmp.eq.s32.totalorder %v1534, 2
        %v1540 = vxor.u32 %v1530, 2147483648
        %v1541 = vsel %vm1539, %v1540, %v1531
        %v1542 = vsel %vm1535, %v1538, %v1541
        %v1543 = vsel %vm1532, nan, %v1542
        %v1544 = vsub.f32 %v1439, %v1543
        %v1545 = vmul.f32 %v1544, 0.70710677
        %v1546 = vadd.f32 %v1439, %v1543
        %v1547 = vmul.f32 %v1546, 0.70710677
        %1549 = vset.pattern.permute.xlu0 0
        %1550 = vperm.xlu0 %1549, %v1547
        %v1551 = vpop.permute.xlu0 %1550
        %1554 = vset.pattern.permute.xlu0 0
        %1555 = vperm.xlu0 %1554, %v1545
        %v1556 = vpop.permute.xlu0 %1555
        %v1558 = vsel %vm331, %v1551, %v1556
        %1559 = vset.pattern.permute.xlu0 1
        %1560 = vperm.xlu0 %1559, %v1547
        %v1561 = vpop.permute.xlu0 %1560
        %1563 = vset.pattern.permute.xlu0 1
        %1564 = vperm.xlu0 %1563, %v1545
        %v1565 = vpop.permute.xlu0 %1564
        %v1567 = vsel %vm334, %v1561, %v1565
        %v1568 = vmul.f32 %v1558, %v1567
        %1569 = vset.pattern.permute.xlu0 2
        %1570 = vperm.xlu0 %1569, %v1547
        %v1571 = vpop.permute.xlu0 %1570
        %1573 = vset.pattern.permute.xlu0 2
        %1574 = vperm.xlu0 %1573, %v1545
        %v1575 = vpop.permute.xlu0 %1574
        %v1577 = vsel %vm337, %v1571, %v1575
        %v1578 = vmul.f32 %v1568, %v1577
        %1579 = vset.pattern.permute.xlu0 3
        %1580 = vperm.xlu0 %1579, %v1547
        %v1581 = vpop.permute.xlu0 %1580
        %1583 = vset.pattern.permute.xlu0 3
        %1584 = vperm.xlu0 %1583, %v1545
        %v1585 = vpop.permute.xlu0 %1584
        %v1587 = vsel %vm340, %v1581, %v1585
        %v1588 = vmul.f32 %v1578, %v1587
        %1589 = vset.pattern.permute.xlu0 4
        %1590 = vperm.xlu0 %1589, %v1547
        %v1591 = vpop.permute.xlu0 %1590
        %1593 = vset.pattern.permute.xlu0 4
        %1594 = vperm.xlu0 %1593, %v1545
        %v1595 = vpop.permute.xlu0 %1594
        %v1597 = vsel %vm343, %v1591, %v1595
        %v1598 = vmul.f32 %v1588, %v1597
        %1599 = vset.pattern.permute.xlu0 5
        %1600 = vperm.xlu0 %1599, %v1547
        %v1601 = vpop.permute.xlu0 %1600
        %1603 = vset.pattern.permute.xlu0 5
        %1604 = vperm.xlu0 %1603, %v1545
        %v1605 = vpop.permute.xlu0 %1604
        %v1607 = vsel %vm331, %v1601, %v1605
        %1608 = vset.pattern.permute.xlu0 6
        %1609 = vperm.xlu0 %1608, %v1547
        %v1610 = vpop.permute.xlu0 %1609
        %1612 = vset.pattern.permute.xlu0 6
        %1613 = vperm.xlu0 %1612, %v1545
        %v1614 = vpop.permute.xlu0 %1613
        %v1616 = vsel %vm334, %v1610, %v1614
        %v1617 = vmul.f32 %v1607, %v1616
        %1618 = vset.pattern.permute.xlu0 7
        %1619 = vperm.xlu0 %1618, %v1547
        %v1620 = vpop.permute.xlu0 %1619
        %1622 = vset.pattern.permute.xlu0 7
        %1623 = vperm.xlu0 %1622, %v1545
        %v1624 = vpop.permute.xlu0 %1623
        %v1626 = vsel %vm337, %v1620, %v1624
        %v1627 = vmul.f32 %v1617, %v1626
        %1628 = vset.pattern.permute.xlu0 8
        %1629 = vperm.xlu0 %1628, %v1547
        %v1630 = vpop.permute.xlu0 %1629
        %1632 = vset.pattern.permute.xlu0 8
        %1633 = vperm.xlu0 %1632, %v1545
        %v1634 = vpop.permute.xlu0 %1633
        %v1636 = vsel %vm340, %v1630, %v1634
        %v1637 = vmul.f32 %v1627, %v1636
        %1638 = vset.pattern.permute.xlu0 9
        %1639 = vperm.xlu0 %1638, %v1547
        %v1640 = vpop.permute.xlu0 %1639
        %1642 = vset.pattern.permute.xlu0 9
        %1643 = vperm.xlu0 %1642, %v1545
        %v1644 = vpop.permute.xlu0 %1643
        %v1646 = vsel %vm343, %v1640, %v1644
        %v1647 = vmul.f32 %v1637, %v1646
        %1648 = vset.pattern.permute.xlu0 10
        %1649 = vperm.xlu0 %1648, %v1547
        %v1650 = vpop.permute.xlu0 %1649
        %1652 = vset.pattern.permute.xlu0 10
        %1653 = vperm.xlu0 %1652, %v1545
        %v1654 = vpop.permute.xlu0 %1653
        %v1656 = vsel %vm331, %v1650, %v1654
        %1657 = vset.pattern.permute.xlu0 11
        %1658 = vperm.xlu0 %1657, %v1547
        %v1659 = vpop.permute.xlu0 %1658
        %1661 = vset.pattern.permute.xlu0 11
        %1662 = vperm.xlu0 %1661, %v1545
        %v1663 = vpop.permute.xlu0 %1662
        %v1665 = vsel %vm334, %v1659, %v1663
        %v1666 = vmul.f32 %v1656, %v1665
        %1667 = vset.pattern.permute.xlu0 12
        %1668 = vperm.xlu0 %1667, %v1547
        %v1669 = vpop.permute.xlu0 %1668
        %1671 = vset.pattern.permute.xlu0 12
        %1672 = vperm.xlu0 %1671, %v1545
        %v1673 = vpop.permute.xlu0 %1672
        %v1675 = vsel %vm337, %v1669, %v1673
        %v1676 = vmul.f32 %v1666, %v1675
        %1677 = vset.pattern.permute.xlu0 13
        %1678 = vperm.xlu0 %1677, %v1547
        %v1679 = vpop.permute.xlu0 %1678
        %1681 = vset.pattern.permute.xlu0 13
        %1682 = vperm.xlu0 %1681, %v1545
        %v1683 = vpop.permute.xlu0 %1682
        %v1685 = vsel %vm340, %v1679, %v1683
        %v1686 = vmul.f32 %v1676, %v1685
        %1687 = vset.pattern.permute.xlu0 14
        %1688 = vperm.xlu0 %1687, %v1547
        %v1689 = vpop.permute.xlu0 %1688
        %1691 = vset.pattern.permute.xlu0 14
        %1692 = vperm.xlu0 %1691, %v1545
        %v1693 = vpop.permute.xlu0 %1692
        %v1695 = vsel %vm343, %v1689, %v1693
        %v1696 = vmul.f32 %v1686, %v1695
        %1697 = vset.pattern.permute.xlu0 15
        %1698 = vperm.xlu0 %1697, %v1547
        %v1699 = vpop.permute.xlu0 %1698
        %1701 = vset.pattern.permute.xlu0 15
        %1702 = vperm.xlu0 %1701, %v1545
        %v1703 = vpop.permute.xlu0 %1702
        %v1705 = vsel %vm331, %v1699, %v1703
        %1706 = vset.pattern.permute.xlu0 16
        %1707 = vperm.xlu0 %1706, %v1547
        %v1708 = vpop.permute.xlu0 %1707
        %1710 = vset.pattern.permute.xlu0 16
        %1711 = vperm.xlu0 %1710, %v1545
        %v1712 = vpop.permute.xlu0 %1711
        %v1714 = vsel %vm334, %v1708, %v1712
        %v1715 = vmul.f32 %v1705, %v1714
        %1716 = vset.pattern.permute.xlu0 17
        %1717 = vperm.xlu0 %1716, %v1547
        %v1718 = vpop.permute.xlu0 %1717
        %1720 = vset.pattern.permute.xlu0 17
        %1721 = vperm.xlu0 %1720, %v1545
        %v1722 = vpop.permute.xlu0 %1721
        %v1724 = vsel %vm337, %v1718, %v1722
        %v1725 = vmul.f32 %v1715, %v1724
        %1726 = vset.pattern.permute.xlu0 18
        %1727 = vperm.xlu0 %1726, %v1547
        %v1728 = vpop.permute.xlu0 %1727
        %1730 = vset.pattern.permute.xlu0 18
        %1731 = vperm.xlu0 %1730, %v1545
        %v1732 = vpop.permute.xlu0 %1731
        %v1734 = vsel %vm340, %v1728, %v1732
        %v1735 = vmul.f32 %v1725, %v1734
        %1736 = vset.pattern.permute.xlu0 19
        %1737 = vperm.xlu0 %1736, %v1547
        %v1738 = vpop.permute.xlu0 %1737
        %1740 = vset.pattern.permute.xlu0 19
        %1741 = vperm.xlu0 %1740, %v1545
        %v1742 = vpop.permute.xlu0 %1741
        %v1744 = vsel %vm343, %v1738, %v1742
        %v1745 = vmul.f32 %v1735, %v1744
        %1747 = vrot.lane.b32.xlu0 %v1647, 32
        %v1748 = vpop.permute.xlu0 %1747
        %1751 = vrot.lane.b32.xlu0 %v1696, 64
        %v1752 = vpop.permute.xlu0 %1751
        %1755 = vrot.lane.b32.xlu0 %v1745, 96
        %v1756 = vpop.permute.xlu0 %1755
        %v1758 = vsel %vm929, %v1598, %v1748
        %v1759 = vsel %vm931, %v1758, %v1752
        %v1760 = vsel %vm933, %v1759, %v1756
        %v1761 = vld [vmem:[#allocation4] sm:$0xff]
        %v1762 = vld [vmem:[#allocation4 + $0x8] sm:$0xff]
        %v1763 = vld [vmem:[#allocation4 + $0x10] sm:$0xff]
        %v1764 = vld [vmem:[#allocation4 + $0x18] sm:$0xff]
        %v1765 = vld [vmem:[#allocation4 + $0x20] sm:$0xff]
        %v1766 = vld [vmem:[#allocation4 + $0x28] sm:$0xff]
        %v1767 = vld [vmem:[#allocation4 + $0x30] sm:$0xff]
        %v1768 = vld [vmem:[#allocation4 + $0x38] sm:$0xff]
        %v1769 = vld [vmem:[#allocation4 + $0x40] sm:$0xff]
        %v1770 = vld [vmem:[#allocation4 + $0x48] sm:$0xff]
        %v1771 = vld [vmem:[#allocation4 + $0x50] sm:$0xff]
        %v1772 = vld [vmem:[#allocation4 + $0x58] sm:$0xff]
        %v1773 = vld [vmem:[#allocation4 + $0x60] sm:$0xff]
        %v1774 = vld [vmem:[#allocation4 + $0x68] sm:$0xff]
        %v1775 = vld [vmem:[#allocation4 + $0x70] sm:$0xff]
        %v1776 = vld [vmem:[#allocation4 + $0x78] sm:$0xff]
        %v1777 = vld [vmem:[#allocation4 + $0x80] sm:$0xff]
        %v1778 = vld [vmem:[#allocation4 + $0x88] sm:$0xff]
        %v1779 = vld [vmem:[#allocation4 + $0x90] sm:$0xff]
        %v1780 = vld [vmem:[#allocation4 + $0x98] sm:$0xff]
        %v1781 = vld [vmem:[#allocation4 + $0xa0] sm:$0xff]
        %v1782 = vld [vmem:[#allocation4 + $0xa8] sm:$0xff]
        %v1783 = vld [vmem:[#allocation4 + $0xb0] sm:$0xff]
        %v1784 = vld [vmem:[#allocation4 + $0xb8] sm:$0xff]
        %v1785 = vld [vmem:[#allocation4 + $0xc0] sm:$0xff]
        %v1786 = vld [vmem:[#allocation4 + $0xc8] sm:$0xff]
        %v1787 = vld [vmem:[#allocation4 + $0xd0] sm:$0xff]
        %v1788 = vld [vmem:[#allocation4 + $0xd8] sm:$0xff]
        %v1789 = vld [vmem:[#allocation4 + $0xe0] sm:$0xff]
        %v1790 = vld [vmem:[#allocation4 + $0xe8] sm:$0xff]
        %v1791 = vld [vmem:[#allocation4 + $0xf0] sm:$0xff]
        %v1792 = vld [vmem:[#allocation4 + $0xf8] sm:$0xff]
        %1793 = vmatprep.subr.mxu0 %v1762
        %1794 = vmatpush1.msra.mxu0 %v1761
        %1795 = vmatprep.subr.mxu0 %v1764
        %1796 = vmatpush1.msra.mxu0 %v1763
        %1797 = vmatprep.subr.mxu0 %v1766
        %1798 = vmatpush1.msra.mxu0 %v1765
        %1799 = vmatprep.subr.mxu0 %v1768
        %1800 = vmatpush1.msra.mxu0 %v1767
        %1801 = vmatprep.subr.mxu0 %v1770
        %1802 = vmatpush1.msra.mxu0 %v1769
        %1803 = vmatprep.subr.mxu0 %v1772
        %1804 = vmatpush1.msra.mxu0 %v1771
        %1805 = vmatprep.subr.mxu0 %v1774
        %1806 = vmatpush1.msra.mxu0 %v1773
        %1807 = vmatprep.subr.mxu0 %v1776
        %1808 = vmatpush1.msra.mxu0 %v1775
        %1809 = vmatprep.subr.mxu0 %v1778
        %1810 = vmatpush1.msra.mxu0 %v1777
        %1811 = vmatprep.subr.mxu0 %v1780
        %1812 = vmatpush1.msra.mxu0 %v1779
        %1813 = vmatprep.subr.mxu0 %v1782
        %1814 = vmatpush1.msra.mxu0 %v1781
        %1815 = vmatprep.subr.mxu0 %v1784
        %1816 = vmatpush1.msra.mxu0 %v1783
        %1817 = vmatprep.subr.mxu0 %v1786
        %1818 = vmatpush1.msra.mxu0 %v1785
        %1819 = vmatprep.subr.mxu0 %v1788
        %1820 = vmatpush1.msra.mxu0 %v1787
        %1821 = vmatprep.subr.mxu0 %v1790
        %1822 = vmatpush1.msra.mxu0 %v1789
        %1823 = vmatprep.subr.mxu0 %v1792
        %1824 = vmatpush1.msra.mxu0 %v1791
        %1825 = vmatprep.subr.mxu0 0.0
        %1826 = vmatpush1.msra.mxu0 0.0
        %1827 = vmatprep.subr.mxu0 0.0
        %1828 = vmatpush1.msra.mxu0 0.0
        %1829 = vmatprep.subr.mxu0 0.0
        %1830 = vmatpush1.msra.mxu0 0.0
        %1831 = vmatprep.subr.mxu0 0.0
        %1832 = vmatpush1.msra.mxu0 0.0
        %1833 = vmatprep.subr.mxu0 0.0
        %1834 = vmatpush1.msra.mxu0 0.0
        %1835 = vmatprep.subr.mxu0 0.0
        %1836 = vmatpush1.msra.mxu0 0.0
        %1837 = vmatprep.subr.mxu0 0.0
        %1838 = vmatpush1.msra.mxu0 0.0
        %1839 = vmatprep.subr.mxu0 0.0
        %1840 = vmatpush1.msra.mxu0 0.0
        %1841 = vmatprep.subr.mxu0 0.0
        %1842 = vmatpush1.msra.mxu0 0.0
        %1843 = vmatprep.subr.mxu0 0.0
        %1844 = vmatpush1.msra.mxu0 0.0
        %1845 = vmatprep.subr.mxu0 0.0
        %1846 = vmatpush1.msra.mxu0 0.0
        %1847 = vmatprep.subr.mxu0 0.0
        %1848 = vmatpush1.msra.mxu0 0.0
        %1849 = vmatprep.subr.mxu0 0.0
        %1850 = vmatpush1.msra.mxu0 0.0
        %1851 = vmatprep.subr.mxu0 0.0
        %1852 = vmatpush1.msra.mxu0 0.0
        %1853 = vmatprep.subr.mxu0 0.0
        %1854 = vmatpush1.msra.mxu0 0.0
        %1855 = vmatprep.subr.mxu0 0.0
        %1856 = vmatpush1.msra.mxu0 0.0
        %1857 = vmatprep.mubr.f32.mxu0 0.0
        %1858 = vmatmul.mubr.f32.gmra.mrb[0].mxu0 %v1760
        %v1859 = vpop.f32.mrb[0].mxu0
        %v1860 = vadd.f32 0.0, %v1859
        %v1861 = vpop.f32.mrb[0].mxu0
        %v1862 = vadd.f32 0.0, %v1861
        %1863 = vdwg.mxu0
        %v1864 = vmul.f32 %v1860, %v1860
        %v1865 = vmul.f32 %v1862, %v1862
        %v1866 = vadd.f32 %v1864, %v1865
        %v1867 = vld [vmem:[%s5] sm:$0xff]
        %v1868 = vld [vmem:[%s5 + $0x8] sm:$0xff]
        %v1869 = vld [vmem:[%s5 + $0x10] sm:$0xff]
        %v1870 = vld [vmem:[%s5 + $0x18] sm:$0xff]
        %v1871 = vld [vmem:[%s5 + $0x20] sm:$0xff]
        %v1872 = vld [vmem:[%s5 + $0x28] sm:$0xff]
        %v1873 = vld [vmem:[%s5 + $0x30] sm:$0xff]
        %v1874 = vld [vmem:[%s5 + $0x38] sm:$0xff]
        %v1875 = vld [vmem:[%s5 + $0x40] sm:$0xff]
        %v1876 = vld [vmem:[%s5 + $0x48] sm:$0xff]
        %v1877 = vld [vmem:[%s5 + $0x50] sm:$0xff]
        %v1878 = vld [vmem:[%s5 + $0x58] sm:$0xff]
        %v1879 = vld [vmem:[%s5 + $0x60] sm:$0xff]
        %v1880 = vld [vmem:[%s5 + $0x68] sm:$0xff]
        %v1881 = vld [vmem:[%s5 + $0x70] sm:$0xff]
        %v1882 = vld [vmem:[%s5 + $0x78] sm:$0xff]
        %v1883 = vld [vmem:[%s6] sm:$0x1]
        %v1885 = vlaneseq
        %v1886 = vshrl.u32 %v1885, 7
        %v1887 = vsub.s32 0, %v1886
        %v1888 = vrot.slane %v1883, %v1887
        %1890 = vmatprep.subr.mxu0 0.0
        %1891 = vmatpush1.msra.mxu0 %v1867
        %1892 = vmatprep.subr.mxu0 0.0
        %1893 = vmatpush1.msra.mxu0 %v1868
        %1894 = vmatprep.subr.mxu0 0.0
        %1895 = vmatpush1.msra.mxu0 %v1869
        %1896 = vmatprep.subr.mxu0 0.0
        %1897 = vmatpush1.msra.mxu0 %v1870
        %1898 = vmatprep.subr.mxu0 0.0
        %1899 = vmatpush1.msra.mxu0 %v1871
        %1900 = vmatprep.subr.mxu0 0.0
        %1901 = vmatpush1.msra.mxu0 %v1872
        %1902 = vmatprep.subr.mxu0 0.0
        %1903 = vmatpush1.msra.mxu0 %v1873
        %1904 = vmatprep.subr.mxu0 0.0
        %1905 = vmatpush1.msra.mxu0 %v1874
        %1906 = vmatprep.subr.mxu0 0.0
        %1907 = vmatpush1.msra.mxu0 %v1875
        %1908 = vmatprep.subr.mxu0 0.0
        %1909 = vmatpush1.msra.mxu0 %v1876
        %1910 = vmatprep.subr.mxu0 0.0
        %1911 = vmatpush1.msra.mxu0 %v1877
        %1912 = vmatprep.subr.mxu0 0.0
        %1913 = vmatpush1.msra.mxu0 %v1878
        %1914 = vmatprep.subr.mxu0 0.0
        %1915 = vmatpush1.msra.mxu0 %v1879
        %1916 = vmatprep.subr.mxu0 0.0
        %1917 = vmatpush1.msra.mxu0 %v1880
        %1918 = vmatprep.subr.mxu0 0.0
        %1919 = vmatpush1.msra.mxu0 %v1881
        %1920 = vmatprep.subr.mxu0 0.0
        %1921 = vmatpush1.msra.mxu0 %v1882
        %1922 = vmatprep.subr.mxu0 0.0
        %1923 = vmatpush1.msra.mxu0 0.0
        %1924 = vmatprep.subr.mxu0 0.0
        %1925 = vmatpush1.msra.mxu0 0.0
        %1926 = vmatprep.subr.mxu0 0.0
        %1927 = vmatpush1.msra.mxu0 0.0
        %1928 = vmatprep.subr.mxu0 0.0
        %1929 = vmatpush1.msra.mxu0 0.0
        %1930 = vmatprep.subr.mxu0 0.0
        %1931 = vmatpush1.msra.mxu0 0.0
        %1932 = vmatprep.subr.mxu0 0.0
        %1933 = vmatpush1.msra.mxu0 0.0
        %1934 = vmatprep.subr.mxu0 0.0
        %1935 = vmatpush1.msra.mxu0 0.0
        %1936 = vmatprep.subr.mxu0 0.0
        %1937 = vmatpush1.msra.mxu0 0.0
        %1938 = vmatprep.subr.mxu0 0.0
        %1939 = vmatpush1.msra.mxu0 0.0
        %1940 = vmatprep.subr.mxu0 0.0
        %1941 = vmatpush1.msra.mxu0 0.0
        %1942 = vmatprep.subr.mxu0 0.0
        %1943 = vmatpush1.msra.mxu0 0.0
        %1944 = vmatprep.subr.mxu0 0.0
        %1945 = vmatpush1.msra.mxu0 0.0
        %1946 = vmatprep.subr.mxu0 0.0
        %1947 = vmatpush1.msra.mxu0 0.0
        %1948 = vmatprep.subr.mxu0 0.0
        %1949 = vmatpush1.msra.mxu0 0.0
        %1950 = vmatprep.subr.mxu0 0.0
        %1951 = vmatpush1.msra.mxu0 0.0
        %1952 = vmatprep.subr.mxu0 0.0
        %1953 = vmatpush1.msra.mxu0 0.0
        %1954 = vmatprep.mubr.f32.mxu0 0.0
        %1955 = vmatmul.mubr.f32.gmra.mrb[0].mxu0 %v1866
        %v1956 = vpop.f32.mrb[0].mxu0
        %v1957 = vadd.f32 %v1888, %v1956
        %v1958 = vpop.f32.mrb[0].mxu0
        %1959 = vdwg.mxu0
        %v1960 = vxor.u32 %v1957, 2147483648
        %v1961 = vmul.f32 %v1960, 1.442695
        %v1962 = vpow.pop %v1961
        %v1963 = vadd.f32 %v1962, 1.0
        %v1964 = vrcp.pop %v1963
        %v1965 = vmul.f32 1.0, %v1964
        %v1966 = vtanh.pop %v1957
        %1968 = vrot.lane.b32.xlu0 %v1175, 16
        %v1969 = vpop.permute.xlu0 %1968
        %v1971 = vmul.f32 %v1965, %v1969
        %1973 = vrot.lane.b32.xlu0 %v1966, 80
        %v1974 = vpop.permute.xlu0 %1973
        %v1976 = vmul.f32 %v1965, %v1974
        %1978 = vrot.lane.b32.xlu0 %v1976, 16
        %v1979 = vpop.permute.xlu0 %1978
        %v1981 = vadd.f32 %v1971, %v1979
        %v1982 = vtanh.pop %v1981
        %1984 = vrot.lane.b32.xlu0 %v1982, 16
        %v1985 = vpop.permute.xlu0 %1984
        %v1987 = vmul.f32 %v1965, %v1985
        %1989 = vrot.lane.b32.xlu0 %v1987, 96
        %v1990 = vpop.permute.xlu0 %1989
        %1992 = vst.msk [vmem:[#allocation2] sm:$0xf] %vm1166, %v1990
        %1994 = vrot.lane.b32.xlu0 %v1981, 112
        %v1995 = vpop.permute.xlu0 %1994
        %1997 = vst.msk [vmem:[#allocation3] sm:$0xf] %vm1166, %v1995
        %s1998 = scalar_lea.vmem %s311, 4 [#allocation7]
        %1999 = vst.msk [vmem:[%s1998] sm:$0xf] %vm1166, %v1990
        %v2000 = vld [vmem:[#allocation2] sm:$0xf]
        %v2001 = vld [vmem:[#allocation3] sm:$0xf]
        %s2002 = scalar_lea.vmem %s318, 8
        %v2003 = vld [vmem:[%s2002] sm:$0xf]
        %v2004 = vld [vmem:[%s1] sm:$0xff]
        %v2005 = vld [vmem:[%s1 + $0x8] sm:$0xff]
        %v2006 = vld [vmem:[%s2] sm:$0xff]
        %v2008 = vsel %vm350, %v2003, 0
        %2010 = vmatprep.subr.mxu0 0.0
        %2011 = vmatpush1.msra.mxu0 %v2006
        %2012 = vmatprep.subr.mxu0 0.0
        %2013 = vmatpush1.msra.mxu0 0.0
        %2014 = vmatprep.subr.mxu0 0.0
        %2015 = vmatpush1.msra.mxu0 0.0
        %2016 = vmatprep.subr.mxu0 0.0
        %2017 = vmatpush1.msra.mxu0 0.0
        %2018 = vmatprep.subr.mxu0 0.0
        %2019 = vmatpush1.msra.mxu0 0.0
        %2020 = vmatprep.subr.mxu0 0.0
        %2021 = vmatpush1.msra.mxu0 0.0
        %2022 = vmatprep.subr.mxu0 0.0
        %2023 = vmatpush1.msra.mxu0 0.0
        %2024 = vmatprep.subr.mxu0 0.0
        %2025 = vmatpush1.msra.mxu0 0.0
        %2026 = vmatprep.subr.mxu0 0.0
        %2027 = vmatpush1.msra.mxu0 0.0
        %2028 = vmatprep.subr.mxu0 0.0
        %2029 = vmatpush1.msra.mxu0 0.0
        %2030 = vmatprep.subr.mxu0 0.0
        %2031 = vmatpush1.msra.mxu0 0.0
        %2032 = vmatprep.subr.mxu0 0.0
        %2033 = vmatpush1.msra.mxu0 0.0
        %2034 = vmatprep.subr.mxu0 0.0
        %2035 = vmatpush1.msra.mxu0 0.0
        %2036 = vmatprep.subr.mxu0 0.0
        %2037 = vmatpush1.msra.mxu0 0.0
        %2038 = vmatprep.subr.mxu0 0.0
        %2039 = vmatpush1.msra.mxu0 0.0
        %2040 = vmatprep.subr.mxu0 0.0
        %2041 = vmatpush1.msra.mxu0 0.0
        %2042 = vmatprep.subr.mxu0 0.0
        %2043 = vmatpush1.msra.mxu0 0.0
        %2044 = vmatprep.subr.mxu0 0.0
        %2045 = vmatpush1.msra.mxu0 0.0
        %2046 = vmatprep.subr.mxu0 0.0
        %2047 = vmatpush1.msra.mxu0 0.0
        %2048 = vmatprep.subr.mxu0 0.0
        %2049 = vmatpush1.msra.mxu0 0.0
        %2050 = vmatprep.subr.mxu0 0.0
        %2051 = vmatpush1.msra.mxu0 0.0
        %2052 = vmatprep.subr.mxu0 0.0
        %2053 = vmatpush1.msra.mxu0 0.0
        %2054 = vmatprep.subr.mxu0 0.0
        %2055 = vmatpush1.msra.mxu0 0.0
        %2056 = vmatprep.subr.mxu0 0.0
        %2057 = vmatpush1.msra.mxu0 0.0
        %2058 = vmatprep.subr.mxu0 0.0
        %2059 = vmatpush1.msra.mxu0 0.0
        %2060 = vmatprep.subr.mxu0 0.0
        %2061 = vmatpush1.msra.mxu0 0.0
        %2062 = vmatprep.subr.mxu0 0.0
        %2063 = vmatpush1.msra.mxu0 0.0
        %2064 = vmatprep.subr.mxu0 0.0
        %2065 = vmatpush1.msra.mxu0 0.0
        %2066 = vmatprep.subr.mxu0 0.0
        %2067 = vmatpush1.msra.mxu0 0.0
        %2068 = vmatprep.subr.mxu0 0.0
        %2069 = vmatpush1.msra.mxu0 0.0
        %2070 = vmatprep.subr.mxu0 0.0
        %2071 = vmatpush1.msra.mxu0 0.0
        %2072 = vmatprep.subr.mxu0 0.0
        %2073 = vmatpush1.msra.mxu0 0.0
        %2074 = vmatprep.mubr.f32.mxu0 0.0
        %2075 = vmatmul.mubr.f32.gmra.mrb[0].mxu0 %v2008
        %v2076 = vpop.f32.mrb[0].mxu0
        %v2077 = vadd.f32 0.0, %v2076
        %v2078 = vpop.f32.mrb[0].mxu0
        %2079 = vdwg.mxu0
        %v2081 = vsel %vm424, %v2000, 0
        %2083 = vmatprep.subr.mxu0 0.0
        %2084 = vmatpush1.msra.mxu0 %v2004
        %2085 = vmatprep.subr.mxu0 0.0
        %2086 = vmatpush1.msra.mxu0 %v2005
        %2087 = vmatprep.subr.mxu0 0.0
        %2088 = vmatpush1.msra.mxu0 0.0
        %2089 = vmatprep.subr.mxu0 0.0
        %2090 = vmatpush1.msra.mxu0 0.0
        %2091 = vmatprep.subr.mxu0 0.0
        %2092 = vmatpush1.msra.mxu0 0.0
        %2093 = vmatprep.subr.mxu0 0.0
        %2094 = vmatpush1.msra.mxu0 0.0
        %2095 = vmatprep.subr.mxu0 0.0
        %2096 = vmatpush1.msra.mxu0 0.0
        %2097 = vmatprep.subr.mxu0 0.0
        %2098 = vmatpush1.msra.mxu0 0.0
        %2099 = vmatprep.subr.mxu0 0.0
        %2100 = vmatpush1.msra.mxu0 0.0
        %2101 = vmatprep.subr.mxu0 0.0
        %2102 = vmatpush1.msra.mxu0 0.0
        %2103 = vmatprep.subr.mxu0 0.0
        %2104 = vmatpush1.msra.mxu0 0.0
        %2105 = vmatprep.subr.mxu0 0.0
        %2106 = vmatpush1.msra.mxu0 0.0
        %2107 = vmatprep.subr.mxu0 0.0
        %2108 = vmatpush1.msra.mxu0 0.0
        %2109 = vmatprep.subr.mxu0 0.0
        %2110 = vmatpush1.msra.mxu0 0.0
        %2111 = vmatprep.subr.mxu0 0.0
        %2112 = vmatpush1.msra.mxu0 0.0
        %2113 = vmatprep.subr.mxu0 0.0
        %2114 = vmatpush1.msra.mxu0 0.0
        %2115 = vmatprep.subr.mxu0 0.0
        %2116 = vmatpush1.msra.mxu0 0.0
        %2117 = vmatprep.subr.mxu0 0.0
        %2118 = vmatpush1.msra.mxu0 0.0
        %2119 = vmatprep.subr.mxu0 0.0
        %2120 = vmatpush1.msra.mxu0 0.0
        %2121 = vmatprep.subr.mxu0 0.0
        %2122 = vmatpush1.msra.mxu0 0.0
        %2123 = vmatprep.subr.mxu0 0.0
        %2124 = vmatpush1.msra.mxu0 0.0
        %2125 = vmatprep.subr.mxu0 0.0
        %2126 = vmatpush1.msra.mxu0 0.0
        %2127 = vmatprep.subr.mxu0 0.0
        %2128 = vmatpush1.msra.mxu0 0.0
        %2129 = vmatprep.subr.mxu0 0.0
        %2130 = vmatpush1.msra.mxu0 0.0
        %2131 = vmatprep.subr.mxu0 0.0
        %2132 = vmatpush1.msra.mxu0 0.0
        %2133 = vmatprep.subr.mxu0 0.0
        %2134 = vmatpush1.msra.mxu0 0.0
        %2135 = vmatprep.subr.mxu0 0.0
        %2136 = vmatpush1.msra.mxu0 0.0
        %2137 = vmatprep.subr.mxu0 0.0
        %2138 = vmatpush1.msra.mxu0 0.0
        %2139 = vmatprep.subr.mxu0 0.0
        %2140 = vmatpush1.msra.mxu0 0.0
        %2141 = vmatprep.subr.mxu0 0.0
        %2142 = vmatpush1.msra.mxu0 0.0
        %2143 = vmatprep.subr.mxu0 0.0
        %2144 = vmatpush1.msra.mxu0 0.0
        %2145 = vmatprep.subr.mxu0 0.0
        %2146 = vmatpush1.msra.mxu0 0.0
        %2147 = vmatprep.mubr.f32.mxu0 0.0
        %2148 = vmatmul.mubr.f32.gmra.mrb[0].mxu0 %v2081
        %v2149 = vpop.f32.mrb[0].mxu0
        %v2150 = vadd.f32 %v2077, %v2149
        %v2151 = vpop.f32.mrb[0].mxu0
        %2152 = vdwg.mxu0
        %v2153 = vld [vmem:[%s3] sm:$0x1]
        %v2155 = vlaneseq
        %v2156 = vshrl.u32 %v2155, 7
        %v2157 = vsub.s32 0, %v2156
        %v2158 = vrot.slane %v2153, %v2157
        %v2160 = vadd.f32 %v2150, %v2158
        %v2161 = vmul.f32 %v2160, 1.5707964
        %v2162 = vmul.f32 %v2161, 0.5
        %v2163 = vand.u32 2147483647, %v2162
        %vm2164 = vcmp.le.f32.partialorder %v2163, 0.7853982
        %vm2165 = vcmp.lt.s32.totalorder %v2162, 0
        %v2166 = vand.u32 %v2162, 2139095040
        %v2167 = vshrl.u32 %v2166, 23
        %v2168 = vsub.s32 %v2167, 127
        %v2169 = vand.u32 2147483647, %v2162
        %v2170 = vand.u32 %v2169, 8388607
        %v2171 = vor.u32 %v2170, 8388608
        %v2172 = vsub.s32 0, %v2171
        %v2173 = vadd.s32 %v2168, 1
        %vm2174 = vcmp.gt.s32.totalorder %v2173, 0
        %v2175 = vsel %vm2174, %v2173, 0
        %v2176 = vshrl.u32 %v2175, 5
        %v2177 = vand.u32 %v2175, 31
        %v2178 = vsub.s32 32, %v2177
        %v2179 = vshrl.u32 683565275, %v2178
        %v2180 = vshll.u32 683565275, %v2177
        %v2181 = vshrl.u32 2475754826, %v2178
        %v2182 = vor.u32 %v2180, %v2181
        %v2183 = vshll.u32 2475754826, %v2177
        %v2184 = vshrl.u32 2131351028, %v2178
        %v2185 = vor.u32 %v2183, %v2184
        %v2186 = vshll.u32 2131351028, %v2177
        %v2187 = vshrl.u32 2102212464, %v2178
        %v2188 = vor.u32 %v2186, %v2187
        %v2189 = vshll.u32 2102212464, %v2177
        %v2190 = vshrl.u32 920167782, %v2178
        %v2191 = vor.u32 %v2189, %v2190
        %v2192 = vshll.u32 920167782, %v2177
        %v2193 = vshrl.u32 1326507024, %v2178
        %v2194 = vor.u32 %v2192, %v2193
        %vm2195 = vcmp.lt.s32.totalorder %v2176, 1
        %vm2196 = vcmp.lt.s32.totalorder %v2176, 2
        %vm2197 = vcmp.lt.s32.totalorder %v2176, 3
        %vm2198 = vcmp.lt.s32.totalorder %v2176, 4
        %v2199 = vsel %vm2195, %v2179, %v2182
        %v2200 = vsel %vm2198, %v2188, 2102212464
        %v2201 = vsel %vm2197, %v2185, %v2200
        %v2202 = vsel %vm2196, %v2199, %v2201
        %v2203 = vsel %vm2195, %v2182, %v2185
        %v2204 = vsel %vm2198, %v2191, 920167782
        %v2205 = vsel %vm2197, %v2188, %v2204
        %v2206 = vsel %vm2196, %v2203, %v2205
        %v2207 = vsel %vm2195, %v2185, %v2188
        %v2208 = vsel %vm2198, %v2194, 1326507024
        %v2209 = vsel %vm2197, %v2191, %v2208
        %v2210 = vsel %vm2196, %v2207, %v2209
        %v2211 = vshll.u32 %v2171, 8
        %v2212 = vmul.u32.u64.compose %v2211, %v2210
        %v2213 = vextract.low.u32 %v2212
        %v2214 = vextract.high.u32 %v2212
        %v2215 = vmul.u32.u64.compose %v2211, %v2206
        %v2216 = vextract.low.u32 %v2215
        %v2217 = vextract.high.u32 %v2215
        %v2218 = vmul.u32 %v2211, %v2202
        %v2219 = vadd.s32 %v2214, %v2216
        %vm2220 = vc.u32 %v2214, %v2216
        %v2221 = vadd.s32 %v2217, 1
        %v2222 = vsel %vm2220, %v2221, %v2217
        %v2223 = vadd.s32 %v2218, %v2222
        %v2224 = vadd.s32 %v2223, 536870912
        %v2225 = vshrl.u32 %v2224, 30
        %v2226 = vshll.u32 %v2225, 30
        %v2227 = vsub.s32 %v2223, %v2226
        %vm2228 = vcmp.lt.s32.totalorder %v2227, 0
        %v2229 = vsub.s32 0, %v2227
        %v2230 = vsel %vm2228, %v2229, %v2227
        %v2231 = vclz %v2230
        %v2232 = vsub.s32 %v2231, 2
        %vm2233 = vcmp.gt.s32.totalorder 0, %v2232
        %v2234 = vsel %vm2233, 0, %v2232
        %v2235 = vsub.s32 32, %v2234
        %v2236 = vshll.u32 %v2227, %v2234
        %v2237 = vshrl.u32 %v2219, %v2235
        %v2238 = vor.u32 %v2236, %v2237
        %v2239 = vsub.s32 4294967266, %v2234
        %v2240 = vadd.s32 %v2239, 127
        %v2241 = vshll.u32 %v2240, 23
        %v2242 = vor.u32 4788187, %v2241
        %v2243 = vand.u32 2147483647, %v2242
        %v2245 = vcvt.s32.f32 %v2238
        %v2246 = vmul.f32 %v2245, %v2243
        %v2247 = vxor.u32 %v2246, 2147483648
        %v2248 = vsel %vm2165, %v2247, %v2246
        %v2249 = vsub.s32 4, %v2225
        %v2250 = vsel %vm2165, %v2249, %v2225
        %v2251 = vsel %vm2164, %v2162, %v2248
        %v2252 = vsel %vm2164, 0, %v2250
        %v2253 = vcosq.f32.pop %v2251
        %v2254 = vsinq.f32.pop %v2251
        %vm2255 = vweird.f32 %v2162
        %v2256 = vand.u32 %v2252, 3
        %vm2257 = vcmp.lt.s32.totalorder %v2256, 2
        %vm2258 = vcmp.eq.s32.totalorder %v2256, 0
        %v2259 = vxor.u32 %v2254, 2147483648
        %v2260 = vsel %vm2258, %v2253, %v2259
        %vm2261 = vcmp.eq.s32.totalorder %v2256, 2
        %v2262 = vxor.u32 %v2253, 2147483648
        %v2263 = vsel %vm2261, %v2262, %v2254
        %v2264 = vsel %vm2257, %v2260, %v2263
        %v2265 = vsel %vm2255, nan, %v2264
        %v2266 = vand.u32 2147483647, %v2162
        %vm2267 = vcmp.le.f32.partialorder %v2266, 0.7853982
        %vm2268 = vcmp.lt.s32.totalorder %v2162, 0
        %v2269 = vand.u32 %v2162, 2139095040
        %v2270 = vshrl.u32 %v2269, 23
        %v2271 = vsub.s32 %v2270, 127
        %v2272 = vand.u32 2147483647, %v2162
        %v2273 = vand.u32 %v2272, 8388607
        %v2274 = vor.u32 %v2273, 8388608
        %v2275 = vsub.s32 0, %v2274
        %v2276 = vadd.s32 %v2271, 1
        %vm2277 = vcmp.gt.s32.totalorder %v2276, 0
        %v2278 = vsel %vm2277, %v2276, 0
        %v2279 = vshrl.u32 %v2278, 5
        %v2280 = vand.u32 %v2278, 31
        %v2281 = vsub.s32 32, %v2280
        %v2282 = vshrl.u32 683565275, %v2281
        %v2283 = vshll.u32 683565275, %v2280
        %v2284 = vshrl.u32 2475754826, %v2281
        %v2285 = vor.u32 %v2283, %v2284
        %v2286 = vshll.u32 2475754826, %v2280
        %v2287 = vshrl.u32 2131351028, %v2281
        %v2288 = vor.u32 %v2286, %v2287
        %v2289 = vshll.u32 2131351028, %v2280
        %v2290 = vshrl.u32 2102212464, %v2281
        %v2291 = vor.u32 %v2289, %v2290
        %v2292 = vshll.u32 2102212464, %v2280
        %v2293 = vshrl.u32 920167782, %v2281
        %v2294 = vor.u32 %v2292, %v2293
        %v2295 = vshll.u32 920167782, %v2280
        %v2296 = vshrl.u32 1326507024, %v2281
        %v2297 = vor.u32 %v2295, %v2296
        %vm2298 = vcmp.lt.s32.totalorder %v2279, 1
        %vm2299 = vcmp.lt.s32.totalorder %v2279, 2
        %vm2300 = vcmp.lt.s32.totalorder %v2279, 3
        %vm2301 = vcmp.lt.s32.totalorder %v2279, 4
        %v2302 = vsel %vm2298, %v2282, %v2285
        %v2303 = vsel %vm2301, %v2291, 2102212464
        %v2304 = vsel %vm2300, %v2288, %v2303
        %v2305 = vsel %vm2299, %v2302, %v2304
        %v2306 = vsel %vm2298, %v2285, %v2288
        %v2307 = vsel %vm2301, %v2294, 920167782
        %v2308 = vsel %vm2300, %v2291, %v2307
        %v2309 = vsel %vm2299, %v2306, %v2308
        %v2310 = vsel %vm2298, %v2288, %v2291
        %v2311 = vsel %vm2301, %v2297, 1326507024
        %v2312 = vsel %vm2300, %v2294, %v2311
        %v2313 = vsel %vm2299, %v2310, %v2312
        %v2314 = vshll.u32 %v2274, 8
        %v2315 = vmul.u32.u64.compose %v2314, %v2313
        %v2316 = vextract.low.u32 %v2315
        %v2317 = vextract.high.u32 %v2315
        %v2318 = vmul.u32.u64.compose %v2314, %v2309
        %v2319 = vextract.low.u32 %v2318
        %v2320 = vextract.high.u32 %v2318
        %v2321 = vmul.u32 %v2314, %v2305
        %v2322 = vadd.s32 %v2317, %v2319
        %vm2323 = vc.u32 %v2317, %v2319
        %v2324 = vadd.s32 %v2320, 1
        %v2325 = vsel %vm2323, %v2324, %v2320
        %v2326 = vadd.s32 %v2321, %v2325
        %v2327 = vadd.s32 %v2326, 536870912
        %v2328 = vshrl.u32 %v2327, 30
        %v2329 = vshll.u32 %v2328, 30
        %v2330 = vsub.s32 %v2326, %v2329
        %vm2331 = vcmp.lt.s32.totalorder %v2330, 0
        %v2332 = vsub.s32 0, %v2330
        %v2333 = vsel %vm2331, %v2332, %v2330
        %v2334 = vclz %v2333
        %v2335 = vsub.s32 %v2334, 2
        %vm2336 = vcmp.gt.s32.totalorder 0, %v2335
        %v2337 = vsel %vm2336, 0, %v2335
        %v2338 = vsub.s32 32, %v2337
        %v2339 = vshll.u32 %v2330, %v2337
        %v2340 = vshrl.u32 %v2322, %v2338
        %v2341 = vor.u32 %v2339, %v2340
        %v2342 = vsub.s32 4294967266, %v2337
        %v2343 = vadd.s32 %v2342, 127
        %v2344 = vshll.u32 %v2343, 23
        %v2345 = vor.u32 4788187, %v2344
        %v2346 = vand.u32 2147483647, %v2345
        %v2348 = vcvt.s32.f32 %v2341
        %v2349 = vmul.f32 %v2348, %v2346
        %v2350 = vxor.u32 %v2349, 2147483648
        %v2351 = vsel %vm2268, %v2350, %v2349
        %v2352 = vsub.s32 4, %v2328
        %v2353 = vsel %vm2268, %v2352, %v2328
        %v2354 = vsel %vm2267, %v2162, %v2351
        %v2355 = vsel %vm2267, 0, %v2353
        %v2356 = vcosq.f32.pop %v2354
        %v2357 = vsinq.f32.pop %v2354
        %vm2358 = vweird.f32 %v2162
        %v2359 = vadd.s32 %v2355, 3
        %v2360 = vand.u32 %v2359, 3
        %vm2361 = vcmp.lt.s32.totalorder %v2360, 2
        %vm2362 = vcmp.eq.s32.totalorder %v2360, 0
        %v2363 = vxor.u32 %v2357, 2147483648
        %v2364 = vsel %vm2362, %v2356, %v2363
        %vm2365 = vcmp.eq.s32.totalorder %v2360, 2
        %v2366 = vxor.u32 %v2356, 2147483648
        %v2367 = vsel %vm2365, %v2366, %v2357
        %v2368 = vsel %vm2361, %v2364, %v2367
        %v2369 = vsel %vm2358, nan, %v2368
        %v2370 = vsub.f32 %v2265, %v2369
        %v2371 = vmul.f32 %v2370, 0.70710677
        %v2372 = vadd.f32 %v2265, %v2369
        %v2373 = vmul.f32 %v2372, 0.70710677
        %2375 = vset.pattern.permute.xlu0 0
        %2376 = vperm.xlu0 %2375, %v2373
        %v2377 = vpop.permute.xlu0 %2376
        %2380 = vset.pattern.permute.xlu0 0
        %2381 = vperm.xlu0 %2380, %v2371
        %v2382 = vpop.permute.xlu0 %2381
        %v2384 = vsel %vm331, %v2377, %v2382
        %2385 = vset.pattern.permute.xlu0 1
        %2386 = vperm.xlu0 %2385, %v2373
        %v2387 = vpop.permute.xlu0 %2386
        %2389 = vset.pattern.permute.xlu0 1
        %2390 = vperm.xlu0 %2389, %v2371
        %v2391 = vpop.permute.xlu0 %2390
        %v2393 = vsel %vm334, %v2387, %v2391
        %v2394 = vmul.f32 %v2384, %v2393
        %2395 = vset.pattern.permute.xlu0 2
        %2396 = vperm.xlu0 %2395, %v2373
        %v2397 = vpop.permute.xlu0 %2396
        %2399 = vset.pattern.permute.xlu0 2
        %2400 = vperm.xlu0 %2399, %v2371
        %v2401 = vpop.permute.xlu0 %2400
        %v2403 = vsel %vm337, %v2397, %v2401
        %v2404 = vmul.f32 %v2394, %v2403
        %2405 = vset.pattern.permute.xlu0 3
        %2406 = vperm.xlu0 %2405, %v2373
        %v2407 = vpop.permute.xlu0 %2406
        %2409 = vset.pattern.permute.xlu0 3
        %2410 = vperm.xlu0 %2409, %v2371
        %v2411 = vpop.permute.xlu0 %2410
        %v2413 = vsel %vm340, %v2407, %v2411
        %v2414 = vmul.f32 %v2404, %v2413
        %2415 = vset.pattern.permute.xlu0 4
        %2416 = vperm.xlu0 %2415, %v2373
        %v2417 = vpop.permute.xlu0 %2416
        %2419 = vset.pattern.permute.xlu0 4
        %2420 = vperm.xlu0 %2419, %v2371
        %v2421 = vpop.permute.xlu0 %2420
        %v2423 = vsel %vm343, %v2417, %v2421
        %v2424 = vmul.f32 %v2414, %v2423
        %2425 = vset.pattern.permute.xlu0 5
        %2426 = vperm.xlu0 %2425, %v2373
        %v2427 = vpop.permute.xlu0 %2426
        %2429 = vset.pattern.permute.xlu0 5
        %2430 = vperm.xlu0 %2429, %v2371
        %v2431 = vpop.permute.xlu0 %2430
        %v2433 = vsel %vm331, %v2427, %v2431
        %2434 = vset.pattern.permute.xlu0 6
        %2435 = vperm.xlu0 %2434, %v2373
        %v2436 = vpop.permute.xlu0 %2435
        %2438 = vset.pattern.permute.xlu0 6
        %2439 = vperm.xlu0 %2438, %v2371
        %v2440 = vpop.permute.xlu0 %2439
        %v2442 = vsel %vm334, %v2436, %v2440
        %v2443 = vmul.f32 %v2433, %v2442
        %2444 = vset.pattern.permute.xlu0 7
        %2445 = vperm.xlu0 %2444, %v2373
        %v2446 = vpop.permute.xlu0 %2445
        %2448 = vset.pattern.permute.xlu0 7
        %2449 = vperm.xlu0 %2448, %v2371
        %v2450 = vpop.permute.xlu0 %2449
        %v2452 = vsel %vm337, %v2446, %v2450
        %v2453 = vmul.f32 %v2443, %v2452
        %2454 = vset.pattern.permute.xlu0 8
        %2455 = vperm.xlu0 %2454, %v2373
        %v2456 = vpop.permute.xlu0 %2455
        %2458 = vset.pattern.permute.xlu0 8
        %2459 = vperm.xlu0 %2458, %v2371
        %v2460 = vpop.permute.xlu0 %2459
        %v2462 = vsel %vm340, %v2456, %v2460
        %v2463 = vmul.f32 %v2453, %v2462
        %2464 = vset.pattern.permute.xlu0 9
        %2465 = vperm.xlu0 %2464, %v2373
        %v2466 = vpop.permute.xlu0 %2465
        %2468 = vset.pattern.permute.xlu0 9
        %2469 = vperm.xlu0 %2468, %v2371
        %v2470 = vpop.permute.xlu0 %2469
        %v2472 = vsel %vm343, %v2466, %v2470
        %v2473 = vmul.f32 %v2463, %v2472
        %2474 = vset.pattern.permute.xlu0 10
        %2475 = vperm.xlu0 %2474, %v2373
        %v2476 = vpop.permute.xlu0 %2475
        %2478 = vset.pattern.permute.xlu0 10
        %2479 = vperm.xlu0 %2478, %v2371
        %v2480 = vpop.permute.xlu0 %2479
        %v2482 = vsel %vm331, %v2476, %v2480
        %2483 = vset.pattern.permute.xlu0 11
        %2484 = vperm.xlu0 %2483, %v2373
        %v2485 = vpop.permute.xlu0 %2484
        %2487 = vset.pattern.permute.xlu0 11
        %2488 = vperm.xlu0 %2487, %v2371
        %v2489 = vpop.permute.xlu0 %2488
        %v2491 = vsel %vm334, %v2485, %v2489
        %v2492 = vmul.f32 %v2482, %v2491
        %2493 = vset.pattern.permute.xlu0 12
        %2494 = vperm.xlu0 %2493, %v2373
        %v2495 = vpop.permute.xlu0 %2494
        %2497 = vset.pattern.permute.xlu0 12
        %2498 = vperm.xlu0 %2497, %v2371
        %v2499 = vpop.permute.xlu0 %2498
        %v2501 = vsel %vm337, %v2495, %v2499
        %v2502 = vmul.f32 %v2492, %v2501
        %2503 = vset.pattern.permute.xlu0 13
        %2504 = vperm.xlu0 %2503, %v2373
        %v2505 = vpop.permute.xlu0 %2504
        %2507 = vset.pattern.permute.xlu0 13
        %2508 = vperm.xlu0 %2507, %v2371
        %v2509 = vpop.permute.xlu0 %2508
        %v2511 = vsel %vm340, %v2505, %v2509
        %v2512 = vmul.f32 %v2502, %v2511
        %2513 = vset.pattern.permute.xlu0 14
        %2514 = vperm.xlu0 %2513, %v2373
        %v2515 = vpop.permute.xlu0 %2514
        %2517 = vset.pattern.permute.xlu0 14
        %2518 = vperm.xlu0 %2517, %v2371
        %v2519 = vpop.permute.xlu0 %2518
        %v2521 = vsel %vm343, %v2515, %v2519
        %v2522 = vmul.f32 %v2512, %v2521
        %2523 = vset.pattern.permute.xlu0 15
        %2524 = vperm.xlu0 %2523, %v2373
        %v2525 = vpop.permute.xlu0 %2524
        %2527 = vset.pattern.permute.xlu0 15
        %2528 = vperm.xlu0 %2527, %v2371
        %v2529 = vpop.permute.xlu0 %2528
        %v2531 = vsel %vm331, %v2525, %v2529
        %2532 = vset.pattern.permute.xlu0 16
        %2533 = vperm.xlu0 %2532, %v2373
        %v2534 = vpop.permute.xlu0 %2533
        %2536 = vset.pattern.permute.xlu0 16
        %2537 = vperm.xlu0 %2536, %v2371
        %v2538 = vpop.permute.xlu0 %2537
        %v2540 = vsel %vm334, %v2534, %v2538
        %v2541 = vmul.f32 %v2531, %v2540
        %2542 = vset.pattern.permute.xlu0 17
        %2543 = vperm.xlu0 %2542, %v2373
        %v2544 = vpop.permute.xlu0 %2543
        %2546 = vset.pattern.permute.xlu0 17
        %2547 = vperm.xlu0 %2546, %v2371
        %v2548 = vpop.permute.xlu0 %2547
        %v2550 = vsel %vm337, %v2544, %v2548
        %v2551 = vmul.f32 %v2541, %v2550
        %2552 = vset.pattern.permute.xlu0 18
        %2553 = vperm.xlu0 %2552, %v2373
        %v2554 = vpop.permute.xlu0 %2553
        %2556 = vset.pattern.permute.xlu0 18
        %2557 = vperm.xlu0 %2556, %v2371
        %v2558 = vpop.permute.xlu0 %2557
        %v2560 = vsel %vm340, %v2554, %v2558
        %v2561 = vmul.f32 %v2551, %v2560
        %2562 = vset.pattern.permute.xlu0 19
        %2563 = vperm.xlu0 %2562, %v2373
        %v2564 = vpop.permute.xlu0 %2563
        %2566 = vset.pattern.permute.xlu0 19
        %2567 = vperm.xlu0 %2566, %v2371
        %v2568 = vpop.permute.xlu0 %2567
        %v2570 = vsel %vm343, %v2564, %v2568
        %v2571 = vmul.f32 %v2561, %v2570
        %2573 = vrot.lane.b32.xlu0 %v2473, 32
        %v2574 = vpop.permute.xlu0 %2573
        %2577 = vrot.lane.b32.xlu0 %v2522, 64
        %v2578 = vpop.permute.xlu0 %2577
        %2581 = vrot.lane.b32.xlu0 %v2571, 96
        %v2582 = vpop.permute.xlu0 %2581
        %v2584 = vsel %vm929, %v2424, %v2574
        %v2585 = vsel %vm931, %v2584, %v2578
        %v2586 = vsel %vm933, %v2585, %v2582
        %v2587 = vld [vmem:[#allocation4] sm:$0xff]
        %v2588 = vld [vmem:[#allocation4 + $0x8] sm:$0xff]
        %v2589 = vld [vmem:[#allocation4 + $0x10] sm:$0xff]
        %v2590 = vld [vmem:[#allocation4 + $0x18] sm:$0xff]
        %v2591 = vld [vmem:[#allocation4 + $0x20] sm:$0xff]
        %v2592 = vld [vmem:[#allocation4 + $0x28] sm:$0xff]
        %v2593 = vld [vmem:[#allocation4 + $0x30] sm:$0xff]
        %v2594 = vld [vmem:[#allocation4 + $0x38] sm:$0xff]
        %v2595 = vld [vmem:[#allocation4 + $0x40] sm:$0xff]
        %v2596 = vld [vmem:[#allocation4 + $0x48] sm:$0xff]
        %v2597 = vld [vmem:[#allocation4 + $0x50] sm:$0xff]
        %v2598 = vld [vmem:[#allocation4 + $0x58] sm:$0xff]
        %v2599 = vld [vmem:[#allocation4 + $0x60] sm:$0xff]
        %v2600 = vld [vmem:[#allocation4 + $0x68] sm:$0xff]
        %v2601 = vld [vmem:[#allocation4 + $0x70] sm:$0xff]
        %v2602 = vld [vmem:[#allocation4 + $0x78] sm:$0xff]
        %v2603 = vld [vmem:[#allocation4 + $0x80] sm:$0xff]
        %v2604 = vld [vmem:[#allocation4 + $0x88] sm:$0xff]
        %v2605 = vld [vmem:[#allocation4 + $0x90] sm:$0xff]
        %v2606 = vld [vmem:[#allocation4 + $0x98] sm:$0xff]
        %v2607 = vld [vmem:[#allocation4 + $0xa0] sm:$0xff]
        %v2608 = vld [vmem:[#allocation4 + $0xa8] sm:$0xff]
        %v2609 = vld [vmem:[#allocation4 + $0xb0] sm:$0xff]
        %v2610 = vld [vmem:[#allocation4 + $0xb8] sm:$0xff]
        %v2611 = vld [vmem:[#allocation4 + $0xc0] sm:$0xff]
        %v2612 = vld [vmem:[#allocation4 + $0xc8] sm:$0xff]
        %v2613 = vld [vmem:[#allocation4 + $0xd0] sm:$0xff]
        %v2614 = vld [vmem:[#allocation4 + $0xd8] sm:$0xff]
        %v2615 = vld [vmem:[#allocation4 + $0xe0] sm:$0xff]
        %v2616 = vld [vmem:[#allocation4 + $0xe8] sm:$0xff]
        %v2617 = vld [vmem:[#allocation4 + $0xf0] sm:$0xff]
        %v2618 = vld [vmem:[#allocation4 + $0xf8] sm:$0xff]
        %2619 = vmatprep.subr.mxu0 %v2588
        %2620 = vmatpush1.msra.mxu0 %v2587
        %2621 = vmatprep.subr.mxu0 %v2590
        %2622 = vmatpush1.msra.mxu0 %v2589
        %2623 = vmatprep.subr.mxu0 %v2592
        %2624 = vmatpush1.msra.mxu0 %v2591
        %2625 = vmatprep.subr.mxu0 %v2594
        %2626 = vmatpush1.msra.mxu0 %v2593
        %2627 = vmatprep.subr.mxu0 %v2596
        %2628 = vmatpush1.msra.mxu0 %v2595
        %2629 = vmatprep.subr.mxu0 %v2598
        %2630 = vmatpush1.msra.mxu0 %v2597
        %2631 = vmatprep.subr.mxu0 %v2600
        %2632 = vmatpush1.msra.mxu0 %v2599
        %2633 = vmatprep.subr.mxu0 %v2602
        %2634 = vmatpush1.msra.mxu0 %v2601
        %2635 = vmatprep.subr.mxu0 %v2604
        %2636 = vmatpush1.msra.mxu0 %v2603
        %2637 = vmatprep.subr.mxu0 %v2606
        %2638 = vmatpush1.msra.mxu0 %v2605
        %2639 = vmatprep.subr.mxu0 %v2608
        %2640 = vmatpush1.msra.mxu0 %v2607
        %2641 = vmatprep.subr.mxu0 %v2610
        %2642 = vmatpush1.msra.mxu0 %v2609
        %2643 = vmatprep.subr.mxu0 %v2612
        %2644 = vmatpush1.msra.mxu0 %v2611
        %2645 = vmatprep.subr.mxu0 %v2614
        %2646 = vmatpush1.msra.mxu0 %v2613
        %2647 = vmatprep.subr.mxu0 %v2616
        %2648 = vmatpush1.msra.mxu0 %v2615
        %2649 = vmatprep.subr.mxu0 %v2618
        %2650 = vmatpush1.msra.mxu0 %v2617
        %2651 = vmatprep.subr.mxu0 0.0
        %2652 = vmatpush1.msra.mxu0 0.0
        %2653 = vmatprep.subr.mxu0 0.0
        %2654 = vmatpush1.msra.mxu0 0.0
        %2655 = vmatprep.subr.mxu0 0.0
        %2656 = vmatpush1.msra.mxu0 0.0
        %2657 = vmatprep.subr.mxu0 0.0
        %2658 = vmatpush1.msra.mxu0 0.0
        %2659 = vmatprep.subr.mxu0 0.0
        %2660 = vmatpush1.msra.mxu0 0.0
        %2661 = vmatprep.subr.mxu0 0.0
        %2662 = vmatpush1.msra.mxu0 0.0
        %2663 = vmatprep.subr.mxu0 0.0
        %2664 = vmatpush1.msra.mxu0 0.0
        %2665 = vmatprep.subr.mxu0 0.0
        %2666 = vmatpush1.msra.mxu0 0.0
        %2667 = vmatprep.subr.mxu0 0.0
        %2668 = vmatpush1.msra.mxu0 0.0
        %2669 = vmatprep.subr.mxu0 0.0
        %2670 = vmatpush1.msra.mxu0 0.0
        %2671 = vmatprep.subr.mxu0 0.0
        %2672 = vmatpush1.msra.mxu0 0.0
        %2673 = vmatprep.subr.mxu0 0.0
        %2674 = vmatpush1.msra.mxu0 0.0
        %2675 = vmatprep.subr.mxu0 0.0
        %2676 = vmatpush1.msra.mxu0 0.0
        %2677 = vmatprep.subr.mxu0 0.0
        %2678 = vmatpush1.msra.mxu0 0.0
        %2679 = vmatprep.subr.mxu0 0.0
        %2680 = vmatpush1.msra.mxu0 0.0
        %2681 = vmatprep.subr.mxu0 0.0
        %2682 = vmatpush1.msra.mxu0 0.0
        %2683 = vmatprep.mubr.f32.mxu0 0.0
        %2684 = vmatmul.mubr.f32.gmra.mrb[0].mxu0 %v2586
        %v2685 = vpop.f32.mrb[0].mxu0
        %v2686 = vadd.f32 0.0, %v2685
        %v2687 = vpop.f32.mrb[0].mxu0
        %v2688 = vadd.f32 0.0, %v2687
        %2689 = vdwg.mxu0
        %v2690 = vmul.f32 %v2686, %v2686
        %v2691 = vmul.f32 %v2688, %v2688
        %v2692 = vadd.f32 %v2690, %v2691
        %v2693 = vld [vmem:[%s5] sm:$0xff]
        %v2694 = vld [vmem:[%s5 + $0x8] sm:$0xff]
        %v2695 = vld [vmem:[%s5 + $0x10] sm:$0xff]
        %v2696 = vld [vmem:[%s5 + $0x18] sm:$0xff]
        %v2697 = vld [vmem:[%s5 + $0x20] sm:$0xff]
        %v2698 = vld [vmem:[%s5 + $0x28] sm:$0xff]
        %v2699 = vld [vmem:[%s5 + $0x30] sm:$0xff]
        %v2700 = vld [vmem:[%s5 + $0x38] sm:$0xff]
        %v2701 = vld [vmem:[%s5 + $0x40] sm:$0xff]
        %v2702 = vld [vmem:[%s5 + $0x48] sm:$0xff]
        %v2703 = vld [vmem:[%s5 + $0x50] sm:$0xff]
        %v2704 = vld [vmem:[%s5 + $0x58] sm:$0xff]
        %v2705 = vld [vmem:[%s5 + $0x60] sm:$0xff]
        %v2706 = vld [vmem:[%s5 + $0x68] sm:$0xff]
        %v2707 = vld [vmem:[%s5 + $0x70] sm:$0xff]
        %v2708 = vld [vmem:[%s5 + $0x78] sm:$0xff]
        %v2709 = vld [vmem:[%s6] sm:$0x1]
        %v2711 = vlaneseq
        %v2712 = vshrl.u32 %v2711, 7
        %v2713 = vsub.s32 0, %v2712
        %v2714 = vrot.slane %v2709, %v2713
        %2716 = vmatprep.subr.mxu0 0.0
        %2717 = vmatpush1.msra.mxu0 %v2693
        %2718 = vmatprep.subr.mxu0 0.0
        %2719 = vmatpush1.msra.mxu0 %v2694
        %2720 = vmatprep.subr.mxu0 0.0
        %2721 = vmatpush1.msra.mxu0 %v2695
        %2722 = vmatprep.subr.mxu0 0.0
        %2723 = vmatpush1.msra.mxu0 %v2696
        %2724 = vmatprep.subr.mxu0 0.0
        %2725 = vmatpush1.msra.mxu0 %v2697
        %2726 = vmatprep.subr.mxu0 0.0
        %2727 = vmatpush1.msra.mxu0 %v2698
        %2728 = vmatprep.subr.mxu0 0.0
        %2729 = vmatpush1.msra.mxu0 %v2699
        %2730 = vmatprep.subr.mxu0 0.0
        %2731 = vmatpush1.msra.mxu0 %v2700
        %2732 = vmatprep.subr.mxu0 0.0
        %2733 = vmatpush1.msra.mxu0 %v2701
        %2734 = vmatprep.subr.mxu0 0.0
        %2735 = vmatpush1.msra.mxu0 %v2702
        %2736 = vmatprep.subr.mxu0 0.0
        %2737 = vmatpush1.msra.mxu0 %v2703
        %2738 = vmatprep.subr.mxu0 0.0
        %2739 = vmatpush1.msra.mxu0 %v2704
        %2740 = vmatprep.subr.mxu0 0.0
        %2741 = vmatpush1.msra.mxu0 %v2705
        %2742 = vmatprep.subr.mxu0 0.0
        %2743 = vmatpush1.msra.mxu0 %v2706
        %2744 = vmatprep.subr.mxu0 0.0
        %2745 = vmatpush1.msra.mxu0 %v2707
        %2746 = vmatprep.subr.mxu0 0.0
        %2747 = vmatpush1.msra.mxu0 %v2708
        %2748 = vmatprep.subr.mxu0 0.0
        %2749 = vmatpush1.msra.mxu0 0.0
        %2750 = vmatprep.subr.mxu0 0.0
        %2751 = vmatpush1.msra.mxu0 0.0
        %2752 = vmatprep.subr.mxu0 0.0
        %2753 = vmatpush1.msra.mxu0 0.0
        %2754 = vmatprep.subr.mxu0 0.0
        %2755 = vmatpush1.msra.mxu0 0.0
        %2756 = vmatprep.subr.mxu0 0.0
        %2757 = vmatpush1.msra.mxu0 0.0
        %2758 = vmatprep.subr.mxu0 0.0
        %2759 = vmatpush1.msra.mxu0 0.0
        %2760 = vmatprep.subr.mxu0 0.0
        %2761 = vmatpush1.msra.mxu0 0.0
        %2762 = vmatprep.subr.mxu0 0.0
        %2763 = vmatpush1.msra.mxu0 0.0
        %2764 = vmatprep.subr.mxu0 0.0
        %2765 = vmatpush1.msra.mxu0 0.0
        %2766 = vmatprep.subr.mxu0 0.0
        %2767 = vmatpush1.msra.mxu0 0.0
        %2768 = vmatprep.subr.mxu0 0.0
        %2769 = vmatpush1.msra.mxu0 0.0
        %2770 = vmatprep.subr.mxu0 0.0
        %2771 = vmatpush1.msra.mxu0 0.0
        %2772 = vmatprep.subr.mxu0 0.0
        %2773 = vmatpush1.msra.mxu0 0.0
        %2774 = vmatprep.subr.mxu0 0.0
        %2775 = vmatpush1.msra.mxu0 0.0
        %2776 = vmatprep.subr.mxu0 0.0
        %2777 = vmatpush1.msra.mxu0 0.0
        %2778 = vmatprep.subr.mxu0 0.0
        %2779 = vmatpush1.msra.mxu0 0.0
        %2780 = vmatprep.mubr.f32.mxu0 0.0
        %2781 = vmatmul.mubr.f32.gmra.mrb[0].mxu0 %v2692
        %v2782 = vpop.f32.mrb[0].mxu0
        %v2783 = vadd.f32 %v2714, %v2782
        %v2784 = vpop.f32.mrb[0].mxu0
        %2785 = vdwg.mxu0
        %v2786 = vxor.u32 %v2783, 2147483648
        %v2787 = vmul.f32 %v2786, 1.442695
        %v2788 = vpow.pop %v2787
        %v2789 = vadd.f32 %v2788, 1.0
        %v2790 = vrcp.pop %v2789
        %v2791 = vmul.f32 1.0, %v2790
        %v2792 = vtanh.pop %v2783
        %2794 = vrot.lane.b32.xlu0 %v2001, 16
        %v2795 = vpop.permute.xlu0 %2794
        %v2797 = vmul.f32 %v2791, %v2795
        %2799 = vrot.lane.b32.xlu0 %v2792, 80
        %v2800 = vpop.permute.xlu0 %2799
        %v2802 = vmul.f32 %v2791, %v2800
        %2804 = vrot.lane.b32.xlu0 %v2802, 16
        %v2805 = vpop.permute.xlu0 %2804
        %v2807 = vadd.f32 %v2797, %v2805
        %v2808 = vtanh.pop %v2807
        %2810 = vrot.lane.b32.xlu0 %v2808, 16
        %v2811 = vpop.permute.xlu0 %2810
        %v2813 = vmul.f32 %v2791, %v2811
        %2815 = vrot.lane.b32.xlu0 %v2813, 96
        %v2816 = vpop.permute.xlu0 %2815
        %2818 = vst.msk [vmem:[#allocation2] sm:$0xf] %vm1166, %v2816
        %2820 = vrot.lane.b32.xlu0 %v2807, 112
        %v2821 = vpop.permute.xlu0 %2820
        %2823 = vst.msk [vmem:[#allocation3] sm:$0xf] %vm1166, %v2821
        %s2824 = scalar_lea.vmem %s311, 8 [#allocation7]
        %2825 = vst.msk [vmem:[%s2824] sm:$0xf] %vm1166, %v2816
        %v2826 = vld [vmem:[#allocation2] sm:$0xf]
        %v2827 = vld [vmem:[#allocation3] sm:$0xf]
        %s2828 = scalar_lea.vmem %s318, 12
        %v2829 = vld [vmem:[%s2828] sm:$0xf]
        %v2830 = vld [vmem:[%s1] sm:$0xff]
        %v2831 = vld [vmem:[%s1 + $0x8] sm:$0xff]
        %v2832 = vld [vmem:[%s2] sm:$0xff]
        %v2834 = vsel %vm350, %v2829, 0
        %2836 = vmatprep.subr.mxu0 0.0
        %2837 = vmatpush1.msra.mxu0 %v2832
        %2838 = vmatprep.subr.mxu0 0.0
        %2839 = vmatpush1.msra.mxu0 0.0
        %2840 = vmatprep.subr.mxu0 0.0
        %2841 = vmatpush1.msra.mxu0 0.0
        %2842 = vmatprep.subr.mxu0 0.0
        %2843 = vmatpush1.msra.mxu0 0.0
        %2844 = vmatprep.subr.mxu0 0.0
        %2845 = vmatpush1.msra.mxu0 0.0
        %2846 = vmatprep.subr.mxu0 0.0
        %2847 = vmatpush1.msra.mxu0 0.0
        %2848 = vmatprep.subr.mxu0 0.0
        %2849 = vmatpush1.msra.mxu0 0.0
        %2850 = vmatprep.subr.mxu0 0.0
        %2851 = vmatpush1.msra.mxu0 0.0
        %2852 = vmatprep.subr.mxu0 0.0
        %2853 = vmatpush1.msra.mxu0 0.0
        %2854 = vmatprep.subr.mxu0 0.0
        %2855 = vmatpush1.msra.mxu0 0.0
        %2856 = vmatprep.subr.mxu0 0.0
        %2857 = vmatpush1.msra.mxu0 0.0
        %2858 = vmatprep.subr.mxu0 0.0
        %2859 = vmatpush1.msra.mxu0 0.0
        %2860 = vmatprep.subr.mxu0 0.0
        %2861 = vmatpush1.msra.mxu0 0.0
        %2862 = vmatprep.subr.mxu0 0.0
        %2863 = vmatpush1.msra.mxu0 0.0
        %2864 = vmatprep.subr.mxu0 0.0
        %2865 = vmatpush1.msra.mxu0 0.0
        %2866 = vmatprep.subr.mxu0 0.0
        %2867 = vmatpush1.msra.mxu0 0.0
        %2868 = vmatprep.subr.mxu0 0.0
        %2869 = vmatpush1.msra.mxu0 0.0
        %2870 = vmatprep.subr.mxu0 0.0
        %2871 = vmatpush1.msra.mxu0 0.0
        %2872 = vmatprep.subr.mxu0 0.0
        %2873 = vmatpush1.msra.mxu0 0.0
        %2874 = vmatprep.subr.mxu0 0.0
        %2875 = vmatpush1.msra.mxu0 0.0
        %2876 = vmatprep.subr.mxu0 0.0
        %2877 = vmatpush1.msra.mxu0 0.0
        %2878 = vmatprep.subr.mxu0 0.0
        %2879 = vmatpush1.msra.mxu0 0.0
        %2880 = vmatprep.subr.mxu0 0.0
        %2881 = vmatpush1.msra.mxu0 0.0
        %2882 = vmatprep.subr.mxu0 0.0
        %2883 = vmatpush1.msra.mxu0 0.0
        %2884 = vmatprep.subr.mxu0 0.0
        %2885 = vmatpush1.msra.mxu0 0.0
        %2886 = vmatprep.subr.mxu0 0.0
        %2887 = vmatpush1.msra.mxu0 0.0
        %2888 = vmatprep.subr.mxu0 0.0
        %2889 = vmatpush1.msra.mxu0 0.0
        %2890 = vmatprep.subr.mxu0 0.0
        %2891 = vmatpush1.msra.mxu0 0.0
        %2892 = vmatprep.subr.mxu0 0.0
        %2893 = vmatpush1.msra.mxu0 0.0
        %2894 = vmatprep.subr.mxu0 0.0
        %2895 = vmatpush1.msra.mxu0 0.0
        %2896 = vmatprep.subr.mxu0 0.0
        %2897 = vmatpush1.msra.mxu0 0.0
        %2898 = vmatprep.subr.mxu0 0.0
        %2899 = vmatpush1.msra.mxu0 0.0
        %2900 = vmatprep.mubr.f32.mxu0 0.0
        %2901 = vmatmul.mubr.f32.gmra.mrb[0].mxu0 %v2834
        %v2902 = vpop.f32.mrb[0].mxu0
        %v2903 = vadd.f32 0.0, %v2902
        %v2904 = vpop.f32.mrb[0].mxu0
        %2905 = vdwg.mxu0
        %v2907 = vsel %vm424, %v2826, 0
        %2909 = vmatprep.subr.mxu0 0.0
        %2910 = vmatpush1.msra.mxu0 %v2830
        %2911 = vmatprep.subr.mxu0 0.0
        %2912 = vmatpush1.msra.mxu0 %v2831
        %2913 = vmatprep.subr.mxu0 0.0
        %2914 = vmatpush1.msra.mxu0 0.0
        %2915 = vmatprep.subr.mxu0 0.0
        %2916 = vmatpush1.msra.mxu0 0.0
        %2917 = vmatprep.subr.mxu0 0.0
        %2918 = vmatpush1.msra.mxu0 0.0
        %2919 = vmatprep.subr.mxu0 0.0
        %2920 = vmatpush1.msra.mxu0 0.0
        %2921 = vmatprep.subr.mxu0 0.0
        %2922 = vmatpush1.msra.mxu0 0.0
        %2923 = vmatprep.subr.mxu0 0.0
        %2924 = vmatpush1.msra.mxu0 0.0
        %2925 = vmatprep.subr.mxu0 0.0
        %2926 = vmatpush1.msra.mxu0 0.0
        %2927 = vmatprep.subr.mxu0 0.0
        %2928 = vmatpush1.msra.mxu0 0.0
        %2929 = vmatprep.subr.mxu0 0.0
        %2930 = vmatpush1.msra.mxu0 0.0
        %2931 = vmatprep.subr.mxu0 0.0
        %2932 = vmatpush1.msra.mxu0 0.0
        %2933 = vmatprep.subr.mxu0 0.0
        %2934 = vmatpush1.msra.mxu0 0.0
        %2935 = vmatprep.subr.mxu0 0.0
        %2936 = vmatpush1.msra.mxu0 0.0
        %2937 = vmatprep.subr.mxu0 0.0
        %2938 = vmatpush1.msra.mxu0 0.0
        %2939 = vmatprep.subr.mxu0 0.0
        %2940 = vmatpush1.msra.mxu0 0.0
        %2941 = vmatprep.subr.mxu0 0.0
        %2942 = vmatpush1.msra.mxu0 0.0
        %2943 = vmatprep.subr.mxu0 0.0
        %2944 = vmatpush1.msra.mxu0 0.0
        %2945 = vmatprep.subr.mxu0 0.0
        %2946 = vmatpush1.msra.mxu0 0.0
        %2947 = vmatprep.subr.mxu0 0.0
        %2948 = vmatpush1.msra.mxu0 0.0
        %2949 = vmatprep.subr.mxu0 0.0
        %2950 = vmatpush1.msra.mxu0 0.0
        %2951 = vmatprep.subr.mxu0 0.0
        %2952 = vmatpush1.msra.mxu0 0.0
        %2953 = vmatprep.subr.mxu0 0.0
        %2954 = vmatpush1.msra.mxu0 0.0
        %2955 = vmatprep.subr.mxu0 0.0
        %2956 = vmatpush1.msra.mxu0 0.0
        %2957 = vmatprep.subr.mxu0 0.0
        %2958 = vmatpush1.msra.mxu0 0.0
        %2959 = vmatprep.subr.mxu0 0.0
        %2960 = vmatpush1.msra.mxu0 0.0
        %2961 = vmatprep.subr.mxu0 0.0
        %2962 = vmatpush1.msra.mxu0 0.0
        %2963 = vmatprep.subr.mxu0 0.0
        %2964 = vmatpush1.msra.mxu0 0.0
        %2965 = vmatprep.subr.mxu0 0.0
        %2966 = vmatpush1.msra.mxu0 0.0
        %2967 = vmatprep.subr.mxu0 0.0
        %2968 = vmatpush1.msra.mxu0 0.0
        %2969 = vmatprep.subr.mxu0 0.0
        %2970 = vmatpush1.msra.mxu0 0.0
        %2971 = vmatprep.subr.mxu0 0.0
        %2972 = vmatpush1.msra.mxu0 0.0
        %2973 = vmatprep.mubr.f32.mxu0 0.0
        %2974 = vmatmul.mubr.f32.gmra.mrb[0].mxu0 %v2907
        %v2975 = vpop.f32.mrb[0].mxu0
        %v2976 = vadd.f32 %v2903, %v2975
        %v2977 = vpop.f32.mrb[0].mxu0
        %2978 = vdwg.mxu0
        %v2979 = vld [vmem:[%s3] sm:$0x1]
        %v2981 = vlaneseq
        %v2982 = vshrl.u32 %v2981, 7
        %v2983 = vsub.s32 0, %v2982
        %v2984 = vrot.slane %v2979, %v2983
        %v2986 = vadd.f32 %v2976, %v2984
        %v2987 = vmul.f32 %v2986, 1.5707964
        %v2988 = vmul.f32 %v2987, 0.5
        %v2989 = vand.u32 2147483647, %v2988
        %vm2990 = vcmp.le.f32.partialorder %v2989, 0.7853982
        %vm2991 = vcmp.lt.s32.totalorder %v2988, 0
        %v2992 = vand.u32 %v2988, 2139095040
        %v2993 = vshrl.u32 %v2992, 23
        %v2994 = vsub.s32 %v2993, 127
        %v2995 = vand.u32 2147483647, %v2988
        %v2996 = vand.u32 %v2995, 8388607
        %v2997 = vor.u32 %v2996, 8388608
        %v2998 = vsub.s32 0, %v2997
        %v2999 = vadd.s32 %v2994, 1
        %vm3000 = vcmp.gt.s32.totalorder %v2999, 0
        %v3001 = vsel %vm3000, %v2999, 0
        %v3002 = vshrl.u32 %v3001, 5
        %v3003 = vand.u32 %v3001, 31
        %v3004 = vsub.s32 32, %v3003
        %v3005 = vshrl.u32 683565275, %v3004
        %v3006 = vshll.u32 683565275, %v3003
        %v3007 = vshrl.u32 2475754826, %v3004
        %v3008 = vor.u32 %v3006, %v3007
        %v3009 = vshll.u32 2475754826, %v3003
        %v3010 = vshrl.u32 2131351028, %v3004
        %v3011 = vor.u32 %v3009, %v3010
        %v3012 = vshll.u32 2131351028, %v3003
        %v3013 = vshrl.u32 2102212464, %v3004
        %v3014 = vor.u32 %v3012, %v3013
        %v3015 = vshll.u32 2102212464, %v3003
        %v3016 = vshrl.u32 920167782, %v3004
        %v3017 = vor.u32 %v3015, %v3016
        %v3018 = vshll.u32 920167782, %v3003
        %v3019 = vshrl.u32 1326507024, %v3004
        %v3020 = vor.u32 %v3018, %v3019
        %vm3021 = vcmp.lt.s32.totalorder %v3002, 1
        %vm3022 = vcmp.lt.s32.totalorder %v3002, 2
        %vm3023 = vcmp.lt.s32.totalorder %v3002, 3
        %vm3024 = vcmp.lt.s32.totalorder %v3002, 4
        %v3025 = vsel %vm3021, %v3005, %v3008
        %v3026 = vsel %vm3024, %v3014, 2102212464
        %v3027 = vsel %vm3023, %v3011, %v3026
        %v3028 = vsel %vm3022, %v3025, %v3027
        %v3029 = vsel %vm3021, %v3008, %v3011
        %v3030 = vsel %vm3024, %v3017, 920167782
        %v3031 = vsel %vm3023, %v3014, %v3030
        %v3032 = vsel %vm3022, %v3029, %v3031
        %v3033 = vsel %vm3021, %v3011, %v3014
        %v3034 = vsel %vm3024, %v3020, 1326507024
        %v3035 = vsel %vm3023, %v3017, %v3034
        %v3036 = vsel %vm3022, %v3033, %v3035
        %v3037 = vshll.u32 %v2997, 8
        %v3038 = vmul.u32.u64.compose %v3037, %v3036
        %v3039 = vextract.low.u32 %v3038
        %v3040 = vextract.high.u32 %v3038
        %v3041 = vmul.u32.u64.compose %v3037, %v3032
        %v3042 = vextract.low.u32 %v3041
        %v3043 = vextract.high.u32 %v3041
        %v3044 = vmul.u32 %v3037, %v3028
        %v3045 = vadd.s32 %v3040, %v3042
        %vm3046 = vc.u32 %v3040, %v3042
        %v3047 = vadd.s32 %v3043, 1
        %v3048 = vsel %vm3046, %v3047, %v3043
        %v3049 = vadd.s32 %v3044, %v3048
        %v3050 = vadd.s32 %v3049, 536870912
        %v3051 = vshrl.u32 %v3050, 30
        %v3052 = vshll.u32 %v3051, 30
        %v3053 = vsub.s32 %v3049, %v3052
        %vm3054 = vcmp.lt.s32.totalorder %v3053, 0
        %v3055 = vsub.s32 0, %v3053
        %v3056 = vsel %vm3054, %v3055, %v3053
        %v3057 = vclz %v3056
        %v3058 = vsub.s32 %v3057, 2
        %vm3059 = vcmp.gt.s32.totalorder 0, %v3058
        %v3060 = vsel %vm3059, 0, %v3058
        %v3061 = vsub.s32 32, %v3060
        %v3062 = vshll.u32 %v3053, %v3060
        %v3063 = vshrl.u32 %v3045, %v3061
        %v3064 = vor.u32 %v3062, %v3063
        %v3065 = vsub.s32 4294967266, %v3060
        %v3066 = vadd.s32 %v3065, 127
        %v3067 = vshll.u32 %v3066, 23
        %v3068 = vor.u32 4788187, %v3067
        %v3069 = vand.u32 2147483647, %v3068
        %v3071 = vcvt.s32.f32 %v3064
        %v3072 = vmul.f32 %v3071, %v3069
        %v3073 = vxor.u32 %v3072, 2147483648
        %v3074 = vsel %vm2991, %v3073, %v3072
        %v3075 = vsub.s32 4, %v3051
        %v3076 = vsel %vm2991, %v3075, %v3051
        %v3077 = vsel %vm2990, %v2988, %v3074
        %v3078 = vsel %vm2990, 0, %v3076
        %v3079 = vcosq.f32.pop %v3077
        %v3080 = vsinq.f32.pop %v3077
        %vm3081 = vweird.f32 %v2988
        %v3082 = vand.u32 %v3078, 3
        %vm3083 = vcmp.lt.s32.totalorder %v3082, 2
        %vm3084 = vcmp.eq.s32.totalorder %v3082, 0
        %v3085 = vxor.u32 %v3080, 2147483648
        %v3086 = vsel %vm3084, %v3079, %v3085
        %vm3087 = vcmp.eq.s32.totalorder %v3082, 2
        %v3088 = vxor.u32 %v3079, 2147483648
        %v3089 = vsel %vm3087, %v3088, %v3080
        %v3090 = vsel %vm3083, %v3086, %v3089
        %v3091 = vsel %vm3081, nan, %v3090
        %v3092 = vand.u32 2147483647, %v2988
        %vm3093 = vcmp.le.f32.partialorder %v3092, 0.7853982
        %vm3094 = vcmp.lt.s32.totalorder %v2988, 0
        %v3095 = vand.u32 %v2988, 2139095040
        %v3096 = vshrl.u32 %v3095, 23
        %v3097 = vsub.s32 %v3096, 127
        %v3098 = vand.u32 2147483647, %v2988
        %v3099 = vand.u32 %v3098, 8388607
        %v3100 = vor.u32 %v3099, 8388608
        %v3101 = vsub.s32 0, %v3100
        %v3102 = vadd.s32 %v3097, 1
        %vm3103 = vcmp.gt.s32.totalorder %v3102, 0
        %v3104 = vsel %vm3103, %v3102, 0
        %v3105 = vshrl.u32 %v3104, 5
        %v3106 = vand.u32 %v3104, 31
        %v3107 = vsub.s32 32, %v3106
        %v3108 = vshrl.u32 683565275, %v3107
        %v3109 = vshll.u32 683565275, %v3106
        %v3110 = vshrl.u32 2475754826, %v3107
        %v3111 = vor.u32 %v3109, %v3110
        %v3112 = vshll.u32 2475754826, %v3106
        %v3113 = vshrl.u32 2131351028, %v3107
        %v3114 = vor.u32 %v3112, %v3113
        %v3115 = vshll.u32 2131351028, %v3106
        %v3116 = vshrl.u32 2102212464, %v3107
        %v3117 = vor.u32 %v3115, %v3116
        %v3118 = vshll.u32 2102212464, %v3106
        %v3119 = vshrl.u32 920167782, %v3107
        %v3120 = vor.u32 %v3118, %v3119
        %v3121 = vshll.u32 920167782, %v3106
        %v3122 = vshrl.u32 1326507024, %v3107
        %v3123 = vor.u32 %v3121, %v3122
        %vm3124 = vcmp.lt.s32.totalorder %v3105, 1
        %vm3125 = vcmp.lt.s32.totalorder %v3105, 2
        %vm3126 = vcmp.lt.s32.totalorder %v3105, 3
        %vm3127 = vcmp.lt.s32.totalorder %v3105, 4
        %v3128 = vsel %vm3124, %v3108, %v3111
        %v3129 = vsel %vm3127, %v3117, 2102212464
        %v3130 = vsel %vm3126, %v3114, %v3129
        %v3131 = vsel %vm3125, %v3128, %v3130
        %v3132 = vsel %vm3124, %v3111, %v3114
        %v3133 = vsel %vm3127, %v3120, 920167782
        %v3134 = vsel %vm3126, %v3117, %v3133
        %v3135 = vsel %vm3125, %v3132, %v3134
        %v3136 = vsel %vm3124, %v3114, %v3117
        %v3137 = vsel %vm3127, %v3123, 1326507024
        %v3138 = vsel %vm3126, %v3120, %v3137
        %v3139 = vsel %vm3125, %v3136, %v3138
        %v3140 = vshll.u32 %v3100, 8
        %v3141 = vmul.u32.u64.compose %v3140, %v3139
        %v3142 = vextract.low.u32 %v3141
        %v3143 = vextract.high.u32 %v3141
        %v3144 = vmul.u32.u64.compose %v3140, %v3135
        %v3145 = vextract.low.u32 %v3144
        %v3146 = vextract.high.u32 %v3144
        %v3147 = vmul.u32 %v3140, %v3131
        %v3148 = vadd.s32 %v3143, %v3145
        %vm3149 = vc.u32 %v3143, %v3145
        %v3150 = vadd.s32 %v3146, 1
        %v3151 = vsel %vm3149, %v3150, %v3146
        %v3152 = vadd.s32 %v3147, %v3151
        %v3153 = vadd.s32 %v3152, 536870912
        %v3154 = vshrl.u32 %v3153, 30
        %v3155 = vshll.u32 %v3154, 30
        %v3156 = vsub.s32 %v3152, %v3155
        %vm3157 = vcmp.lt.s32.totalorder %v3156, 0
        %v3158 = vsub.s32 0, %v3156
        %v3159 = vsel %vm3157, %v3158, %v3156
        %v3160 = vclz %v3159
        %v3161 = vsub.s32 %v3160, 2
        %vm3162 = vcmp.gt.s32.totalorder 0, %v3161
        %v3163 = vsel %vm3162, 0, %v3161
        %v3164 = vsub.s32 32, %v3163
        %v3165 = vshll.u32 %v3156, %v3163
        %v3166 = vshrl.u32 %v3148, %v3164
        %v3167 = vor.u32 %v3165, %v3166
        %v3168 = vsub.s32 4294967266, %v3163
        %v3169 = vadd.s32 %v3168, 127
        %v3170 = vshll.u32 %v3169, 23
        %v3171 = vor.u32 4788187, %v3170
        %v3172 = vand.u32 2147483647, %v3171
        %v3174 = vcvt.s32.f32 %v3167
        %v3175 = vmul.f32 %v3174, %v3172
        %v3176 = vxor.u32 %v3175, 2147483648
        %v3177 = vsel %vm3094, %v3176, %v3175
        %v3178 = vsub.s32 4, %v3154
        %v3179 = vsel %vm3094, %v3178, %v3154
        %v3180 = vsel %vm3093, %v2988, %v3177
        %v3181 = vsel %vm3093, 0, %v3179
        %v3182 = vcosq.f32.pop %v3180
        %v3183 = vsinq.f32.pop %v3180
        %vm3184 = vweird.f32 %v2988
        %v3185 = vadd.s32 %v3181, 3
        %v3186 = vand.u32 %v3185, 3
        %vm3187 = vcmp.lt.s32.totalorder %v3186, 2
        %vm3188 = vcmp.eq.s32.totalorder %v3186, 0
        %v3189 = vxor.u32 %v3183, 2147483648
        %v3190 = vsel %vm3188, %v3182, %v3189
        %vm3191 = vcmp.eq.s32.totalorder %v3186, 2
        %v3192 = vxor.u32 %v3182, 2147483648
        %v3193 = vsel %vm3191, %v3192, %v3183
        %v3194 = vsel %vm3187, %v3190, %v3193
        %v3195 = vsel %vm3184, nan, %v3194
        %v3196 = vsub.f32 %v3091, %v3195
        %v3197 = vmul.f32 %v3196, 0.70710677
        %v3198 = vadd.f32 %v3091, %v3195
        %v3199 = vmul.f32 %v3198, 0.70710677
        %3201 = vset.pattern.permute.xlu0 0
        %3202 = vperm.xlu0 %3201, %v3199
        %v3203 = vpop.permute.xlu0 %3202
        %3206 = vset.pattern.permute.xlu0 0
        %3207 = vperm.xlu0 %3206, %v3197
        %v3208 = vpop.permute.xlu0 %3207
        %v3210 = vsel %vm331, %v3203, %v3208
        %3211 = vset.pattern.permute.xlu0 1
        %3212 = vperm.xlu0 %3211, %v3199
        %v3213 = vpop.permute.xlu0 %3212
        %3215 = vset.pattern.permute.xlu0 1
        %3216 = vperm.xlu0 %3215, %v3197
        %v3217 = vpop.permute.xlu0 %3216
        %v3219 = vsel %vm334, %v3213, %v3217
        %v3220 = vmul.f32 %v3210, %v3219
        %3221 = vset.pattern.permute.xlu0 2
        %3222 = vperm.xlu0 %3221, %v3199
        %v3223 = vpop.permute.xlu0 %3222
        %3225 = vset.pattern.permute.xlu0 2
        %3226 = vperm.xlu0 %3225, %v3197
        %v3227 = vpop.permute.xlu0 %3226
        %v3229 = vsel %vm337, %v3223, %v3227
        %v3230 = vmul.f32 %v3220, %v3229
        %3231 = vset.pattern.permute.xlu0 3
        %3232 = vperm.xlu0 %3231, %v3199
        %v3233 = vpop.permute.xlu0 %3232
        %3235 = vset.pattern.permute.xlu0 3
        %3236 = vperm.xlu0 %3235, %v3197
        %v3237 = vpop.permute.xlu0 %3236
        %v3239 = vsel %vm340, %v3233, %v3237
        %v3240 = vmul.f32 %v3230, %v3239
        %3241 = vset.pattern.permute.xlu0 4
        %3242 = vperm.xlu0 %3241, %v3199
        %v3243 = vpop.permute.xlu0 %3242
        %3245 = vset.pattern.permute.xlu0 4
        %3246 = vperm.xlu0 %3245, %v3197
        %v3247 = vpop.permute.xlu0 %3246
        %v3249 = vsel %vm343, %v3243, %v3247
        %v3250 = vmul.f32 %v3240, %v3249
        %3251 = vset.pattern.permute.xlu0 5
        %3252 = vperm.xlu0 %3251, %v3199
        %v3253 = vpop.permute.xlu0 %3252
        %3255 = vset.pattern.permute.xlu0 5
        %3256 = vperm.xlu0 %3255, %v3197
        %v3257 = vpop.permute.xlu0 %3256
        %v3259 = vsel %vm331, %v3253, %v3257
        %3260 = vset.pattern.permute.xlu0 6
        %3261 = vperm.xlu0 %3260, %v3199
        %v3262 = vpop.permute.xlu0 %3261
        %3264 = vset.pattern.permute.xlu0 6
        %3265 = vperm.xlu0 %3264, %v3197
        %v3266 = vpop.permute.xlu0 %3265
        %v3268 = vsel %vm334, %v3262, %v3266
        %v3269 = vmul.f32 %v3259, %v3268
        %3270 = vset.pattern.permute.xlu0 7
        %3271 = vperm.xlu0 %3270, %v3199
        %v3272 = vpop.permute.xlu0 %3271
        %3274 = vset.pattern.permute.xlu0 7
        %3275 = vperm.xlu0 %3274, %v3197
        %v3276 = vpop.permute.xlu0 %3275
        %v3278 = vsel %vm337, %v3272, %v3276
        %v3279 = vmul.f32 %v3269, %v3278
        %3280 = vset.pattern.permute.xlu0 8
        %3281 = vperm.xlu0 %3280, %v3199
        %v3282 = vpop.permute.xlu0 %3281
        %3284 = vset.pattern.permute.xlu0 8
        %3285 = vperm.xlu0 %3284, %v3197
        %v3286 = vpop.permute.xlu0 %3285
        %v3288 = vsel %vm340, %v3282, %v3286
        %v3289 = vmul.f32 %v3279, %v3288
        %3290 = vset.pattern.permute.xlu0 9
        %3291 = vperm.xlu0 %3290, %v3199
        %v3292 = vpop.permute.xlu0 %3291
        %3294 = vset.pattern.permute.xlu0 9
        %3295 = vperm.xlu0 %3294, %v3197
        %v3296 = vpop.permute.xlu0 %3295
        %v3298 = vsel %vm343, %v3292, %v3296
        %v3299 = vmul.f32 %v3289, %v3298
        %3300 = vset.pattern.permute.xlu0 10
        %3301 = vperm.xlu0 %3300, %v3199
        %v3302 = vpop.permute.xlu0 %3301
        %3304 = vset.pattern.permute.xlu0 10
        %3305 = vperm.xlu0 %3304, %v3197
        %v3306 = vpop.permute.xlu0 %3305
        %v3308 = vsel %vm331, %v3302, %v3306
        %3309 = vset.pattern.permute.xlu0 11
        %3310 = vperm.xlu0 %3309, %v3199
        %v3311 = vpop.permute.xlu0 %3310
        %3313 = vset.pattern.permute.xlu0 11
        %3314 = vperm.xlu0 %3313, %v3197
        %v3315 = vpop.permute.xlu0 %3314
        %v3317 = vsel %vm334, %v3311, %v3315
        %v3318 = vmul.f32 %v3308, %v3317
        %3319 = vset.pattern.permute.xlu0 12
        %3320 = vperm.xlu0 %3319, %v3199
        %v3321 = vpop.permute.xlu0 %3320
        %3323 = vset.pattern.permute.xlu0 12
        %3324 = vperm.xlu0 %3323, %v3197
        %v3325 = vpop.permute.xlu0 %3324
        %v3327 = vsel %vm337, %v3321, %v3325
        %v3328 = vmul.f32 %v3318, %v3327
        %3329 = vset.pattern.permute.xlu0 13
        %3330 = vperm.xlu0 %3329, %v3199
        %v3331 = vpop.permute.xlu0 %3330
        %3333 = vset.pattern.permute.xlu0 13
        %3334 = vperm.xlu0 %3333, %v3197
        %v3335 = vpop.permute.xlu0 %3334
        %v3337 = vsel %vm340, %v3331, %v3335
        %v3338 = vmul.f32 %v3328, %v3337
        %3339 = vset.pattern.permute.xlu0 14
        %3340 = vperm.xlu0 %3339, %v3199
        %v3341 = vpop.permute.xlu0 %3340
        %3343 = vset.pattern.permute.xlu0 14
        %3344 = vperm.xlu0 %3343, %v3197
        %v3345 = vpop.permute.xlu0 %3344
        %v3347 = vsel %vm343, %v3341, %v3345
        %v3348 = vmul.f32 %v3338, %v3347
        %3349 = vset.pattern.permute.xlu0 15
        %3350 = vperm.xlu0 %3349, %v3199
        %v3351 = vpop.permute.xlu0 %3350
        %3353 = vset.pattern.permute.xlu0 15
        %3354 = vperm.xlu0 %3353, %v3197
        %v3355 = vpop.permute.xlu0 %3354
        %v3357 = vsel %vm331, %v3351, %v3355
        %3358 = vset.pattern.permute.xlu0 16
        %3359 = vperm.xlu0 %3358, %v3199
        %v3360 = vpop.permute.xlu0 %3359
        %3362 = vset.pattern.permute.xlu0 16
        %3363 = vperm.xlu0 %3362, %v3197
        %v3364 = vpop.permute.xlu0 %3363
        %v3366 = vsel %vm334, %v3360, %v3364
        %v3367 = vmul.f32 %v3357, %v3366
        %3368 = vset.pattern.permute.xlu0 17
        %3369 = vperm.xlu0 %3368, %v3199
        %v3370 = vpop.permute.xlu0 %3369
        %3372 = vset.pattern.permute.xlu0 17
        %3373 = vperm.xlu0 %3372, %v3197
        %v3374 = vpop.permute.xlu0 %3373
        %v3376 = vsel %vm337, %v3370, %v3374
        %v3377 = vmul.f32 %v3367, %v3376
        %3378 = vset.pattern.permute.xlu0 18
        %3379 = vperm.xlu0 %3378, %v3199
        %v3380 = vpop.permute.xlu0 %3379
        %3382 = vset.pattern.permute.xlu0 18
        %3383 = vperm.xlu0 %3382, %v3197
        %v3384 = vpop.permute.xlu0 %3383
        %v3386 = vsel %vm340, %v3380, %v3384
        %v3387 = vmul.f32 %v3377, %v3386
        %3388 = vset.pattern.permute.xlu0 19
        %3389 = vperm.xlu0 %3388, %v3199
        %v3390 = vpop.permute.xlu0 %3389
        %3392 = vset.pattern.permute.xlu0 19
        %3393 = vperm.xlu0 %3392, %v3197
        %v3394 = vpop.permute.xlu0 %3393
        %v3396 = vsel %vm343, %v3390, %v3394
        %v3397 = vmul.f32 %v3387, %v3396
        %3399 = vrot.lane.b32.xlu0 %v3299, 32
        %v3400 = vpop.permute.xlu0 %3399
        %3403 = vrot.lane.b32.xlu0 %v3348, 64
        %v3404 = vpop.permute.xlu0 %3403
        %3407 = vrot.lane.b32.xlu0 %v3397, 96
        %v3408 = vpop.permute.xlu0 %3407
        %v3410 = vsel %vm929, %v3250, %v3400
        %v3411 = vsel %vm931, %v3410, %v3404
        %v3412 = vsel %vm933, %v3411, %v3408
        %v3413 = vld [vmem:[#allocation4] sm:$0xff]
        %v3414 = vld [vmem:[#allocation4 + $0x8] sm:$0xff]
        %v3415 = vld [vmem:[#allocation4 + $0x10] sm:$0xff]
        %v3416 = vld [vmem:[#allocation4 + $0x18] sm:$0xff]
        %v3417 = vld [vmem:[#allocation4 + $0x20] sm:$0xff]
        %v3418 = vld [vmem:[#allocation4 + $0x28] sm:$0xff]
        %v3419 = vld [vmem:[#allocation4 + $0x30] sm:$0xff]
        %v3420 = vld [vmem:[#allocation4 + $0x38] sm:$0xff]
        %v3421 = vld [vmem:[#allocation4 + $0x40] sm:$0xff]
        %v3422 = vld [vmem:[#allocation4 + $0x48] sm:$0xff]
        %v3423 = vld [vmem:[#allocation4 + $0x50] sm:$0xff]
        %v3424 = vld [vmem:[#allocation4 + $0x58] sm:$0xff]
        %v3425 = vld [vmem:[#allocation4 + $0x60] sm:$0xff]
        %v3426 = vld [vmem:[#allocation4 + $0x68] sm:$0xff]
        %v3427 = vld [vmem:[#allocation4 + $0x70] sm:$0xff]
        %v3428 = vld [vmem:[#allocation4 + $0x78] sm:$0xff]
        %v3429 = vld [vmem:[#allocation4 + $0x80] sm:$0xff]
        %v3430 = vld [vmem:[#allocation4 + $0x88] sm:$0xff]
        %v3431 = vld [vmem:[#allocation4 + $0x90] sm:$0xff]
        %v3432 = vld [vmem:[#allocation4 + $0x98] sm:$0xff]
        %v3433 = vld [vmem:[#allocation4 + $0xa0] sm:$0xff]
        %v3434 = vld [vmem:[#allocation4 + $0xa8] sm:$0xff]
        %v3435 = vld [vmem:[#allocation4 + $0xb0] sm:$0xff]
        %v3436 = vld [vmem:[#allocation4 + $0xb8] sm:$0xff]
        %v3437 = vld [vmem:[#allocation4 + $0xc0] sm:$0xff]
        %v3438 = vld [vmem:[#allocation4 + $0xc8] sm:$0xff]
        %v3439 = vld [vmem:[#allocation4 + $0xd0] sm:$0xff]
        %v3440 = vld [vmem:[#allocation4 + $0xd8] sm:$0xff]
        %v3441 = vld [vmem:[#allocation4 + $0xe0] sm:$0xff]
        %v3442 = vld [vmem:[#allocation4 + $0xe8] sm:$0xff]
        %v3443 = vld [vmem:[#allocation4 + $0xf0] sm:$0xff]
        %v3444 = vld [vmem:[#allocation4 + $0xf8] sm:$0xff]
        %3445 = vmatprep.subr.mxu0 %v3414
        %3446 = vmatpush1.msra.mxu0 %v3413
        %3447 = vmatprep.subr.mxu0 %v3416
        %3448 = vmatpush1.msra.mxu0 %v3415
        %3449 = vmatprep.subr.mxu0 %v3418
        %3450 = vmatpush1.msra.mxu0 %v3417
        %3451 = vmatprep.subr.mxu0 %v3420
        %3452 = vmatpush1.msra.mxu0 %v3419
        %3453 = vmatprep.subr.mxu0 %v3422
        %3454 = vmatpush1.msra.mxu0 %v3421
        %3455 = vmatprep.subr.mxu0 %v3424
        %3456 = vmatpush1.msra.mxu0 %v3423
        %3457 = vmatprep.subr.mxu0 %v3426
        %3458 = vmatpush1.msra.mxu0 %v3425
        %3459 = vmatprep.subr.mxu0 %v3428
        %3460 = vmatpush1.msra.mxu0 %v3427
        %3461 = vmatprep.subr.mxu0 %v3430
        %3462 = vmatpush1.msra.mxu0 %v3429
        %3463 = vmatprep.subr.mxu0 %v3432
        %3464 = vmatpush1.msra.mxu0 %v3431
        %3465 = vmatprep.subr.mxu0 %v3434
        %3466 = vmatpush1.msra.mxu0 %v3433
        %3467 = vmatprep.subr.mxu0 %v3436
        %3468 = vmatpush1.msra.mxu0 %v3435
        %3469 = vmatprep.subr.mxu0 %v3438
        %3470 = vmatpush1.msra.mxu0 %v3437
        %3471 = vmatprep.subr.mxu0 %v3440
        %3472 = vmatpush1.msra.mxu0 %v3439
        %3473 = vmatprep.subr.mxu0 %v3442
        %3474 = vmatpush1.msra.mxu0 %v3441
        %3475 = vmatprep.subr.mxu0 %v3444
        %3476 = vmatpush1.msra.mxu0 %v3443
        %3477 = vmatprep.subr.mxu0 0.0
        %3478 = vmatpush1.msra.mxu0 0.0
        %3479 = vmatprep.subr.mxu0 0.0
        %3480 = vmatpush1.msra.mxu0 0.0
        %3481 = vmatprep.subr.mxu0 0.0
        %3482 = vmatpush1.msra.mxu0 0.0
        %3483 = vmatprep.subr.mxu0 0.0
        %3484 = vmatpush1.msra.mxu0 0.0
        %3485 = vmatprep.subr.mxu0 0.0
        %3486 = vmatpush1.msra.mxu0 0.0
        %3487 = vmatprep.subr.mxu0 0.0
        %3488 = vmatpush1.msra.mxu0 0.0
        %3489 = vmatprep.subr.mxu0 0.0
        %3490 = vmatpush1.msra.mxu0 0.0
        %3491 = vmatprep.subr.mxu0 0.0
        %3492 = vmatpush1.msra.mxu0 0.0
        %3493 = vmatprep.subr.mxu0 0.0
        %3494 = vmatpush1.msra.mxu0 0.0
        %3495 = vmatprep.subr.mxu0 0.0
        %3496 = vmatpush1.msra.mxu0 0.0
        %3497 = vmatprep.subr.mxu0 0.0
        %3498 = vmatpush1.msra.mxu0 0.0
        %3499 = vmatprep.subr.mxu0 0.0
        %3500 = vmatpush1.msra.mxu0 0.0
        %3501 = vmatprep.subr.mxu0 0.0
        %3502 = vmatpush1.msra.mxu0 0.0
        %3503 = vmatprep.subr.mxu0 0.0
        %3504 = vmatpush1.msra.mxu0 0.0
        %3505 = vmatprep.subr.mxu0 0.0
        %3506 = vmatpush1.msra.mxu0 0.0
        %3507 = vmatprep.subr.mxu0 0.0
        %3508 = vmatpush1.msra.mxu0 0.0
        %3509 = vmatprep.mubr.f32.mxu0 0.0
        %3510 = vmatmul.mubr.f32.gmra.mrb[0].mxu0 %v3412
        %v3511 = vpop.f32.mrb[0].mxu0
        %v3512 = vadd.f32 0.0, %v3511
        %v3513 = vpop.f32.mrb[0].mxu0
        %v3514 = vadd.f32 0.0, %v3513
        %3515 = vdwg.mxu0
        %v3516 = vmul.f32 %v3512, %v3512
        %v3517 = vmul.f32 %v3514, %v3514
        %v3518 = vadd.f32 %v3516, %v3517
        %v3519 = vld [vmem:[%s5] sm:$0xff]
        %v3520 = vld [vmem:[%s5 + $0x8] sm:$0xff]
        %v3521 = vld [vmem:[%s5 + $0x10] sm:$0xff]
        %v3522 = vld [vmem:[%s5 + $0x18] sm:$0xff]
        %v3523 = vld [vmem:[%s5 + $0x20] sm:$0xff]
        %v3524 = vld [vmem:[%s5 + $0x28] sm:$0xff]
        %v3525 = vld [vmem:[%s5 + $0x30] sm:$0xff]
        %v3526 = vld [vmem:[%s5 + $0x38] sm:$0xff]
        %v3527 = vld [vmem:[%s5 + $0x40] sm:$0xff]
        %v3528 = vld [vmem:[%s5 + $0x48] sm:$0xff]
        %v3529 = vld [vmem:[%s5 + $0x50] sm:$0xff]
        %v3530 = vld [vmem:[%s5 + $0x58] sm:$0xff]
        %v3531 = vld [vmem:[%s5 + $0x60] sm:$0xff]
        %v3532 = vld [vmem:[%s5 + $0x68] sm:$0xff]
        %v3533 = vld [vmem:[%s5 + $0x70] sm:$0xff]
        %v3534 = vld [vmem:[%s5 + $0x78] sm:$0xff]
        %v3535 = vld [vmem:[%s6] sm:$0x1]
        %v3537 = vlaneseq
        %v3538 = vshrl.u32 %v3537, 7
        %v3539 = vsub.s32 0, %v3538
        %v3540 = vrot.slane %v3535, %v3539
        %3542 = vmatprep.subr.mxu0 0.0
        %3543 = vmatpush1.msra.mxu0 %v3519
        %3544 = vmatprep.subr.mxu0 0.0
        %3545 = vmatpush1.msra.mxu0 %v3520
        %3546 = vmatprep.subr.mxu0 0.0
        %3547 = vmatpush1.msra.mxu0 %v3521
        %3548 = vmatprep.subr.mxu0 0.0
        %3549 = vmatpush1.msra.mxu0 %v3522
        %3550 = vmatprep.subr.mxu0 0.0
        %3551 = vmatpush1.msra.mxu0 %v3523
        %3552 = vmatprep.subr.mxu0 0.0
        %3553 = vmatpush1.msra.mxu0 %v3524
        %3554 = vmatprep.subr.mxu0 0.0
        %3555 = vmatpush1.msra.mxu0 %v3525
        %3556 = vmatprep.subr.mxu0 0.0
        %3557 = vmatpush1.msra.mxu0 %v3526
        %3558 = vmatprep.subr.mxu0 0.0
        %3559 = vmatpush1.msra.mxu0 %v3527
        %3560 = vmatprep.subr.mxu0 0.0
        %3561 = vmatpush1.msra.mxu0 %v3528
        %3562 = vmatprep.subr.mxu0 0.0
        %3563 = vmatpush1.msra.mxu0 %v3529
        %3564 = vmatprep.subr.mxu0 0.0
        %3565 = vmatpush1.msra.mxu0 %v3530
        %3566 = vmatprep.subr.mxu0 0.0
        %3567 = vmatpush1.msra.mxu0 %v3531
        %3568 = vmatprep.subr.mxu0 0.0
        %3569 = vmatpush1.msra.mxu0 %v3532
        %3570 = vmatprep.subr.mxu0 0.0
        %3571 = vmatpush1.msra.mxu0 %v3533
        %3572 = vmatprep.subr.mxu0 0.0
        %3573 = vmatpush1.msra.mxu0 %v3534
        %3574 = vmatprep.subr.mxu0 0.0
        %3575 = vmatpush1.msra.mxu0 0.0
        %3576 = vmatprep.subr.mxu0 0.0
        %3577 = vmatpush1.msra.mxu0 0.0
        %3578 = vmatprep.subr.mxu0 0.0
        %3579 = vmatpush1.msra.mxu0 0.0
        %3580 = vmatprep.subr.mxu0 0.0
        %3581 = vmatpush1.msra.mxu0 0.0
        %3582 = vmatprep.subr.mxu0 0.0
        %3583 = vmatpush1.msra.mxu0 0.0
        %3584 = vmatprep.subr.mxu0 0.0
        %3585 = vmatpush1.msra.mxu0 0.0
        %3586 = vmatprep.subr.mxu0 0.0
        %3587 = vmatpush1.msra.mxu0 0.0
        %3588 = vmatprep.subr.mxu0 0.0
        %3589 = vmatpush1.msra.mxu0 0.0
        %3590 = vmatprep.subr.mxu0 0.0
        %3591 = vmatpush1.msra.mxu0 0.0
        %3592 = vmatprep.subr.mxu0 0.0
        %3593 = vmatpush1.msra.mxu0 0.0
        %3594 = vmatprep.subr.mxu0 0.0
        %3595 = vmatpush1.msra.mxu0 0.0
        %3596 = vmatprep.subr.mxu0 0.0
        %3597 = vmatpush1.msra.mxu0 0.0
        %3598 = vmatprep.subr.mxu0 0.0
        %3599 = vmatpush1.msra.mxu0 0.0
        %3600 = vmatprep.subr.mxu0 0.0
        %3601 = vmatpush1.msra.mxu0 0.0
        %3602 = vmatprep.subr.mxu0 0.0
        %3603 = vmatpush1.msra.mxu0 0.0
        %3604 = vmatprep.subr.mxu0 0.0
        %3605 = vmatpush1.msra.mxu0 0.0
        %3606 = vmatprep.mubr.f32.mxu0 0.0
        %3607 = vmatmul.mubr.f32.gmra.mrb[0].mxu0 %v3518
        %v3608 = vpop.f32.mrb[0].mxu0
        %v3609 = vadd.f32 %v3540, %v3608
        %v3610 = vpop.f32.mrb[0].mxu0
        %3611 = vdwg.mxu0
        %v3612 = vxor.u32 %v3609, 2147483648
        %v3613 = vmul.f32 %v3612, 1.442695
        %v3614 = vpow.pop %v3613
        %v3615 = vadd.f32 %v3614, 1.0
        %v3616 = vrcp.pop %v3615
        %v3617 = vmul.f32 1.0, %v3616
        %v3618 = vtanh.pop %v3609
        %3620 = vrot.lane.b32.xlu0 %v2827, 16
        %v3621 = vpop.permute.xlu0 %3620
        %v3623 = vmul.f32 %v3617, %v3621
        %3625 = vrot.lane.b32.xlu0 %v3618, 80
        %v3626 = vpop.permute.xlu0 %3625
        %v3628 = vmul.f32 %v3617, %v3626
        %3630 = vrot.lane.b32.xlu0 %v3628, 16
        %v3631 = vpop.permute.xlu0 %3630
        %v3633 = vadd.f32 %v3623, %v3631
        %v3634 = vtanh.pop %v3633
        %3636 = vrot.lane.b32.xlu0 %v3634, 16
        %v3637 = vpop.permute.xlu0 %3636
        %v3639 = vmul.f32 %v3617, %v3637
        %3641 = vrot.lane.b32.xlu0 %v3639, 96
        %v3642 = vpop.permute.xlu0 %3641
        %3644 = vst.msk [vmem:[#allocation2] sm:$0xf] %vm1166, %v3642
        %3646 = vrot.lane.b32.xlu0 %v3633, 112
        %v3647 = vpop.permute.xlu0 %3646
        %3649 = vst.msk [vmem:[#allocation3] sm:$0xf] %vm1166, %v3647
        %s3650 = scalar_lea.vmem %s311, 12 [#allocation7]
        %3651 = vst.msk [vmem:[%s3650] sm:$0xf] %vm1166, %v3642
        %p3652 = scmp.eq.s32.totalorder %s25, 1
        // Predicated region
        $region57: #{tpu_custom_call.1} parent=47 // pred_check
          %p3653 = pneg %p3652
        $region58: #{tpu_custom_call.1} parent=47 // pred_check_branch
          %3655 = sbr.rel (%p3653) target = $region60
        $region59: #{tpu_custom_call.1} parent=47 // pred_region
          %v3656 = vld [vmem:[#allocation3] sm:$0xf]
          %3657 = vst.msk [vmem:[#allocation8] sm:$0xf] %vm1166, %v3656
        $region60: #{tpu_custom_call.1} parent=47 // pred_fallthru
          _
        %s3658 = sand.u32 %s185, 1
        %s3659 = scalar_lea.sflag [#allocation6], %s3658
        %s3660 = sand.u32 %s185, 1
        %s3661 = smul.addr %s3660, 16
        %s3662 = scalar_lea.vmem [#allocation7], %s3661
        // Predicated region
        $region61: #{tpu_custom_call.1} parent=47 // pred_check
          %p3663 = pneg %p195
        $region62: #{tpu_custom_call.1} parent=47 // pred_check_branch
          %3665 = sbr.rel (%p3663) target = $region64
        $region63: #{tpu_custom_call.1} parent=47 // pred_region
          %s3666 = smul.u32 4, %s25
          %s3668 = ssub.s32 256, 256
          %3669 = vsyncadd %s3659, %s3668
          %s3670 = smul.addr %s3666, 64
          %s3671 = scalar_lea.hbm %s7, %s3670
          %s3672 = sshll.u32 %s3662, 4
          %s3673 = int_to_ptr.vmem [resolvable:$true] %s3672
          %3678 = dma.vmem_to_hbm [thread:$0]  %s3673, 256, %s3671, %s3659, 64, 64, 4
        $region64: #{tpu_custom_call.1} parent=47 // pred_fallthru
          _
        // Predicated region
        $region65: #{tpu_custom_call.1} parent=47 // pred_check
          %p3679 = pneg %p216
        $region66: #{tpu_custom_call.1} parent=47 // pred_check_branch
          %3681 = sbr.rel (%p3679) target = $region68
        $region67: #{tpu_custom_call.1} parent=47 // pred_region
          %s3683 = ssub.s32 64, 64
          %3684 = vsyncadd [#allocation9], %s3683
          %s3686 = sshll.u32 [#allocation8], 4
          %s3687 = int_to_ptr.vmem [resolvable:$true] %s3686
          %3689 = dma.vmem_to_hbm [thread:$0]  %s3687, 64, %s8, [#allocation9]
        $region68: #{tpu_custom_call.1} parent=47 // pred_fallthru
          _
        // Predicated region
        $region69: #{tpu_custom_call.1} parent=47 // pred_check
          %p3690 = pneg %p216
        $region70: #{tpu_custom_call.1} parent=47 // pred_check_branch
          %3692 = sbr.rel (%p3690) target = $region72
        $region71: #{tpu_custom_call.1} parent=47 // pred_region
          %3693 = dma.done [#allocation9], 64
        $region72: #{tpu_custom_call.1} parent=47 // pred_fallthru
          _
      $region48: #{tpu_custom_call.1} parent=5 // pred_fallthru
        _
      %p3694 = scmp.le.s32.totalorder 2, %s20
      // Predicated region
      $region73: #{tpu_custom_call.1} parent=5 // pred_check
        %p3695 = pneg %p3694
      $region74: #{tpu_custom_call.1} parent=5 // pred_check_branch
        %3697 = sbr.rel (%p3695) target = $region76
      $region75: #{tpu_custom_call.1} parent=5 // pred_region
        %s3698 = ssub.s32 %s20, 2
        // Predicated region
        $region77: #{tpu_custom_call.1} parent=75 // pred_check
          %p3699 = pneg %p201
        $region78: #{tpu_custom_call.1} parent=75 // pred_check_branch
          %3701 = sbr.rel (%p3699) target = $region80
        $region79: #{tpu_custom_call.1} parent=75 // pred_region
          %s3702 = sand.u32 %s186, 1
          %s3703 = scalar_lea.sflag [#allocation6], %s3702
          %s3704 = sand.u32 %s186, 1
          %s3705 = smul.addr %s3704, 16
          %s3706 = scalar_lea.vmem [#allocation7], %s3705
          %3707 = dma.done %s3703, 256
        $region80: #{tpu_custom_call.1} parent=75 // pred_fallthru
          _
      $region76: #{tpu_custom_call.1} parent=5 // pred_fallthru
        _
    $region6: #{tpu_custom_call.1} parent=1 // loop_footer
      %s24 = sadd.s32 1, %s20
    $region7: #{tpu_custom_call.1} parent=1 // loop_footer_branch
      %19 = sbr.rel target = $region3
    $region8: #{tpu_custom_call.1} parent=1 // loop_exit
      _
    %3708 = vsyncpa [#allocation5], 1
    %s3709 = scalar_lea.sflag [#allocation5], 1
    %3710 = vsyncpa %s3709, 1
    %3711 = vsyncpa [#allocation6], 1
    %s3712 = scalar_lea.sflag [#allocation6], 1
    %3713 = vsyncpa %s3712, 1
    %3714 = vsyncpa [#allocation9], 1

</llo_original>
